<compile_context>
chip_gen: v7x
topology: tpu7x:2x2x1
jax: 0.10.0
libtpu: 0.0.40
codegen_flags: <defaults>
</compile_context>

<pallas_src>
import numpy as np

import jax
import jax.numpy as jnp
from jax.experimental import pallas as pl
from jax.experimental.pallas import tpu as pltpu

# -----------------------------------------------------------------------------
# Model configuration (small, consistent with the module's constructor)
# -----------------------------------------------------------------------------
BATCH = 2
M_PAD = 8                               # pad batch rows 2 -> 8 (full sublane tile)
LINEAR_INPUT = 32
INPUT_SIZE = (1, 4, 4, 4, 4)            # (_, C, D, H, W) after the reshape
IN_CHANNELS = INPUT_SIZE[1]
OUTPUT_SIZE = (2, 8, 8, 8)              # (out_channels, D_out, H_out, W_out)
BN_EPS = 1e-5

LINEAR_LAYERS = [
    {"in_features": LINEAR_INPUT, "out_features": 64},
    {"in_features": 64,
     "out_features": INPUT_SIZE[1] * INPUT_SIZE[2] * INPUT_SIZE[3] * INPUT_SIZE[4]},
]
CONV_T_LAYERS = [
    {"in_channels": IN_CHANNELS, "out_channels": 3,
     "kernel_size": (3, 3, 3), "stride": (1, 1, 1), "padding": (1, 1, 1)},
    {"in_channels": 3, "out_channels": OUTPUT_SIZE[0],
     "kernel_size": (4, 4, 4), "stride": (1, 2, 2), "padding": (1, 1, 1)},
]


# -----------------------------------------------------------------------------
# Pallas kernel: fully fused forward pass (chain of matmul + affine + ReLU)
# -----------------------------------------------------------------------------
def _decoder_kernel(x_ref,
                    w1_ref, s1_ref, w2_ref, s2_ref,
                    w3_ref, s3_ref, w4_ref, s4_ref,
                    w_up_ref, o_ref):
    h = x_ref[...]                                           # bf16 (M_PAD, 32)
    for w_ref, s_ref in ((w1_ref, s1_ref), (w2_ref, s2_ref),
                         (w3_ref, s3_ref), (w4_ref, s4_ref)):
        y = jnp.dot(h, w_ref[...], preferred_element_type=jnp.float32)
        y = jnp.maximum(y + s_ref[...], 0.0)                 # f32 affine + ReLU
        h = y.astype(jnp.bfloat16)                           # bf16 operand for next MXU op
    # Trilinear upsample (no bias / BN / activation) - lane-dense (M_PAD, 1024) store.
    o_ref[...] = jnp.dot(h, w_up_ref[...], preferred_element_type=jnp.float32)


def cnn3d_decoder_forward(x, mats):
    """x: (B, LINEAR_INPUT) f32 -> (B, C_out, D_out, H_out, W_out) f32."""
    B = x.shape[0]
    xp = jnp.pad(x.astype(jnp.bfloat16), ((0, M_PAD - B), (0, 0)))

    args = [xp]
    in_specs = [pl.BlockSpec(xp.shape, lambda i: (0, 0))]
    for w, s in mats["affine_layers"]:
        args += [w, s]
        in_specs += [pl.BlockSpec(w.shape, lambda i: (0, 0)),
                     pl.BlockSpec(s.shape, lambda i: (0, 0))]
    w_up = mats["w_up"]
    args.append(w_up)
    in_specs.append(pl.BlockSpec(w_up.shape, lambda i: (0, 0)))

    n_out = w_up.shape[1]
    out = pl.pallas_call(
        _decoder_kernel,
        out_shape=jax.ShapeDtypeStruct((M_PAD, n_out), jnp.float32),
        grid=(1,),
        in_specs=in_specs,
        out_specs=pl.BlockSpec((M_PAD, n_out), lambda i: (0, 0)),
        compiler_params=pltpu.CompilerParams(dimension_semantics=("arbitrary",)),
    )(*args)

    C, Do, Ho, Wo = OUTPUT_SIZE
    return out[:B].reshape(B, C, Do, Ho, Wo)


# -----------------------------------------------------------------------------
# Host-side (numpy) precompute: fold every layer into a matmul operand
# -----------------------------------------------------------------------------
def _bn_fold(gamma, beta, mean, var, bias):
    scale = gamma / np.sqrt(var + BN_EPS)
    shift = beta + (bias - mean) * scale
    return scale, shift


def _conv_transpose3d_matrix(w, in_dhw, stride, padding):
    """Dense (Cin*D*H*W, Cout*Do*Ho*Wo) matrix equal to ConvTranspose3d (no bias)."""
    cin, cout, kD, kH, kW = w.shape
    D, H, W = in_dhw
    sD, sH, sW = stride
    pD, pH, pW = padding
    Do = (D - 1) * sD - 2 * pD + kD
    Ho = (H - 1) * sH - 2 * pH + kH
    Wo = (W - 1) * sW - 2 * pW + kW
    m = np.zeros((cin * D * H * W, cout * Do * Ho * Wo), np.float32)
    for ci in range(cin):
        for di in range(D):
            for hi in range(H):
                for wi in range(W):
                    row = ((ci * D + di) * H + hi) * W + wi
                    for co in range(cout):
                        for kd in range(kD):
                            do = di * sD + kd - pD
                            if do < 0 or do >= Do:
                                continue
                            for kh in range(kH):
                                ho = hi * sH + kh - pH
                                if ho < 0 or ho >= Ho:
                                    continue
                                for kw_ in range(kW):
                                    wo = wi * sW + kw_ - pW
                                    if wo < 0 or wo >= Wo:
                                        continue
                                    col = ((co * Do + do) * Ho + ho) * Wo + wo
                                    m[row, col] += w[ci, co, kd, kh, kw_]
    return m, (Do, Ho, Wo)


def _interp_matrix(out_size, in_size):
    """1-D linear interpolation matrix, align_corners=True semantics."""
    if in_size == 1:
        return np.ones((out_size, 1), np.float32)
    if out_size == 1:
        m = np.zeros((1, in_size), np.float32)
        m[0, 0] = 1.0
        return m
    pos = np.arange(out_size, dtype=np.float64) * (in_size - 1) / (out_size - 1)
    lo = np.clip(np.floor(pos).astype(np.int64), 0, in_size - 2)
    frac = (pos - lo).astype(np.float32)
    m = np.zeros((out_size, in_size), np.float32)
    rows = np.arange(out_size)
    np.add.at(m, (rows, lo), 1.0 - frac)
    np.add.at(m, (rows, lo + 1), frac)
    return m


def build_fused_matrices(key):
    """Precompute (host-side numpy) per-layer matmul weights (bf16, BN scale
    folded into columns) and f32 per-column shift vectors."""
    layers = []

    # ---- linear layers ----
    for cfg in LINEAR_LAYERS:
        key, kw, kb, kg, kbeta = jax.random.split(key, 5)
        fi, fo = cfg["in_features"], cfg["out_features"]
        w = 0.1 * np.asarray(jax.random.normal(kw, (fo, fi), jnp.float32))
        b = 0.1 * np.asarray(jax.random.normal(kb, (fo,), jnp.float32))
        gamma = 1.0 + 0.1 * np.asarray(jax.random.normal(kg, (fo,), jnp.float32))
        beta = 0.1 * np.asarray(jax.random.normal(kbeta, (fo,), jnp.float32))
        scale, shift = _bn_fold(gamma, beta, np.zeros(fo, np.float32),
                                np.ones(fo, np.float32), b)
        w_mat = w.T * scale[None, :]                             # (in, out)
        layers.append((jnp.asarray(w_mat, jnp.bfloat16),
                       jnp.asarray(shift[None, :], jnp.float32)))

    # ---- conv-transpose layers as exact dense linear maps ----
    dhw = (INPUT_SIZE[2], INPUT_SIZE[3], INPUT_SIZE[4])
    for cfg in CONV_T_LAYERS:
        key, kw, kb, kg, kbeta = jax.random.split(key, 5)
        cin, cout = cfg["in_channels"], cfg["out_channels"]
        kD, kH, kW = cfg["kernel_size"]
        w = 0.1 * np.asarray(
            jax.random.normal(kw, (cin, cout, kD, kH, kW), jnp.float32))
        b = 0.1 * np.asarray(jax.random.normal(kb, (cout,), jnp.float32))
        gamma = 1.0 + 0.1 * np.asarray(jax.random.normal(kg, (cout,), jnp.float32))
        beta = 0.1 * np.asarray(jax.random.normal(kbeta, (cout,), jnp.float32))
        m, dhw_out = _conv_transpose3d_matrix(w, dhw, cfg["stride"], cfg["padding"])
        scale, shift = _bn_fold(gamma, beta, np.zeros(cout, np.float32),
                                np.ones(cout, np.float32), b)
        sp = int(np.prod(dhw_out))
        w_mat = m * np.repeat(scale, sp)[None, :]
        col_shift = np.repeat(shift, sp)
        layers.append((jnp.asarray(w_mat, jnp.bfloat16),
                       jnp.asarray(col_shift[None, :], jnp.float32)))
        dhw = dhw_out

    # ---- trilinear upsample (align_corners=True) as block-diagonal matrix ----
    Do, Ho, Wo = OUTPUT_SIZE[1:]
    m_kron = np.kron(_interp_matrix(Do, dhw[0]),
                     np.kron(_interp_matrix(Ho, dhw[1]),
                             _interp_matrix(Wo, dhw[2])))        # (512, 320)
    sp_in, sp_out = int(np.prod(dhw)), Do * Ho * Wo
    c = OUTPUT_SIZE[0]
    w_up = np.zeros((c * sp_in, c * sp_out), np.float32)
    for ci in range(c):
        w_up[ci * sp_in:(ci + 1) * sp_in,
             ci * sp_out:(ci + 1) * sp_out] = m_kron.T
    # TODO(synk): the block-diagonal form reads ~C x the minimal upsample matrix
    # bytes; avoiding it needs an in-kernel (M, C*S) -> (M*C, S) relayout.
    return {"affine_layers": layers, "w_up": jnp.asarray(w_up, jnp.bfloat16)}


# -----------------------------------------------------------------------------
if __name__ == "__main__":
    key = jax.random.PRNGKey(0)
    key, kx, kp = jax.random.split(key, 3)
    x = jax.random.normal(kx, (BATCH, LINEAR_INPUT), jnp.float32)
    mats = build_fused_matrices(kp)

    fwd = jax.jit(cnn3d_decoder_forward)
    out = jax.block_until_ready(fwd(x, mats))

    expected_shape = (BATCH, OUTPUT_SIZE[0], *OUTPUT_SIZE[1:])
    assert out.shape == expected_shape, (out.shape, expected_shape)
    assert jnp.all(jnp.isfinite(out))
    print("KERNEL_OK")
</pallas_src>

<mosaic_0001>
module attributes {stable_mosaic.version = 11 : i64} {
  func.func @_decoder_kernel(%arg0: i32, %arg1: memref<8x32xbf16, #tpu.memory_space<vmem>>, %arg2: memref<32x64xbf16, #tpu.memory_space<vmem>>, %arg3: memref<1x64xf32, #tpu.memory_space<vmem>>, %arg4: memref<64x256xbf16, #tpu.memory_space<vmem>>, %arg5: memref<1x256xf32, #tpu.memory_space<vmem>>, %arg6: memref<256x192xbf16, #tpu.memory_space<vmem>>, %arg7: memref<1x192xf32, #tpu.memory_space<vmem>>, %arg8: memref<192x640xbf16, #tpu.memory_space<vmem>>, %arg9: memref<1x640xf32, #tpu.memory_space<vmem>>, %arg10: memref<640x1024xbf16, #tpu.memory_space<vmem>>, %arg11: memref<8x1024xf32, #tpu.memory_space<vmem>>) attributes {dimension_semantics = [#tpu.dimension_semantics<arbitrary>], iteration_bounds = array<i64: 1>, scalar_prefetch = 0 : i64, scratch_operands = 0 : i64, tpu.core_type = #tpu.core_type<tc>, window_params = [{pipeline_mode = #tpu.pipeline_mode<synchronous>, transform_indices = @transform_0, window_bounds = array<i64: 8, 32>}, {pipeline_mode = #tpu.pipeline_mode<synchronous>, transform_indices = @transform_1, window_bounds = array<i64: 32, 64>}, {pipeline_mode = #tpu.pipeline_mode<synchronous>, transform_indices = @transform_2, window_bounds = array<i64: 1, 64>}, {pipeline_mode = #tpu.pipeline_mode<synchronous>, transform_indices = @transform_3, window_bounds = array<i64: 64, 256>}, {pipeline_mode = #tpu.pipeline_mode<synchronous>, transform_indices = @transform_4, window_bounds = array<i64: 1, 256>}, {pipeline_mode = #tpu.pipeline_mode<synchronous>, transform_indices = @transform_5, window_bounds = array<i64: 256, 192>}, {pipeline_mode = #tpu.pipeline_mode<synchronous>, transform_indices = @transform_6, window_bounds = array<i64: 1, 192>}, {pipeline_mode = #tpu.pipeline_mode<synchronous>, transform_indices = @transform_7, window_bounds = array<i64: 192, 640>}, {pipeline_mode = #tpu.pipeline_mode<synchronous>, transform_indices = @transform_8, window_bounds = array<i64: 1, 640>}, {pipeline_mode = #tpu.pipeline_mode<synchronous>, transform_indices = @transform_9, window_bounds = array<i64: 640, 1024>}, {pipeline_mode = #tpu.pipeline_mode<synchronous>, transform_indices = @transform_10, window_bounds = array<i64: 8, 1024>}]} {
    %c0 = arith.constant 0 : index
    %c0_0 = arith.constant 0 : index
    %0 = vector.load %arg1[%c0, %c0_0] : memref<8x32xbf16, #tpu.memory_space<vmem>>, vector<8x32xbf16>
    %c0_1 = arith.constant 0 : index
    %c0_2 = arith.constant 0 : index
    %1 = vector.load %arg2[%c0_1, %c0_2] : memref<32x64xbf16, #tpu.memory_space<vmem>>, vector<32x64xbf16>
    %cst = arith.constant dense<0.000000e+00> : vector<8x64xf32>
    %2 = tpu.matmul %0, %1, %cst {dimension_numbers = #tpu.dot_dimension_numbers<[1], [0], [0], [1], [0, 0, 1, 1], [], []>} : vector<8x32xbf16>, vector<32x64xbf16>, vector<8x64xf32> -> vector<8x64xf32>
    %c0_3 = arith.constant 0 : index
    %c0_4 = arith.constant 0 : index
    %3 = vector.load %arg3[%c0_3, %c0_4] : memref<1x64xf32, #tpu.memory_space<vmem>>, vector<1x64xf32>
    %4 = vector.broadcast %3 : vector<1x64xf32> to vector<8x64xf32>
    %5 = arith.addf %2, %4 : vector<8x64xf32>
    %cst_5 = arith.constant 0.000000e+00 : f32
    %6 = vector.broadcast %cst_5 : f32 to vector<8x64xf32>
    %7 = arith.maximumf %5, %6 : vector<8x64xf32>
    %8 = arith.truncf %7 : vector<8x64xf32> to vector<8x64xbf16>
    %c0_6 = arith.constant 0 : index
    %c0_7 = arith.constant 0 : index
    %9 = vector.load %arg4[%c0_6, %c0_7] : memref<64x256xbf16, #tpu.memory_space<vmem>>, vector<64x256xbf16>
    %cst_8 = arith.constant dense<0.000000e+00> : vector<8x256xf32>
    %10 = tpu.matmul %8, %9, %cst_8 {dimension_numbers = #tpu.dot_dimension_numbers<[1], [0], [0], [1], [0, 0, 1, 1], [], []>} : vector<8x64xbf16>, vector<64x256xbf16>, vector<8x256xf32> -> vector<8x256xf32>
    %c0_9 = arith.constant 0 : index
    %c0_10 = arith.constant 0 : index
    %11 = vector.load %arg5[%c0_9, %c0_10] : memref<1x256xf32, #tpu.memory_space<vmem>>, vector<1x256xf32>
    %12 = vector.broadcast %11 : vector<1x256xf32> to vector<8x256xf32>
    %13 = arith.addf %10, %12 : vector<8x256xf32>
    %cst_11 = arith.constant 0.000000e+00 : f32
    %14 = vector.broadcast %cst_11 : f32 to vector<8x256xf32>
    %15 = arith.maximumf %13, %14 : vector<8x256xf32>
    %16 = arith.truncf %15 : vector<8x256xf32> to vector<8x256xbf16>
    %c0_12 = arith.constant 0 : index
    %c0_13 = arith.constant 0 : index
    %17 = vector.load %arg6[%c0_12, %c0_13] : memref<256x192xbf16, #tpu.memory_space<vmem>>, vector<256x192xbf16>
    %cst_14 = arith.constant dense<0.000000e+00> : vector<8x192xf32>
    %18 = tpu.matmul %16, %17, %cst_14 {dimension_numbers = #tpu.dot_dimension_numbers<[1], [0], [0], [1], [0, 0, 1, 1], [], []>} : vector<8x256xbf16>, vector<256x192xbf16>, vector<8x192xf32> -> vector<8x192xf32>
    %c0_15 = arith.constant 0 : index
    %c0_16 = arith.constant 0 : index
    %19 = vector.load %arg7[%c0_15, %c0_16] : memref<1x192xf32, #tpu.memory_space<vmem>>, vector<1x192xf32>
    %20 = vector.broadcast %19 : vector<1x192xf32> to vector<8x192xf32>
    %21 = arith.addf %18, %20 : vector<8x192xf32>
    %cst_17 = arith.constant 0.000000e+00 : f32
    %22 = vector.broadcast %cst_17 : f32 to vector<8x192xf32>
    %23 = arith.maximumf %21, %22 : vector<8x192xf32>
    %24 = arith.truncf %23 : vector<8x192xf32> to vector<8x192xbf16>
    %c0_18 = arith.constant 0 : index
    %c0_19 = arith.constant 0 : index
    %25 = vector.load %arg8[%c0_18, %c0_19] : memref<192x640xbf16, #tpu.memory_space<vmem>>, vector<192x640xbf16>
    %cst_20 = arith.constant dense<0.000000e+00> : vector<8x640xf32>
    %26 = tpu.matmul %24, %25, %cst_20 {dimension_numbers = #tpu.dot_dimension_numbers<[1], [0], [0], [1], [0, 0, 1, 1], [], []>} : vector<8x192xbf16>, vector<192x640xbf16>, vector<8x640xf32> -> vector<8x640xf32>
    %c0_21 = arith.constant 0 : index
    %c0_22 = arith.constant 0 : index
    %27 = vector.load %arg9[%c0_21, %c0_22] : memref<1x640xf32, #tpu.memory_space<vmem>>, vector<1x640xf32>
    %28 = vector.broadcast %27 : vector<1x640xf32> to vector<8x640xf32>
    %29 = arith.addf %26, %28 : vector<8x640xf32>
    %cst_23 = arith.constant 0.000000e+00 : f32
    %30 = vector.broadcast %cst_23 : f32 to vector<8x640xf32>
    %31 = arith.maximumf %29, %30 : vector<8x640xf32>
    %32 = arith.truncf %31 : vector<8x640xf32> to vector<8x640xbf16>
    %c0_24 = arith.constant 0 : index
    %c0_25 = arith.constant 0 : index
    %33 = vector.load %arg10[%c0_24, %c0_25] : memref<640x1024xbf16, #tpu.memory_space<vmem>>, vector<640x1024xbf16>
    %cst_26 = arith.constant dense<0.000000e+00> : vector<8x1024xf32>
    %34 = tpu.matmul %32, %33, %cst_26 {dimension_numbers = #tpu.dot_dimension_numbers<[1], [0], [0], [1], [0, 0, 1, 1], [], []>} : vector<8x640xbf16>, vector<640x1024xbf16>, vector<8x1024xf32> -> vector<8x1024xf32>
    %c0_27 = arith.constant 0 : index
    %c0_28 = arith.constant 0 : index
    %35 = vector.load %arg11[%c0_27, %c0_28] : memref<8x1024xf32, #tpu.memory_space<vmem>>, vector<8x1024xf32>
    tpu.vector_store %arg11[%c0_27, %c0_28], %34 {strides = array<i32>} : memref<8x1024xf32, #tpu.memory_space<vmem>>, vector<8x1024xf32>,
    return
  }
  func.func @transform_0(%arg0: i32) -> (i32, i32) {
    %c0_i32 = arith.constant 0 : i32
    %c0_i32_0 = arith.constant 0 : i32
    %c0_i32_1 = arith.constant 0 : i32
    return %c0_i32, %c0_i32_0 : i32, i32
  }
  func.func @transform_1(%arg0: i32) -> (i32, i32) {
    %c0_i32 = arith.constant 0 : i32
    %c0_i32_0 = arith.constant 0 : i32
    %c0_i32_1 = arith.constant 0 : i32
    return %c0_i32, %c0_i32_0 : i32, i32
  }
  func.func @transform_2(%arg0: i32) -> (i32, i32) {
    %c0_i32 = arith.constant 0 : i32
    %c0_i32_0 = arith.constant 0 : i32
    %c0_i32_1 = arith.constant 0 : i32
    return %c0_i32, %c0_i32_0 : i32, i32
  }
  func.func @transform_3(%arg0: i32) -> (i32, i32) {
    %c0_i32 = arith.constant 0 : i32
    %c0_i32_0 = arith.constant 0 : i32
    %c0_i32_1 = arith.constant 0 : i32
    return %c0_i32, %c0_i32_0 : i32, i32
  }
  func.func @transform_4(%arg0: i32) -> (i32, i32) {
    %c0_i32 = arith.constant 0 : i32
    %c0_i32_0 = arith.constant 0 : i32
    %c0_i32_1 = arith.constant 0 : i32
    return %c0_i32, %c0_i32_0 : i32, i32
  }
  func.func @transform_5(%arg0: i32) -> (i32, i32) {
    %c0_i32 = arith.constant 0 : i32
    %c0_i32_0 = arith.constant 0 : i32
    %c0_i32_1 = arith.constant 0 : i32
    return %c0_i32, %c0_i32_0 : i32, i32
  }
  func.func @transform_6(%arg0: i32) -> (i32, i32) {
    %c0_i32 = arith.constant 0 : i32
    %c0_i32_0 = arith.constant 0 : i32
    %c0_i32_1 = arith.constant 0 : i32
    return %c0_i32, %c0_i32_0 : i32, i32
  }
  func.func @transform_7(%arg0: i32) -> (i32, i32) {
    %c0_i32 = arith.constant 0 : i32
    %c0_i32_0 = arith.constant 0 : i32
    %c0_i32_1 = arith.constant 0 : i32
    return %c0_i32, %c0_i32_0 : i32, i32
  }
  func.func @transform_8(%arg0: i32) -> (i32, i32) {
    %c0_i32 = arith.constant 0 : i32
    %c0_i32_0 = arith.constant 0 : i32
    %c0_i32_1 = arith.constant 0 : i32
    return %c0_i32, %c0_i32_0 : i32, i32
  }
  func.func @transform_9(%arg0: i32) -> (i32, i32) {
    %c0_i32 = arith.constant 0 : i32
    %c0_i32_0 = arith.constant 0 : i32
    %c0_i32_1 = arith.constant 0 : i32
    return %c0_i32, %c0_i32_0 : i32, i32
  }
  func.func @transform_10(%arg0: i32) -> (i32, i32) {
    %c0_i32 = arith.constant 0 : i32
    %c0_i32_0 = arith.constant 0 : i32
    %c0_i32_1 = arith.constant 0 : i32
    return %c0_i32, %c0_i32_0 : i32, i32
  }
}

</mosaic_0001>

<llo_original>
// kernel: cnn3d_decoder_forward.1
$region0: #{cnn3d_decoder_forward.1}
  #allocation0 [shape = 'u32[]', space=smem, size = 0x4, offset = 0x4, fixed_abs, tag = 'smem constant byte address 0x4 - core index']
  #allocation1 [shape = 'u32[144,128]{1,0:T(1,128)}', space=vmem, size = 0x12000, scoped, tag = 'internal scratch']
  %s0 = inlined_call_operand.vmem [shape: bf16[8,32], index: 0, kind: input, shape index: {}]
  %s1 = inlined_call_operand.hbm [shape: bf16[32,64], index: 1, kind: input, shape index: {}]
  %s2 = inlined_call_operand.hbm [shape: f32[1,64], index: 2, kind: input, shape index: {}]
  %s3 = inlined_call_operand.hbm [shape: bf16[64,256], index: 3, kind: input, shape index: {}]
  %s4 = inlined_call_operand.hbm [shape: f32[1,256], index: 4, kind: input, shape index: {}]
  %s5 = inlined_call_operand.vmem [shape: bf16[256,192], index: 5, kind: input, shape index: {}]
  %s6 = inlined_call_operand.hbm [shape: f32[1,192], index: 6, kind: input, shape index: {}]
  %s7 = inlined_call_operand.hbm [shape: bf16[192,640], index: 7, kind: input, shape index: {}]
  %s8 = inlined_call_operand.hbm [shape: f32[1,640], index: 8, kind: input, shape index: {}]
  %s9 = inlined_call_operand.hbm [shape: bf16[640,1024], index: 9, kind: input, shape index: {}]
  %s10 = inlined_call_operand.vmem [shape: f32[8,1024], index: 10, kind: output, shape index: {}]
  %s11 = sld [smem:[#allocation0]]
  $region82: #{cnn3d_decoder_forward.1} parent=0
    _
  %s13 = ssub.s32 1, %s11
  %s14 = scalar_select 0, %s13, %s11
  $region1: #{cnn3d_decoder_forward.1} parent=0
    #allocation2 [shape = 'u8[8192]{0}', space=vmem, size = 0x2000, scoped, tag = 'input window, operand 1, single buffered']
    #allocation3 [shape = 's32[1]{0}', space=sflag, size = 0x4, scoped, tag = 'scoped memory for cnn3d_decoder_forward.1']
    #allocation4 [shape = 'u8[512]{0}', space=vmem, size = 0x400, scoped, tag = 'input window, operand 2, single buffered']
    #allocation5 [shape = 's32[1]{0}', space=sflag, size = 0x4, scoped, tag = 'scoped memory for cnn3d_decoder_forward.1']
    #allocation6 [shape = 'u8[32768]{0}', space=vmem, size = 0x8000, scoped, tag = 'input window, operand 3, single buffered']
    #allocation7 [shape = 'u8[1024]{0}', space=vmem, size = 0x400, scoped, tag = 'input window, operand 4, single buffered']
    #allocation8 [shape = 's32[1]{0}', space=sflag, size = 0x4, scoped, tag = 'scoped memory for cnn3d_decoder_forward.1']
    #allocation9 [shape = 'u8[1024]{0}', space=vmem, size = 0x400, scoped, tag = 'input window, operand 6, single buffered']
    #allocation10 [shape = 'u8[245760]{0}', space=vmem, size = 0x3c000, scoped, tag = 'input window, operand 7, single buffered']
    #allocation11 [shape = 's32[1]{0}', space=sflag, size = 0x4, scoped, tag = 'scoped memory for cnn3d_decoder_forward.1']
    #allocation12 [shape = 'u8[2560]{0}', space=vmem, size = 0xc00, scoped, tag = 'input window, operand 8, single buffered']
    #allocation13 [shape = 'u8[1310720]{0}', space=vmem, size = 0x140000, scoped, tag = 'input window, operand 9, single buffered']
    #allocation14 [shape = 's32[1]{0}', space=sflag, size = 0x4, scoped, tag = 'scoped memory for cnn3d_decoder_forward.1']
    %15 = vsyncpa [#allocation3], 0
    %16 = vsyncpa [#allocation5], 0
    %17 = vsyncpa [#allocation8], 0
    %18 = vsyncpa [#allocation11], 0
    %19 = vsyncpa [#allocation14], 0
    // Predicated region
    $region2: #{cnn3d_decoder_forward.1} parent=1 // pred_check
      _
    $region3: #{cnn3d_decoder_forward.1} parent=1 // pred_check_branch
      %21 = sbr.rel (0) target = $region5
    $region4: #{cnn3d_decoder_forward.1} parent=1 // pred_region
      _
    $region5: #{cnn3d_decoder_forward.1} parent=1 // pred_fallthru
      _
    // Predicated region
    $region6: #{cnn3d_decoder_forward.1} parent=1 // pred_check
      _
    $region7: #{cnn3d_decoder_forward.1} parent=1 // pred_check_branch
      %23 = sbr.rel (0) target = $region9
    $region8: #{cnn3d_decoder_forward.1} parent=1 // pred_region
      %s25 = ssub.s32 256, 256
      %26 = vsyncadd [#allocation3], %s25
      %s27 = sshll.u32 [#allocation2], 4
      %s28 = int_to_ptr.vmem [resolvable:$true] %s27
      %33 = dma.hbm_to_vmem [thread:$0]  %s1, 256, %s28, [#allocation3], 64, 64, 4
    $region9: #{cnn3d_decoder_forward.1} parent=1 // pred_fallthru
      _
    // Predicated region
    $region10: #{cnn3d_decoder_forward.1} parent=1 // pred_check
      _
    $region11: #{cnn3d_decoder_forward.1} parent=1 // pred_check_branch
      %35 = sbr.rel (0) target = $region13
    $region12: #{cnn3d_decoder_forward.1} parent=1 // pred_region
      %s37 = ssub.s32 16, 16
      %38 = vsyncadd [#allocation5], %s37
      %s40 = sshll.u32 [#allocation4], 4
      %s41 = int_to_ptr.vmem [resolvable:$true] %s40
      %43 = dma.hbm_to_vmem [thread:$0]  %s2, 16, %s41, [#allocation5]
    $region13: #{cnn3d_decoder_forward.1} parent=1 // pred_fallthru
      _
    // Predicated region
    $region14: #{cnn3d_decoder_forward.1} parent=1 // pred_check
      _
    $region15: #{cnn3d_decoder_forward.1} parent=1 // pred_check_branch
      %45 = sbr.rel (0) target = $region17
    $region16: #{cnn3d_decoder_forward.1} parent=1 // pred_region
      %s47 = ssub.s32 1024, 1024
      %48 = vsyncadd [#allocation5], %s47
      %s49 = sshll.u32 [#allocation6], 4
      %s50 = int_to_ptr.vmem [resolvable:$true] %s49
      %55 = dma.hbm_to_vmem [thread:$0]  %s3, 1024, %s50, [#allocation5], 128, 128, 8
    $region17: #{cnn3d_decoder_forward.1} parent=1 // pred_fallthru
      _
    // Predicated region
    $region18: #{cnn3d_decoder_forward.1} parent=1 // pred_check
      _
    $region19: #{cnn3d_decoder_forward.1} parent=1 // pred_check_branch
      %57 = sbr.rel (0) target = $region21
    $region20: #{cnn3d_decoder_forward.1} parent=1 // pred_region
      %s59 = ssub.s32 32, 32
      %60 = vsyncadd [#allocation8], %s59
      %s62 = sshll.u32 [#allocation7], 4
      %s63 = int_to_ptr.vmem [resolvable:$true] %s62
      %65 = dma.hbm_to_vmem [thread:$0]  %s4, 32, %s63, [#allocation8]
    $region21: #{cnn3d_decoder_forward.1} parent=1 // pred_fallthru
      _
    // Predicated region
    $region22: #{cnn3d_decoder_forward.1} parent=1 // pred_check
      _
    $region23: #{cnn3d_decoder_forward.1} parent=1 // pred_check_branch
      %67 = sbr.rel (0) target = $region25
    $region24: #{cnn3d_decoder_forward.1} parent=1 // pred_region
      _
    $region25: #{cnn3d_decoder_forward.1} parent=1 // pred_fallthru
      _
    // Predicated region
    $region26: #{cnn3d_decoder_forward.1} parent=1 // pred_check
      _
    $region27: #{cnn3d_decoder_forward.1} parent=1 // pred_check_branch
      %69 = sbr.rel (0) target = $region29
    $region28: #{cnn3d_decoder_forward.1} parent=1 // pred_region
      %s71 = ssub.s32 32, 32
      %72 = vsyncadd [#allocation8], %s71
      %s74 = sshll.u32 [#allocation9], 4
      %s75 = int_to_ptr.vmem [resolvable:$true] %s74
      %77 = dma.hbm_to_vmem [thread:$0]  %s6, 32, %s75, [#allocation8]
    $region29: #{cnn3d_decoder_forward.1} parent=1 // pred_fallthru
      _
    // Predicated region
    $region30: #{cnn3d_decoder_forward.1} parent=1 // pred_check
      _
    $region31: #{cnn3d_decoder_forward.1} parent=1 // pred_check_branch
      %79 = sbr.rel (0) target = $region33
    $region32: #{cnn3d_decoder_forward.1} parent=1 // pred_region
      %s81 = ssub.s32 7680, 7680
      %82 = vsyncadd [#allocation11], %s81
      %s83 = sshll.u32 [#allocation10], 4
      %s84 = int_to_ptr.vmem [resolvable:$true] %s83
      %89 = dma.hbm_to_vmem [thread:$0]  %s7, 7680, %s84, [#allocation11], 320, 320, 20
    $region33: #{cnn3d_decoder_forward.1} parent=1 // pred_fallthru
      _
    // Predicated region
    $region34: #{cnn3d_decoder_forward.1} parent=1 // pred_check
      _
    $region35: #{cnn3d_decoder_forward.1} parent=1 // pred_check_branch
      %91 = sbr.rel (0) target = $region37
    $region36: #{cnn3d_decoder_forward.1} parent=1 // pred_region
      %s93 = ssub.s32 80, 80
      %94 = vsyncadd [#allocation11], %s93
      %s96 = sshll.u32 [#allocation12], 4
      %s97 = int_to_ptr.vmem [resolvable:$true] %s96
      %99 = dma.hbm_to_vmem [thread:$0]  %s8, 80, %s97, [#allocation11]
    $region37: #{cnn3d_decoder_forward.1} parent=1 // pred_fallthru
      _
    // Predicated region
    $region38: #{cnn3d_decoder_forward.1} parent=1 // pred_check
      _
    $region39: #{cnn3d_decoder_forward.1} parent=1 // pred_check_branch
      %101 = sbr.rel (0) target = $region41
    $region40: #{cnn3d_decoder_forward.1} parent=1 // pred_region
      %s103 = ssub.s32 40960, 40960
      %104 = vsyncadd [#allocation14], %s103
      %s105 = sshll.u32 [#allocation13], 4
      %s106 = int_to_ptr.vmem [resolvable:$true] %s105
      %111 = dma.hbm_to_vmem [thread:$0]  %s9, 40960, %s106, [#allocation14], 512, 512, 32
    $region41: #{cnn3d_decoder_forward.1} parent=1 // pred_fallthru
      _
    // Predicated region
    $region42: #{cnn3d_decoder_forward.1} parent=1 // pred_check
      _
    $region43: #{cnn3d_decoder_forward.1} parent=1 // pred_check_branch
      %113 = sbr.rel (0) target = $region45
    $region44: #{cnn3d_decoder_forward.1} parent=1 // pred_region
      %114 = dma.done [#allocation3], 256
    $region45: #{cnn3d_decoder_forward.1} parent=1 // pred_fallthru
      _
    // Predicated region
    $region46: #{cnn3d_decoder_forward.1} parent=1 // pred_check
      _
    $region47: #{cnn3d_decoder_forward.1} parent=1 // pred_check_branch
      %116 = sbr.rel (0) target = $region49
    $region48: #{cnn3d_decoder_forward.1} parent=1 // pred_region
      %117 = dma.done [#allocation5], 16
    $region49: #{cnn3d_decoder_forward.1} parent=1 // pred_fallthru
      _
    // Predicated region
    $region50: #{cnn3d_decoder_forward.1} parent=1 // pred_check
      _
    $region51: #{cnn3d_decoder_forward.1} parent=1 // pred_check_branch
      %119 = sbr.rel (0) target = $region53
    $region52: #{cnn3d_decoder_forward.1} parent=1 // pred_region
      %120 = dma.done [#allocation5], 1024
    $region53: #{cnn3d_decoder_forward.1} parent=1 // pred_fallthru
      _
    // Predicated region
    $region54: #{cnn3d_decoder_forward.1} parent=1 // pred_check
      _
    $region55: #{cnn3d_decoder_forward.1} parent=1 // pred_check_branch
      %122 = sbr.rel (0) target = $region57
    $region56: #{cnn3d_decoder_forward.1} parent=1 // pred_region
      %123 = dma.done [#allocation8], 32
    $region57: #{cnn3d_decoder_forward.1} parent=1 // pred_fallthru
      _
    // Predicated region
    $region58: #{cnn3d_decoder_forward.1} parent=1 // pred_check
      _
    $region59: #{cnn3d_decoder_forward.1} parent=1 // pred_check_branch
      %125 = sbr.rel (0) target = $region61
    $region60: #{cnn3d_decoder_forward.1} parent=1 // pred_region
      %126 = dma.done [#allocation8], 32
    $region61: #{cnn3d_decoder_forward.1} parent=1 // pred_fallthru
      _
    // Predicated region
    $region62: #{cnn3d_decoder_forward.1} parent=1 // pred_check
      _
    $region63: #{cnn3d_decoder_forward.1} parent=1 // pred_check_branch
      %128 = sbr.rel (0) target = $region65
    $region64: #{cnn3d_decoder_forward.1} parent=1 // pred_region
      %129 = dma.done [#allocation11], 7680
    $region65: #{cnn3d_decoder_forward.1} parent=1 // pred_fallthru
      _
    // Predicated region
    $region66: #{cnn3d_decoder_forward.1} parent=1 // pred_check
      _
    $region67: #{cnn3d_decoder_forward.1} parent=1 // pred_check_branch
      %131 = sbr.rel (0) target = $region69
    $region68: #{cnn3d_decoder_forward.1} parent=1 // pred_region
      %132 = dma.done [#allocation11], 80
    $region69: #{cnn3d_decoder_forward.1} parent=1 // pred_fallthru
      _
    // Predicated region
    $region70: #{cnn3d_decoder_forward.1} parent=1 // pred_check
      _
    $region71: #{cnn3d_decoder_forward.1} parent=1 // pred_check_branch
      %134 = sbr.rel (0) target = $region73
    $region72: #{cnn3d_decoder_forward.1} parent=1 // pred_region
      %135 = dma.done [#allocation14], 40960
    $region73: #{cnn3d_decoder_forward.1} parent=1 // pred_fallthru
      _
    %v137 = vld [vmem:[%s0] sm:$0xf]
    %v138 = vld [vmem:[#allocation2] sm:$0xf]
    %v139 = vld [vmem:[#allocation2 + $0x4] sm:$0xf]
    %v140 = vld [vmem:[#allocation2 + $0x8] sm:$0xf]
    %v141 = vld [vmem:[#allocation2 + $0xc] sm:$0xf]
    %v142 = vld [vmem:[#allocation4] sm:$0x1]
    %v144 = vlaneseq
    %v145 = vshrl.u32 %v144, 7
    %v146 = vsub.s32 0, %v145
    %v147 = vrot.slane %v142, %v146
    %v153 = vunpack.c.l.b16 %v138
    %v154 = vunpack.c.l.b16 %v139
    %v155 = vunpack.c.l.b16 %v140
    %v156 = vunpack.c.l.b16 %v141
    %v157 = vpack.c.b16 %v154, %v153
    %v158 = vpack.c.b16 %v156, %v155
    %vm161 = vcmask 261120
    %v163 = vsel %vm161, %v137, 0
    %165 = vmatprep.subr.bf16.mxu0 0
    %166 = vmatpush1.bf16.msra.mxu0 %v157
    %167 = vmatprep.subr.bf16.mxu0 0
    %168 = vmatpush1.bf16.msra.mxu0 %v158
    %169 = vmatprep.subr.bf16.mxu0 0
    %170 = vmatpush1.bf16.msra.mxu0 0
    %171 = vmatprep.subr.bf16.mxu0 0
    %172 = vmatpush1.bf16.msra.mxu0 0
    %173 = vmatprep.subr.bf16.mxu0 0
    %174 = vmatpush1.bf16.msra.mxu0 0
    %175 = vmatprep.subr.bf16.mxu0 0
    %176 = vmatpush1.bf16.msra.mxu0 0
    %177 = vmatprep.subr.bf16.mxu0 0
    %178 = vmatpush1.bf16.msra.mxu0 0
    %179 = vmatprep.subr.bf16.mxu0 0
    %180 = vmatpush1.bf16.msra.mxu0 0
    %181 = vmatprep.subr.bf16.mxu0 0
    %182 = vmatpush1.bf16.msra.mxu0 0
    %183 = vmatprep.subr.bf16.mxu0 0
    %184 = vmatpush1.bf16.msra.mxu0 0
    %185 = vmatprep.subr.bf16.mxu0 0
    %186 = vmatpush1.bf16.msra.mxu0 0
    %187 = vmatprep.subr.bf16.mxu0 0
    %188 = vmatpush1.bf16.msra.mxu0 0
    %189 = vmatprep.subr.bf16.mxu0 0
    %190 = vmatpush1.bf16.msra.mxu0 0
    %191 = vmatprep.subr.bf16.mxu0 0
    %192 = vmatpush1.bf16.msra.mxu0 0
    %193 = vmatprep.subr.bf16.mxu0 0
    %194 = vmatpush1.bf16.msra.mxu0 0
    %195 = vmatprep.subr.bf16.mxu0 0
    %196 = vmatpush1.bf16.msra.mxu0 0
    %197 = vmatprep.mubr.bf16.mxu0 0
    %198 = vmatmul.mubr.bf16.gmra.mrb[0].mxu0 %v163
    %v199 = vpop.f32.mrb[0].mxu0
    %v200 = vadd.f32 %v147, %v199
    %v201 = vpop.f32.mrb[0].mxu0
    %v202 = vpop.f32.mrb[0].mxu0
    %v203 = vpop.f32.mrb[0].mxu0
    %204 = vdwg.mxu0
    %v205 = vmax.f32 %v200, 0.0
    %v206 = vpack.c.bf16 %v205, %v205
    %v207 = vld [vmem:[#allocation6] sm:$0xff]
    %v208 = vld [vmem:[#allocation6 + $0x8] sm:$0xff]
    %v209 = vld [vmem:[#allocation6 + $0x10] sm:$0xff]
    %v210 = vld [vmem:[#allocation6 + $0x18] sm:$0xff]
    %v211 = vld [vmem:[#allocation6 + $0x20] sm:$0xff]
    %v212 = vld [vmem:[#allocation6 + $0x28] sm:$0xff]
    %v213 = vld [vmem:[#allocation6 + $0x30] sm:$0xff]
    %v214 = vld [vmem:[#allocation6 + $0x38] sm:$0xff]
    %v215 = vld [vmem:[#allocation7] sm:$0x3]
    %v217 = vlaneseq
    %v218 = vshrl.u32 %v217, 7
    %v219 = vsub.s32 0, %v218
    %v220 = vrot.slane %v215, %v219
    %v221 = vlaneseq
    %v222 = vshrl.u32 %v221, 7
    %v223 = vsub.s32 1, %v222
    %v224 = vrot.slane %v215, %v223
    %v235 = vunpack.c.l.b16 %v207
    %v236 = vunpack.c.h.b16 %v207
    %v237 = vunpack.c.l.b16 %v208
    %v238 = vunpack.c.h.b16 %v208
    %v239 = vunpack.c.l.b16 %v209
    %v240 = vunpack.c.h.b16 %v209
    %v241 = vunpack.c.l.b16 %v210
    %v242 = vunpack.c.h.b16 %v210
    %v243 = vunpack.c.l.b16 %v211
    %v244 = vunpack.c.h.b16 %v211
    %v245 = vunpack.c.l.b16 %v212
    %v246 = vunpack.c.h.b16 %v212
    %v247 = vunpack.c.l.b16 %v213
    %v248 = vunpack.c.h.b16 %v213
    %v249 = vunpack.c.l.b16 %v214
    %v250 = vunpack.c.h.b16 %v214
    %v251 = vpack.c.b16 %v237, %v235
    %v252 = vpack.c.b16 %v238, %v236
    %v253 = vpack.c.b16 %v241, %v239
    %v254 = vpack.c.b16 %v242, %v240
    %v255 = vpack.c.b16 %v245, %v243
    %v256 = vpack.c.b16 %v246, %v244
    %v257 = vpack.c.b16 %v249, %v247
    %v258 = vpack.c.b16 %v250, %v248
    %vm267 = vcmask 523264
    %v269 = vsel %vm267, %v206, 0
    %271 = vmatprep.subr.bf16.mxu0 %v252
    %272 = vmatpush1.bf16.msra.mxu0 %v251
    %273 = vmatprep.subr.bf16.mxu0 %v254
    %274 = vmatpush1.bf16.msra.mxu0 %v253
    %275 = vmatprep.subr.bf16.mxu0 %v256
    %276 = vmatpush1.bf16.msra.mxu0 %v255
    %277 = vmatprep.subr.bf16.mxu0 %v258
    %278 = vmatpush1.bf16.msra.mxu0 %v257
    %279 = vmatprep.subr.bf16.mxu0 0
    %280 = vmatpush1.bf16.msra.mxu0 0
    %281 = vmatprep.subr.bf16.mxu0 0
    %282 = vmatpush1.bf16.msra.mxu0 0
    %283 = vmatprep.subr.bf16.mxu0 0
    %284 = vmatpush1.bf16.msra.mxu0 0
    %285 = vmatprep.subr.bf16.mxu0 0
    %286 = vmatpush1.bf16.msra.mxu0 0
    %287 = vmatprep.subr.bf16.mxu0 0
    %288 = vmatpush1.bf16.msra.mxu0 0
    %289 = vmatprep.subr.bf16.mxu0 0
    %290 = vmatpush1.bf16.msra.mxu0 0
    %291 = vmatprep.subr.bf16.mxu0 0
    %292 = vmatpush1.bf16.msra.mxu0 0
    %293 = vmatprep.subr.bf16.mxu0 0
    %294 = vmatpush1.bf16.msra.mxu0 0
    %295 = vmatprep.subr.bf16.mxu0 0
    %296 = vmatpush1.bf16.msra.mxu0 0
    %297 = vmatprep.subr.bf16.mxu0 0
    %298 = vmatpush1.bf16.msra.mxu0 0
    %299 = vmatprep.subr.bf16.mxu0 0
    %300 = vmatpush1.bf16.msra.mxu0 0
    %301 = vmatprep.subr.bf16.mxu0 0
    %302 = vmatpush1.bf16.msra.mxu0 0
    %303 = vmatprep.mubr.bf16.mxu0 0
    %304 = vmatmul.mubr.bf16.gmra.mrb[0].mxu0 %v269
    %v305 = vpop.f32.mrb[0].mxu0
    %v306 = vadd.f32 %v220, %v305
    %v307 = vpop.f32.mrb[0].mxu0
    %v308 = vadd.f32 %v224, %v307
    %v309 = vpop.f32.mrb[0].mxu0
    %v310 = vpop.f32.mrb[0].mxu0
    %311 = vdwg.mxu0
    %v312 = vmax.f32 %v306, 0.0
    %v313 = vmax.f32 %v308, 0.0
    %v314 = vpack.c.bf16 %v312, %v312
    %v315 = vpack.c.bf16 %v313, %v313
    %v316 = vld [vmem:[%s5] sm:$0xff]
    %v317 = vld [vmem:[%s5 + $0x8] sm:$0xff]
    %v318 = vld [vmem:[%s5 + $0x10] sm:$0xff]
    %v319 = vld [vmem:[%s5 + $0x18] sm:$0xff]
    %v320 = vld [vmem:[%s5 + $0x20] sm:$0xff]
    %v321 = vld [vmem:[%s5 + $0x28] sm:$0xff]
    %v322 = vld [vmem:[%s5 + $0x30] sm:$0xff]
    %v323 = vld [vmem:[%s5 + $0x38] sm:$0xff]
    %v324 = vld [vmem:[%s5 + $0x40] sm:$0xff]
    %v325 = vld [vmem:[%s5 + $0x48] sm:$0xff]
    %v326 = vld [vmem:[%s5 + $0x50] sm:$0xff]
    %v327 = vld [vmem:[%s5 + $0x58] sm:$0xff]
    %v328 = vld [vmem:[%s5 + $0x60] sm:$0xff]
    %v329 = vld [vmem:[%s5 + $0x68] sm:$0xff]
    %v330 = vld [vmem:[%s5 + $0x70] sm:$0xff]
    %v331 = vld [vmem:[%s5 + $0x78] sm:$0xff]
    %v332 = vld [vmem:[%s5 + $0x80] sm:$0xff]
    %v333 = vld [vmem:[%s5 + $0x88] sm:$0xff]
    %v334 = vld [vmem:[%s5 + $0x90] sm:$0xff]
    %v335 = vld [vmem:[%s5 + $0x98] sm:$0xff]
    %v336 = vld [vmem:[%s5 + $0xa0] sm:$0xff]
    %v337 = vld [vmem:[%s5 + $0xa8] sm:$0xff]
    %v338 = vld [vmem:[%s5 + $0xb0] sm:$0xff]
    %v339 = vld [vmem:[%s5 + $0xb8] sm:$0xff]
    %v340 = vld [vmem:[%s5 + $0xc0] sm:$0xff]
    %v341 = vld [vmem:[%s5 + $0xc8] sm:$0xff]
    %v342 = vld [vmem:[%s5 + $0xd0] sm:$0xff]
    %v343 = vld [vmem:[%s5 + $0xd8] sm:$0xff]
    %v344 = vld [vmem:[%s5 + $0xe0] sm:$0xff]
    %v345 = vld [vmem:[%s5 + $0xe8] sm:$0xff]
    %v346 = vld [vmem:[%s5 + $0xf0] sm:$0xff]
    %v347 = vld [vmem:[%s5 + $0xf8] sm:$0xff]
    %v348 = vld [vmem:[#allocation9] sm:$0x3]
    %v350 = vlaneseq
    %v351 = vshrl.u32 %v350, 7
    %v352 = vsub.s32 0, %v351
    %v353 = vrot.slane %v348, %v352
    %v354 = vlaneseq
    %v355 = vshrl.u32 %v354, 7
    %v356 = vsub.s32 1, %v355
    %v357 = vrot.slane %v348, %v356
    %v392 = vunpack.c.l.b16 %v316
    %v393 = vunpack.c.h.b16 %v316
    %v394 = vunpack.c.l.b16 %v317
    %v395 = vunpack.c.h.b16 %v317
    %v396 = vunpack.c.l.b16 %v318
    %v397 = vunpack.c.h.b16 %v318
    %v398 = vunpack.c.l.b16 %v319
    %v399 = vunpack.c.h.b16 %v319
    %v400 = vunpack.c.l.b16 %v320
    %v401 = vunpack.c.h.b16 %v320
    %v402 = vunpack.c.l.b16 %v321
    %v403 = vunpack.c.h.b16 %v321
    %v404 = vunpack.c.l.b16 %v322
    %v405 = vunpack.c.h.b16 %v322
    %v406 = vunpack.c.l.b16 %v323
    %v407 = vunpack.c.h.b16 %v323
    %v408 = vunpack.c.l.b16 %v324
    %v409 = vunpack.c.h.b16 %v324
    %v410 = vunpack.c.l.b16 %v325
    %v411 = vunpack.c.h.b16 %v325
    %v412 = vunpack.c.l.b16 %v326
    %v413 = vunpack.c.h.b16 %v326
    %v414 = vunpack.c.l.b16 %v327
    %v415 = vunpack.c.h.b16 %v327
    %v416 = vunpack.c.l.b16 %v328
    %v417 = vunpack.c.h.b16 %v328
    %v418 = vunpack.c.l.b16 %v329
    %v419 = vunpack.c.h.b16 %v329
    %v420 = vunpack.c.l.b16 %v330
    %v421 = vunpack.c.h.b16 %v330
    %v422 = vunpack.c.l.b16 %v331
    %v423 = vunpack.c.h.b16 %v331
    %v424 = vunpack.c.l.b16 %v332
    %v425 = vunpack.c.h.b16 %v332
    %v426 = vunpack.c.l.b16 %v333
    %v427 = vunpack.c.h.b16 %v333
    %v428 = vunpack.c.l.b16 %v334
    %v429 = vunpack.c.h.b16 %v334
    %v430 = vunpack.c.l.b16 %v335
    %v431 = vunpack.c.h.b16 %v335
    %v432 = vunpack.c.l.b16 %v336
    %v433 = vunpack.c.h.b16 %v336
    %v434 = vunpack.c.l.b16 %v337
    %v435 = vunpack.c.h.b16 %v337
    %v436 = vunpack.c.l.b16 %v338
    %v437 = vunpack.c.h.b16 %v338
    %v438 = vunpack.c.l.b16 %v339
    %v439 = vunpack.c.h.b16 %v339
    %v440 = vunpack.c.l.b16 %v340
    %v441 = vunpack.c.h.b16 %v340
    %v442 = vunpack.c.l.b16 %v341
    %v443 = vunpack.c.h.b16 %v341
    %v444 = vunpack.c.l.b16 %v342
    %v445 = vunpack.c.h.b16 %v342
    %v446 = vunpack.c.l.b16 %v343
    %v447 = vunpack.c.h.b16 %v343
    %v448 = vunpack.c.l.b16 %v344
    %v449 = vunpack.c.h.b16 %v344
    %v450 = vunpack.c.l.b16 %v345
    %v451 = vunpack.c.h.b16 %v345
    %v452 = vunpack.c.l.b16 %v346
    %v453 = vunpack.c.h.b16 %v346
    %v454 = vunpack.c.l.b16 %v347
    %v455 = vunpack.c.h.b16 %v347
    %v456 = vpack.c.b16 %v394, %v392
    %v457 = vpack.c.b16 %v395, %v393
    %v458 = vpack.c.b16 %v398, %v396
    %v459 = vpack.c.b16 %v399, %v397
    %v460 = vpack.c.b16 %v402, %v400
    %v461 = vpack.c.b16 %v403, %v401
    %v462 = vpack.c.b16 %v406, %v404
    %v463 = vpack.c.b16 %v407, %v405
    %v464 = vpack.c.b16 %v410, %v408
    %v465 = vpack.c.b16 %v411, %v409
    %v466 = vpack.c.b16 %v414, %v412
    %v467 = vpack.c.b16 %v415, %v413
    %v468 = vpack.c.b16 %v418, %v416
    %v469 = vpack.c.b16 %v419, %v417
    %v470 = vpack.c.b16 %v422, %v420
    %v471 = vpack.c.b16 %v423, %v421
    %v472 = vpack.c.b16 %v426, %v424
    %v473 = vpack.c.b16 %v427, %v425
    %v474 = vpack.c.b16 %v430, %v428
    %v475 = vpack.c.b16 %v431, %v429
    %v476 = vpack.c.b16 %v434, %v432
    %v477 = vpack.c.b16 %v435, %v433
    %v478 = vpack.c.b16 %v438, %v436
    %v479 = vpack.c.b16 %v439, %v437
    %v480 = vpack.c.b16 %v442, %v440
    %v481 = vpack.c.b16 %v443, %v441
    %v482 = vpack.c.b16 %v446, %v444
    %v483 = vpack.c.b16 %v447, %v445
    %v484 = vpack.c.b16 %v450, %v448
    %v485 = vpack.c.b16 %v451, %v449
    %v486 = vpack.c.b16 %v454, %v452
    %v487 = vpack.c.b16 %v455, %v453
    %520 = vmatprep.subr.bf16.mxu0 %v457
    %521 = vmatpush1.bf16.msra.mxu0 %v456
    %522 = vmatprep.subr.bf16.mxu0 %v459
    %523 = vmatpush1.bf16.msra.mxu0 %v458
    %524 = vmatprep.subr.bf16.mxu0 %v461
    %525 = vmatpush1.bf16.msra.mxu0 %v460
    %526 = vmatprep.subr.bf16.mxu0 %v463
    %527 = vmatpush1.bf16.msra.mxu0 %v462
    %528 = vmatprep.subr.bf16.mxu0 %v465
    %529 = vmatpush1.bf16.msra.mxu0 %v464
    %530 = vmatprep.subr.bf16.mxu0 %v467
    %531 = vmatpush1.bf16.msra.mxu0 %v466
    %532 = vmatprep.subr.bf16.mxu0 %v469
    %533 = vmatpush1.bf16.msra.mxu0 %v468
    %534 = vmatprep.subr.bf16.mxu0 %v471
    %535 = vmatpush1.bf16.msra.mxu0 %v470
    %536 = vmatprep.subr.bf16.mxu0 %v473
    %537 = vmatpush1.bf16.msra.mxu0 %v472
    %538 = vmatprep.subr.bf16.mxu0 %v475
    %539 = vmatpush1.bf16.msra.mxu0 %v474
    %540 = vmatprep.subr.bf16.mxu0 %v477
    %541 = vmatpush1.bf16.msra.mxu0 %v476
    %542 = vmatprep.subr.bf16.mxu0 %v479
    %543 = vmatpush1.bf16.msra.mxu0 %v478
    %544 = vmatprep.subr.bf16.mxu0 %v481
    %545 = vmatpush1.bf16.msra.mxu0 %v480
    %546 = vmatprep.subr.bf16.mxu0 %v483
    %547 = vmatpush1.bf16.msra.mxu0 %v482
    %548 = vmatprep.subr.bf16.mxu0 %v485
    %549 = vmatpush1.bf16.msra.mxu0 %v484
    %550 = vmatprep.subr.bf16.mxu0 %v487
    %551 = vmatpush1.bf16.msra.mxu0 %v486
    %552 = vmatprep.mubr.bf16.mxu0 %v315
    %553 = vmatmul.mubr.bf16.gmra.mrb[0].mxu0 %v314
    %v554 = vpop.f32.mrb[0].mxu0
    %v555 = vadd.f32 %v353, %v554
    %v556 = vpop.f32.mrb[0].mxu0
    %v557 = vadd.f32 %v357, %v556
    %v558 = vpop.f32.mrb[0].mxu0
    %v559 = vpop.f32.mrb[0].mxu0
    %560 = vdwg.mxu0
    %v561 = vmax.f32 %v555, 0.0
    %v562 = vmax.f32 %v557, 0.0
    %v563 = vpack.c.bf16 %v561, %v561
    %v564 = vpack.c.bf16 %v562, %v562
    %v565 = vld [vmem:[#allocation10] sm:$0xff]
    %v566 = vld [vmem:[#allocation10 + $0x8] sm:$0xff]
    %v567 = vld [vmem:[#allocation10 + $0x10] sm:$0xf]
    %v568 = vld [vmem:[#allocation10 + $0x14] sm:$0xff]
    %v569 = vld [vmem:[#allocation10 + $0x1c] sm:$0xff]
    %v570 = vld [vmem:[#allocation10 + $0x24] sm:$0xf]
    %v571 = vld [vmem:[#allocation10 + $0x28] sm:$0xff]
    %v572 = vld [vmem:[#allocation10 + $0x30] sm:$0xff]
    %v573 = vld [vmem:[#allocation10 + $0x38] sm:$0xf]
    %v574 = vld [vmem:[#allocation10 + $0x3c] sm:$0xff]
    %v575 = vld [vmem:[#allocation10 + $0x44] sm:$0xff]
    %v576 = vld [vmem:[#allocation10 + $0x4c] sm:$0xf]
    %v577 = vld [vmem:[#allocation10 + $0x50] sm:$0xff]
    %v578 = vld [vmem:[#allocation10 + $0x58] sm:$0xff]
    %v579 = vld [vmem:[#allocation10 + $0x60] sm:$0xf]
    %v580 = vld [vmem:[#allocation10 + $0x64] sm:$0xff]
    %v581 = vld [vmem:[#allocation10 + $0x6c] sm:$0xff]
    %v582 = vld [vmem:[#allocation10 + $0x74] sm:$0xf]
    %v583 = vld [vmem:[#allocation10 + $0x78] sm:$0xff]
    %v584 = vld [vmem:[#allocation10 + $0x80] sm:$0xff]
    %v585 = vld [vmem:[#allocation10 + $0x88] sm:$0xf]
    %v586 = vld [vmem:[#allocation10 + $0x8c] sm:$0xff]
    %v587 = vld [vmem:[#allocation10 + $0x94] sm:$0xff]
    %v588 = vld [vmem:[#allocation10 + $0x9c] sm:$0xf]
    %v589 = vld [vmem:[#allocation10 + $0xa0] sm:$0xff]
    %v590 = vld [vmem:[#allocation10 + $0xa8] sm:$0xff]
    %v591 = vld [vmem:[#allocation10 + $0xb0] sm:$0xf]
    %v592 = vld [vmem:[#allocation10 + $0xb4] sm:$0xff]
    %v593 = vld [vmem:[#allocation10 + $0xbc] sm:$0xff]
    %v594 = vld [vmem:[#allocation10 + $0xc4] sm:$0xf]
    %v595 = vld [vmem:[#allocation10 + $0xc8] sm:$0xff]
    %v596 = vld [vmem:[#allocation10 + $0xd0] sm:$0xff]
    %v597 = vld [vmem:[#allocation10 + $0xd8] sm:$0xf]
    %v598 = vld [vmem:[#allocation10 + $0xdc] sm:$0xff]
    %v599 = vld [vmem:[#allocation10 + $0xe4] sm:$0xff]
    %v600 = vld [vmem:[#allocation10 + $0xec] sm:$0xf]
    %v601 = vld [vmem:[#allocation10 + $0xf0] sm:$0xff]
    %v602 = vld [vmem:[#allocation10 + $0xf8] sm:$0xff]
    %v603 = vld [vmem:[#allocation10 + $0x100] sm:$0xf]
    %v604 = vld [vmem:[#allocation10 + $0x104] sm:$0xff]
    %v605 = vld [vmem:[#allocation10 + $0x10c] sm:$0xff]
    %v606 = vld [vmem:[#allocation10 + $0x114] sm:$0xf]
    %v607 = vld [vmem:[#allocation10 + $0x118] sm:$0xff]
    %v608 = vld [vmem:[#allocation10 + $0x120] sm:$0xff]
    %v609 = vld [vmem:[#allocation10 + $0x128] sm:$0xf]
    %v610 = vld [vmem:[#allocation10 + $0x12c] sm:$0xff]
    %v611 = vld [vmem:[#allocation10 + $0x134] sm:$0xff]
    %v612 = vld [vmem:[#allocation10 + $0x13c] sm:$0xf]
    %v613 = vld [vmem:[#allocation10 + $0x140] sm:$0xff]
    %v614 = vld [vmem:[#allocation10 + $0x148] sm:$0xff]
    %v615 = vld [vmem:[#allocation10 + $0x150] sm:$0xf]
    %v616 = vld [vmem:[#allocation10 + $0x154] sm:$0xff]
    %v617 = vld [vmem:[#allocation10 + $0x15c] sm:$0xff]
    %v618 = vld [vmem:[#allocation10 + $0x164] sm:$0xf]
    %v619 = vld [vmem:[#allocation10 + $0x168] sm:$0xff]
    %v620 = vld [vmem:[#allocation10 + $0x170] sm:$0xff]
    %v621 = vld [vmem:[#allocation10 + $0x178] sm:$0xf]
    %v622 = vld [vmem:[#allocation10 + $0x17c] sm:$0xff]
    %v623 = vld [vmem:[#allocation10 + $0x184] sm:$0xff]
    %v624 = vld [vmem:[#allocation10 + $0x18c] sm:$0xf]
    %v625 = vld [vmem:[#allocation10 + $0x190] sm:$0xff]
    %v626 = vld [vmem:[#allocation10 + $0x198] sm:$0xff]
    %v627 = vld [vmem:[#allocation10 + $0x1a0] sm:$0xf]
    %v628 = vld [vmem:[#allocation10 + $0x1a4] sm:$0xff]
    %v629 = vld [vmem:[#allocation10 + $0x1ac] sm:$0xff]
    %v630 = vld [vmem:[#allocation10 + $0x1b4] sm:$0xf]
    %v631 = vld [vmem:[#allocation10 + $0x1b8] sm:$0xff]
    %v632 = vld [vmem:[#allocation10 + $0x1c0] sm:$0xff]
    %v633 = vld [vmem:[#allocation10 + $0x1c8] sm:$0xf]
    %v634 = vld [vmem:[#allocation10 + $0x1cc] sm:$0xff]
    %v635 = vld [vmem:[#allocation10 + $0x1d4] sm:$0xff]
    %v636 = vld [vmem:[#allocation10 + $0x1dc] sm:$0xf]
    %v637 = vld [vmem:[#allocation12] sm:$0x1f]
    %v639 = vlaneseq
    %v640 = vshrl.u32 %v639, 7
    %v641 = vsub.s32 0, %v640
    %v642 = vrot.slane %v637, %v641
    %v643 = vlaneseq
    %v644 = vshrl.u32 %v643, 7
    %v645 = vsub.s32 1, %v644
    %v646 = vrot.slane %v637, %v645
    %v647 = vlaneseq
    %v648 = vshrl.u32 %v647, 7
    %v649 = vsub.s32 2, %v648
    %v650 = vrot.slane %v637, %v649
    %v651 = vlaneseq
    %v652 = vshrl.u32 %v651, 7
    %v653 = vsub.s32 3, %v652
    %v654 = vrot.slane %v637, %v653
    %v655 = vlaneseq
    %v656 = vshrl.u32 %v655, 7
    %v657 = vsub.s32 4, %v656
    %v658 = vrot.slane %v637, %v657
    %v736 = vunpack.c.l.b16 %v565
    %v737 = vunpack.c.h.b16 %v565
    %v738 = vunpack.c.l.b16 %v566
    %v739 = vunpack.c.h.b16 %v566
    %v740 = vunpack.c.l.b16 %v567
    %v741 = vunpack.c.l.b16 %v568
    %v742 = vunpack.c.h.b16 %v568
    %v743 = vunpack.c.l.b16 %v569
    %v744 = vunpack.c.h.b16 %v569
    %v745 = vunpack.c.l.b16 %v570
    %v746 = vunpack.c.l.b16 %v571
    %v747 = vunpack.c.h.b16 %v571
    %v748 = vunpack.c.l.b16 %v572
    %v749 = vunpack.c.h.b16 %v572
    %v750 = vunpack.c.l.b16 %v573
    %v751 = vunpack.c.l.b16 %v574
    %v752 = vunpack.c.h.b16 %v574
    %v753 = vunpack.c.l.b16 %v575
    %v754 = vunpack.c.h.b16 %v575
    %v755 = vunpack.c.l.b16 %v576
    %v756 = vunpack.c.l.b16 %v577
    %v757 = vunpack.c.h.b16 %v577
    %v758 = vunpack.c.l.b16 %v578
    %v759 = vunpack.c.h.b16 %v578
    %v760 = vunpack.c.l.b16 %v579
    %v761 = vunpack.c.l.b16 %v580
    %v762 = vunpack.c.h.b16 %v580
    %v763 = vunpack.c.l.b16 %v581
    %v764 = vunpack.c.h.b16 %v581
    %v765 = vunpack.c.l.b16 %v582
    %v766 = vunpack.c.l.b16 %v583
    %v767 = vunpack.c.h.b16 %v583
    %v768 = vunpack.c.l.b16 %v584
    %v769 = vunpack.c.h.b16 %v584
    %v770 = vunpack.c.l.b16 %v585
    %v771 = vunpack.c.l.b16 %v586
    %v772 = vunpack.c.h.b16 %v586
    %v773 = vunpack.c.l.b16 %v587
    %v774 = vunpack.c.h.b16 %v587
    %v775 = vunpack.c.l.b16 %v588
    %v776 = vunpack.c.l.b16 %v589
    %v777 = vunpack.c.h.b16 %v589
    %v778 = vunpack.c.l.b16 %v590
    %v779 = vunpack.c.h.b16 %v590
    %v780 = vunpack.c.l.b16 %v591
    %v781 = vunpack.c.l.b16 %v592
    %v782 = vunpack.c.h.b16 %v592
    %v783 = vunpack.c.l.b16 %v593
    %v784 = vunpack.c.h.b16 %v593
    %v785 = vunpack.c.l.b16 %v594
    %v786 = vunpack.c.l.b16 %v595
    %v787 = vunpack.c.h.b16 %v595
    %v788 = vunpack.c.l.b16 %v596
    %v789 = vunpack.c.h.b16 %v596
    %v790 = vunpack.c.l.b16 %v597
    %v791 = vunpack.c.l.b16 %v598
    %v792 = vunpack.c.h.b16 %v598
    %v793 = vunpack.c.l.b16 %v599
    %v794 = vunpack.c.h.b16 %v599
    %v795 = vunpack.c.l.b16 %v600
    %v796 = vunpack.c.l.b16 %v601
    %v797 = vunpack.c.h.b16 %v601
    %v798 = vunpack.c.l.b16 %v602
    %v799 = vunpack.c.h.b16 %v602
    %v800 = vunpack.c.l.b16 %v603
    %v801 = vunpack.c.l.b16 %v604
    %v802 = vunpack.c.h.b16 %v604
    %v803 = vunpack.c.l.b16 %v605
    %v804 = vunpack.c.h.b16 %v605
    %v805 = vunpack.c.l.b16 %v606
    %v806 = vunpack.c.l.b16 %v607
    %v807 = vunpack.c.h.b16 %v607
    %v808 = vunpack.c.l.b16 %v608
    %v809 = vunpack.c.h.b16 %v608
    %v810 = vunpack.c.l.b16 %v609
    %v811 = vunpack.c.l.b16 %v610
    %v812 = vunpack.c.h.b16 %v610
    %v813 = vunpack.c.l.b16 %v611
    %v814 = vunpack.c.h.b16 %v611
    %v815 = vunpack.c.l.b16 %v612
    %v816 = vunpack.c.l.b16 %v613
    %v817 = vunpack.c.h.b16 %v613
    %v818 = vunpack.c.l.b16 %v614
    %v819 = vunpack.c.h.b16 %v614
    %v820 = vunpack.c.l.b16 %v615
    %v821 = vunpack.c.l.b16 %v616
    %v822 = vunpack.c.h.b16 %v616
    %v823 = vunpack.c.l.b16 %v617
    %v824 = vunpack.c.h.b16 %v617
    %v825 = vunpack.c.l.b16 %v618
    %v826 = vunpack.c.l.b16 %v619
    %v827 = vunpack.c.h.b16 %v619
    %v828 = vunpack.c.l.b16 %v620
    %v829 = vunpack.c.h.b16 %v620
    %v830 = vunpack.c.l.b16 %v621
    %v831 = vunpack.c.l.b16 %v622
    %v832 = vunpack.c.h.b16 %v622
    %v833 = vunpack.c.l.b16 %v623
    %v834 = vunpack.c.h.b16 %v623
    %v835 = vunpack.c.l.b16 %v624
    %v836 = vunpack.c.l.b16 %v625
    %v837 = vunpack.c.h.b16 %v625
    %v838 = vunpack.c.l.b16 %v626
    %v839 = vunpack.c.h.b16 %v626
    %v840 = vunpack.c.l.b16 %v627
    %v841 = vunpack.c.l.b16 %v628
    %v842 = vunpack.c.h.b16 %v628
    %v843 = vunpack.c.l.b16 %v629
    %v844 = vunpack.c.h.b16 %v629
    %v845 = vunpack.c.l.b16 %v630
    %v846 = vunpack.c.l.b16 %v631
    %v847 = vunpack.c.h.b16 %v631
    %v848 = vunpack.c.l.b16 %v632
    %v849 = vunpack.c.h.b16 %v632
    %v850 = vunpack.c.l.b16 %v633
    %v851 = vunpack.c.l.b16 %v634
    %v852 = vunpack.c.h.b16 %v634
    %v853 = vunpack.c.l.b16 %v635
    %v854 = vunpack.c.h.b16 %v635
    %v855 = vunpack.c.l.b16 %v636
    %v856 = vpack.c.b16 %v741, %v736
    %v857 = vpack.c.b16 %v742, %v737
    %v858 = vpack.c.b16 %v743, %v738
    %v859 = vpack.c.b16 %v744, %v739
    %v860 = vpack.c.b16 %v745, %v740
    %v861 = vpack.c.b16 %v751, %v746
    %v862 = vpack.c.b16 %v752, %v747
    %v863 = vpack.c.b16 %v753, %v748
    %v864 = vpack.c.b16 %v754, %v749
    %v865 = vpack.c.b16 %v755, %v750
    %v866 = vpack.c.b16 %v761, %v756
    %v867 = vpack.c.b16 %v762, %v757
    %v868 = vpack.c.b16 %v763, %v758
    %v869 = vpack.c.b16 %v764, %v759
    %v870 = vpack.c.b16 %v765, %v760
    %v871 = vpack.c.b16 %v771, %v766
    %v872 = vpack.c.b16 %v772, %v767
    %v873 = vpack.c.b16 %v773, %v768
    %v874 = vpack.c.b16 %v774, %v769
    %v875 = vpack.c.b16 %v775, %v770
    %v876 = vpack.c.b16 %v781, %v776
    %v877 = vpack.c.b16 %v782, %v777
    %v878 = vpack.c.b16 %v783, %v778
    %v879 = vpack.c.b16 %v784, %v779
    %v880 = vpack.c.b16 %v785, %v780
    %v881 = vpack.c.b16 %v791, %v786
    %v882 = vpack.c.b16 %v792, %v787
    %v883 = vpack.c.b16 %v793, %v788
    %v884 = vpack.c.b16 %v794, %v789
    %v885 = vpack.c.b16 %v795, %v790
    %v886 = vpack.c.b16 %v801, %v796
    %v887 = vpack.c.b16 %v802, %v797
    %v888 = vpack.c.b16 %v803, %v798
    %v889 = vpack.c.b16 %v804, %v799
    %v890 = vpack.c.b16 %v805, %v800
    %v891 = vpack.c.b16 %v811, %v806
    %v892 = vpack.c.b16 %v812, %v807
    %v893 = vpack.c.b16 %v813, %v808
    %v894 = vpack.c.b16 %v814, %v809
    %v895 = vpack.c.b16 %v815, %v810
    %v896 = vpack.c.b16 %v821, %v816
    %v897 = vpack.c.b16 %v822, %v817
    %v898 = vpack.c.b16 %v823, %v818
    %v899 = vpack.c.b16 %v824, %v819
    %v900 = vpack.c.b16 %v825, %v820
    %v901 = vpack.c.b16 %v831, %v826
    %v902 = vpack.c.b16 %v832, %v827
    %v903 = vpack.c.b16 %v833, %v828
    %v904 = vpack.c.b16 %v834, %v829
    %v905 = vpack.c.b16 %v835, %v830
    %v906 = vpack.c.b16 %v841, %v836
    %v907 = vpack.c.b16 %v842, %v837
    %v908 = vpack.c.b16 %v843, %v838
    %v909 = vpack.c.b16 %v844, %v839
    %v910 = vpack.c.b16 %v845, %v840
    %v911 = vpack.c.b16 %v851, %v846
    %v912 = vpack.c.b16 %v852, %v847
    %v913 = vpack.c.b16 %v853, %v848
    %v914 = vpack.c.b16 %v854, %v849
    %v915 = vpack.c.b16 %v855, %v850
    %v977 = vsel %vm267, %v564, 0
    %979 = vmatprep.subr.bf16.mxu0 %v857
    %980 = vmatpush1.bf16.msra.mxu0 %v856
    %981 = vmatprep.subr.bf16.mxu0 %v862
    %982 = vmatpush1.bf16.msra.mxu0 %v861
    %983 = vmatprep.subr.bf16.mxu0 %v867
    %984 = vmatpush1.bf16.msra.mxu0 %v866
    %985 = vmatprep.subr.bf16.mxu0 %v872
    %986 = vmatpush1.bf16.msra.mxu0 %v871
    %987 = vmatprep.subr.bf16.mxu0 %v877
    %988 = vmatpush1.bf16.msra.mxu0 %v876
    %989 = vmatprep.subr.bf16.mxu0 %v882
    %990 = vmatpush1.bf16.msra.mxu0 %v881
    %991 = vmatprep.subr.bf16.mxu0 %v887
    %992 = vmatpush1.bf16.msra.mxu0 %v886
    %993 = vmatprep.subr.bf16.mxu0 %v892
    %994 = vmatpush1.bf16.msra.mxu0 %v891
    %995 = vmatprep.subr.bf16.mxu0 %v897
    %996 = vmatpush1.bf16.msra.mxu0 %v896
    %997 = vmatprep.subr.bf16.mxu0 %v902
    %998 = vmatpush1.bf16.msra.mxu0 %v901
    %999 = vmatprep.subr.bf16.mxu0 %v907
    %1000 = vmatpush1.bf16.msra.mxu0 %v906
    %1001 = vmatprep.subr.bf16.mxu0 %v912
    %1002 = vmatpush1.bf16.msra.mxu0 %v911
    %1003 = vmatprep.subr.bf16.mxu0 0
    %1004 = vmatpush1.bf16.msra.mxu0 0
    %1005 = vmatprep.subr.bf16.mxu0 0
    %1006 = vmatpush1.bf16.msra.mxu0 0
    %1007 = vmatprep.subr.bf16.mxu0 0
    %1008 = vmatpush1.bf16.msra.mxu0 0
    %1009 = vmatprep.subr.bf16.mxu0 0
    %1010 = vmatpush1.bf16.msra.mxu0 0
    %1011 = vmatprep.mubr.bf16.mxu0 %v977
    %1012 = vmatmul.mubr.bf16.gmra.mrb[0].mxu0 %v563
    %v1013 = vpop.f32.mrb[0].mxu0
    %v1014 = vadd.f32 %v642, %v1013
    %v1015 = vpop.f32.mrb[0].mxu0
    %v1016 = vadd.f32 %v646, %v1015
    %v1017 = vpop.f32.mrb[0].mxu0
    %v1018 = vpop.f32.mrb[0].mxu0
    %1019 = vdwg.mxu0
    %1020 = vmatprep.subr.bf16.mxu0 %v859
    %1021 = vmatpush1.bf16.msra.mxu0 %v858
    %1022 = vmatprep.subr.bf16.mxu0 %v864
    %1023 = vmatpush1.bf16.msra.mxu0 %v863
    %1024 = vmatprep.subr.bf16.mxu0 %v869
    %1025 = vmatpush1.bf16.msra.mxu0 %v868
    %1026 = vmatprep.subr.bf16.mxu0 %v874
    %1027 = vmatpush1.bf16.msra.mxu0 %v873
    %1028 = vmatprep.subr.bf16.mxu0 %v879
    %1029 = vmatpush1.bf16.msra.mxu0 %v878
    %1030 = vmatprep.subr.bf16.mxu0 %v884
    %1031 = vmatpush1.bf16.msra.mxu0 %v883
    %1032 = vmatprep.subr.bf16.mxu0 %v889
    %1033 = vmatpush1.bf16.msra.mxu0 %v888
    %1034 = vmatprep.subr.bf16.mxu0 %v894
    %1035 = vmatpush1.bf16.msra.mxu0 %v893
    %1036 = vmatprep.subr.bf16.mxu0 %v899
    %1037 = vmatpush1.bf16.msra.mxu0 %v898
    %1038 = vmatprep.subr.bf16.mxu0 %v904
    %1039 = vmatpush1.bf16.msra.mxu0 %v903
    %1040 = vmatprep.subr.bf16.mxu0 %v909
    %1041 = vmatpush1.bf16.msra.mxu0 %v908
    %1042 = vmatprep.subr.bf16.mxu0 %v914
    %1043 = vmatpush1.bf16.msra.mxu0 %v913
    %1044 = vmatprep.subr.bf16.mxu0 0
    %1045 = vmatpush1.bf16.msra.mxu0 0
    %1046 = vmatprep.subr.bf16.mxu0 0
    %1047 = vmatpush1.bf16.msra.mxu0 0
    %1048 = vmatprep.subr.bf16.mxu0 0
    %1049 = vmatpush1.bf16.msra.mxu0 0
    %1050 = vmatprep.subr.bf16.mxu0 0
    %1051 = vmatpush1.bf16.msra.mxu0 0
    %1052 = vmatprep.mubr.bf16.mxu0 %v977
    %1053 = vmatmul.mubr.bf16.gmra.mrb[0].mxu0 %v563
    %v1054 = vpop.f32.mrb[0].mxu0
    %v1055 = vadd.f32 %v650, %v1054
    %v1056 = vpop.f32.mrb[0].mxu0
    %v1057 = vadd.f32 %v654, %v1056
    %v1058 = vpop.f32.mrb[0].mxu0
    %v1059 = vpop.f32.mrb[0].mxu0
    %1060 = vdwg.mxu0
    %1061 = vmatprep.subr.bf16.mxu0 0
    %1062 = vmatpush1.bf16.msra.mxu0 %v860
    %1063 = vmatprep.subr.bf16.mxu0 0
    %1064 = vmatpush1.bf16.msra.mxu0 %v865
    %1065 = vmatprep.subr.bf16.mxu0 0
    %1066 = vmatpush1.bf16.msra.mxu0 %v870
    %1067 = vmatprep.subr.bf16.mxu0 0
    %1068 = vmatpush1.bf16.msra.mxu0 %v875
    %1069 = vmatprep.subr.bf16.mxu0 0
    %1070 = vmatpush1.bf16.msra.mxu0 %v880
    %1071 = vmatprep.subr.bf16.mxu0 0
    %1072 = vmatpush1.bf16.msra.mxu0 %v885
    %1073 = vmatprep.subr.bf16.mxu0 0
    %1074 = vmatpush1.bf16.msra.mxu0 %v890
    %1075 = vmatprep.subr.bf16.mxu0 0
    %1076 = vmatpush1.bf16.msra.mxu0 %v895
    %1077 = vmatprep.subr.bf16.mxu0 0
    %1078 = vmatpush1.bf16.msra.mxu0 %v900
    %1079 = vmatprep.subr.bf16.mxu0 0
    %1080 = vmatpush1.bf16.msra.mxu0 %v905
    %1081 = vmatprep.subr.bf16.mxu0 0
    %1082 = vmatpush1.bf16.msra.mxu0 %v910
    %1083 = vmatprep.subr.bf16.mxu0 0
    %1084 = vmatpush1.bf16.msra.mxu0 %v915
    %1085 = vmatprep.subr.bf16.mxu0 0
    %1086 = vmatpush1.bf16.msra.mxu0 0
    %1087 = vmatprep.subr.bf16.mxu0 0
    %1088 = vmatpush1.bf16.msra.mxu0 0
    %1089 = vmatprep.subr.bf16.mxu0 0
    %1090 = vmatpush1.bf16.msra.mxu0 0
    %1091 = vmatprep.subr.bf16.mxu0 0
    %1092 = vmatpush1.bf16.msra.mxu0 0
    %1093 = vmatprep.mubr.bf16.mxu0 %v977
    %1094 = vmatmul.mubr.bf16.gmra.mrb[0].mxu0 %v563
    %v1095 = vpop.f32.mrb[0].mxu0
    %v1096 = vadd.f32 %v658, %v1095
    %v1097 = vpop.f32.mrb[0].mxu0
    %v1098 = vpop.f32.mrb[0].mxu0
    %v1099 = vpop.f32.mrb[0].mxu0
    %1100 = vdwg.mxu0
    %v1101 = vmax.f32 %v1014, 0.0
    %v1102 = vmax.f32 %v1016, 0.0
    %v1103 = vmax.f32 %v1055, 0.0
    %v1104 = vmax.f32 %v1057, 0.0
    %v1105 = vmax.f32 %v1096, 0.0
    %v1106 = vpack.c.bf16 %v1101, %v1101
    %v1107 = vpack.c.bf16 %v1102, %v1102
    %v1108 = vpack.c.bf16 %v1103, %v1103
    %v1109 = vpack.c.bf16 %v1104, %v1104
    %v1110 = vpack.c.bf16 %v1105, %v1105
    %v1111 = vld [vmem:[#allocation13] sm:$0xff]
    %v1112 = vld [vmem:[#allocation13 + $0x8] sm:$0xff]
    %v1113 = vld [vmem:[#allocation13 + $0x10] sm:$0xff]
    %v1114 = vld [vmem:[#allocation13 + $0x18] sm:$0xff]
    %v1115 = vld [vmem:[#allocation13 + $0x20] sm:$0xff]
    %v1116 = vld [vmem:[#allocation13 + $0x28] sm:$0xff]
    %v1117 = vld [vmem:[#allocation13 + $0x30] sm:$0xff]
    %v1118 = vld [vmem:[#allocation13 + $0x38] sm:$0xff]
    %v1119 = vld [vmem:[#allocation13 + $0x40] sm:$0xff]
    %v1120 = vld [vmem:[#allocation13 + $0x48] sm:$0xff]
    %v1121 = vld [vmem:[#allocation13 + $0x50] sm:$0xff]
    %v1122 = vld [vmem:[#allocation13 + $0x58] sm:$0xff]
    %v1123 = vld [vmem:[#allocation13 + $0x60] sm:$0xff]
    %v1124 = vld [vmem:[#allocation13 + $0x68] sm:$0xff]
    %v1125 = vld [vmem:[#allocation13 + $0x70] sm:$0xff]
    %v1126 = vld [vmem:[#allocation13 + $0x78] sm:$0xff]
    %v1127 = vld [vmem:[#allocation13 + $0x80] sm:$0xff]
    %v1128 = vld [vmem:[#allocation13 + $0x88] sm:$0xff]
    %v1129 = vld [vmem:[#allocation13 + $0x90] sm:$0xff]
    %v1130 = vld [vmem:[#allocation13 + $0x98] sm:$0xff]
    %v1131 = vld [vmem:[#allocation13 + $0xa0] sm:$0xff]
    %v1132 = vld [vmem:[#allocation13 + $0xa8] sm:$0xff]
    %v1133 = vld [vmem:[#allocation13 + $0xb0] sm:$0xff]
    %v1134 = vld [vmem:[#allocation13 + $0xb8] sm:$0xff]
    %v1135 = vld [vmem:[#allocation13 + $0xc0] sm:$0xff]
    %v1136 = vld [vmem:[#allocation13 + $0xc8] sm:$0xff]
    %v1137 = vld [vmem:[#allocation13 + $0xd0] sm:$0xff]
    %v1138 = vld [vmem:[#allocation13 + $0xd8] sm:$0xff]
    %v1139 = vld [vmem:[#allocation13 + $0xe0] sm:$0xff]
    %v1140 = vld [vmem:[#allocation13 + $0xe8] sm:$0xff]
    %v1141 = vld [vmem:[#allocation13 + $0xf0] sm:$0xff]
    %v1142 = vld [vmem:[#allocation13 + $0xf8] sm:$0xff]
    %v1143 = vld [vmem:[#allocation13 + $0x100] sm:$0xff]
    %v1144 = vld [vmem:[#allocation13 + $0x108] sm:$0xff]
    %v1145 = vld [vmem:[#allocation13 + $0x110] sm:$0xff]
    %v1146 = vld [vmem:[#allocation13 + $0x118] sm:$0xff]
    %v1147 = vld [vmem:[#allocation13 + $0x120] sm:$0xff]
    %v1148 = vld [vmem:[#allocation13 + $0x128] sm:$0xff]
    %v1149 = vld [vmem:[#allocation13 + $0x130] sm:$0xff]
    %v1150 = vld [vmem:[#allocation13 + $0x138] sm:$0xff]
    %v1151 = vld [vmem:[#allocation13 + $0x140] sm:$0xff]
    %v1152 = vld [vmem:[#allocation13 + $0x148] sm:$0xff]
    %v1153 = vld [vmem:[#allocation13 + $0x150] sm:$0xff]
    %v1154 = vld [vmem:[#allocation13 + $0x158] sm:$0xff]
    %v1155 = vld [vmem:[#allocation13 + $0x160] sm:$0xff]
    %v1156 = vld [vmem:[#allocation13 + $0x168] sm:$0xff]
    %v1157 = vld [vmem:[#allocation13 + $0x170] sm:$0xff]
    %v1158 = vld [vmem:[#allocation13 + $0x178] sm:$0xff]
    %v1159 = vld [vmem:[#allocation13 + $0x180] sm:$0xff]
    %v1160 = vld [vmem:[#allocation13 + $0x188] sm:$0xff]
    %v1161 = vld [vmem:[#allocation13 + $0x190] sm:$0xff]
    %v1162 = vld [vmem:[#allocation13 + $0x198] sm:$0xff]
    %v1163 = vld [vmem:[#allocation13 + $0x1a0] sm:$0xff]
    %v1164 = vld [vmem:[#allocation13 + $0x1a8] sm:$0xff]
    %v1165 = vld [vmem:[#allocation13 + $0x1b0] sm:$0xff]
    %v1166 = vld [vmem:[#allocation13 + $0x1b8] sm:$0xff]
    %v1167 = vld [vmem:[#allocation13 + $0x1c0] sm:$0xff]
    %v1168 = vld [vmem:[#allocation13 + $0x1c8] sm:$0xff]
    %v1169 = vld [vmem:[#allocation13 + $0x1d0] sm:$0xff]
    %v1170 = vld [vmem:[#allocation13 + $0x1d8] sm:$0xff]
    %v1171 = vld [vmem:[#allocation13 + $0x1e0] sm:$0xff]
    %v1172 = vld [vmem:[#allocation13 + $0x1e8] sm:$0xff]
    %v1173 = vld [vmem:[#allocation13 + $0x1f0] sm:$0xff]
    %v1174 = vld [vmem:[#allocation13 + $0x1f8] sm:$0xff]
    %v1175 = vld [vmem:[#allocation13 + $0x200] sm:$0xff]
    %v1176 = vld [vmem:[#allocation13 + $0x208] sm:$0xff]
    %v1177 = vld [vmem:[#allocation13 + $0x210] sm:$0xff]
    %v1178 = vld [vmem:[#allocation13 + $0x218] sm:$0xff]
    %v1179 = vld [vmem:[#allocation13 + $0x220] sm:$0xff]
    %v1180 = vld [vmem:[#allocation13 + $0x228] sm:$0xff]
    %v1181 = vld [vmem:[#allocation13 + $0x230] sm:$0xff]
    %v1182 = vld [vmem:[#allocation13 + $0x238] sm:$0xff]
    %v1183 = vld [vmem:[#allocation13 + $0x240] sm:$0xff]
    %v1184 = vld [vmem:[#allocation13 + $0x248] sm:$0xff]
    %v1185 = vld [vmem:[#allocation13 + $0x250] sm:$0xff]
    %v1186 = vld [vmem:[#allocation13 + $0x258] sm:$0xff]
    %v1187 = vld [vmem:[#allocation13 + $0x260] sm:$0xff]
    %v1188 = vld [vmem:[#allocation13 + $0x268] sm:$0xff]
    %v1189 = vld [vmem:[#allocation13 + $0x270] sm:$0xff]
    %v1190 = vld [vmem:[#allocation13 + $0x278] sm:$0xff]
    %v1191 = vld [vmem:[#allocation13 + $0x280] sm:$0xff]
    %v1192 = vld [vmem:[#allocation13 + $0x288] sm:$0xff]
    %v1193 = vld [vmem:[#allocation13 + $0x290] sm:$0xff]
    %v1194 = vld [vmem:[#allocation13 + $0x298] sm:$0xff]
    %v1195 = vld [vmem:[#allocation13 + $0x2a0] sm:$0xff]
    %v1196 = vld [vmem:[#allocation13 + $0x2a8] sm:$0xff]
    %v1197 = vld [vmem:[#allocation13 + $0x2b0] sm:$0xff]
    %v1198 = vld [vmem:[#allocation13 + $0x2b8] sm:$0xff]
    %v1199 = vld [vmem:[#allocation13 + $0x2c0] sm:$0xff]
    %v1200 = vld [vmem:[#allocation13 + $0x2c8] sm:$0xff]
    %v1201 = vld [vmem:[#allocation13 + $0x2d0] sm:$0xff]
    %v1202 = vld [vmem:[#allocation13 + $0x2d8] sm:$0xff]
    %v1203 = vld [vmem:[#allocation13 + $0x2e0] sm:$0xff]
    %v1204 = vld [vmem:[#allocation13 + $0x2e8] sm:$0xff]
    %v1205 = vld [vmem:[#allocation13 + $0x2f0] sm:$0xff]
    %v1206 = vld [vmem:[#allocation13 + $0x2f8] sm:$0xff]
    %v1207 = vld [vmem:[#allocation13 + $0x300] sm:$0xff]
    %v1208 = vld [vmem:[#allocation13 + $0x308] sm:$0xff]
    %v1209 = vld [vmem:[#allocation13 + $0x310] sm:$0xff]
    %v1210 = vld [vmem:[#allocation13 + $0x318] sm:$0xff]
    %v1211 = vld [vmem:[#allocation13 + $0x320] sm:$0xff]
    %v1212 = vld [vmem:[#allocation13 + $0x328] sm:$0xff]
    %v1213 = vld [vmem:[#allocation13 + $0x330] sm:$0xff]
    %v1214 = vld [vmem:[#allocation13 + $0x338] sm:$0xff]
    %v1215 = vld [vmem:[#allocation13 + $0x340] sm:$0xff]
    %v1216 = vld [vmem:[#allocation13 + $0x348] sm:$0xff]
    %v1217 = vld [vmem:[#allocation13 + $0x350] sm:$0xff]
    %v1218 = vld [vmem:[#allocation13 + $0x358] sm:$0xff]
    %v1219 = vld [vmem:[#allocation13 + $0x360] sm:$0xff]
    %v1220 = vld [vmem:[#allocation13 + $0x368] sm:$0xff]
    %v1221 = vld [vmem:[#allocation13 + $0x370] sm:$0xff]
    %v1222 = vld [vmem:[#allocation13 + $0x378] sm:$0xff]
    %v1223 = vld [vmem:[#allocation13 + $0x380] sm:$0xff]
    %v1224 = vld [vmem:[#allocation13 + $0x388] sm:$0xff]
    %v1225 = vld [vmem:[#allocation13 + $0x390] sm:$0xff]
    %v1226 = vld [vmem:[#allocation13 + $0x398] sm:$0xff]
    %v1227 = vld [vmem:[#allocation13 + $0x3a0] sm:$0xff]
    %v1228 = vld [vmem:[#allocation13 + $0x3a8] sm:$0xff]
    %v1229 = vld [vmem:[#allocation13 + $0x3b0] sm:$0xff]
    %v1230 = vld [vmem:[#allocation13 + $0x3b8] sm:$0xff]
    %v1231 = vld [vmem:[#allocation13 + $0x3c0] sm:$0xff]
    %v1232 = vld [vmem:[#allocation13 + $0x3c8] sm:$0xff]
    %v1233 = vld [vmem:[#allocation13 + $0x3d0] sm:$0xff]
    %v1234 = vld [vmem:[#allocation13 + $0x3d8] sm:$0xff]
    %v1235 = vld [vmem:[#allocation13 + $0x3e0] sm:$0xff]
    %v1236 = vld [vmem:[#allocation13 + $0x3e8] sm:$0xff]
    %v1237 = vld [vmem:[#allocation13 + $0x3f0] sm:$0xff]
    %v1238 = vld [vmem:[#allocation13 + $0x3f8] sm:$0xff]
    %v1239 = vld [vmem:[#allocation13 + $0x400] sm:$0xff]
    %v1240 = vld [vmem:[#allocation13 + $0x408] sm:$0xff]
    %v1241 = vld [vmem:[#allocation13 + $0x410] sm:$0xff]
    %v1242 = vld [vmem:[#allocation13 + $0x418] sm:$0xff]
    %v1243 = vld [vmem:[#allocation13 + $0x420] sm:$0xff]
    %v1244 = vld [vmem:[#allocation13 + $0x428] sm:$0xff]
    %v1245 = vld [vmem:[#allocation13 + $0x430] sm:$0xff]
    %v1246 = vld [vmem:[#allocation13 + $0x438] sm:$0xff]
    %v1247 = vld [vmem:[#allocation13 + $0x440] sm:$0xff]
    %v1248 = vld [vmem:[#allocation13 + $0x448] sm:$0xff]
    %v1249 = vld [vmem:[#allocation13 + $0x450] sm:$0xff]
    %v1250 = vld [vmem:[#allocation13 + $0x458] sm:$0xff]
    %v1251 = vld [vmem:[#allocation13 + $0x460] sm:$0xff]
    %v1252 = vld [vmem:[#allocation13 + $0x468] sm:$0xff]
    %v1253 = vld [vmem:[#allocation13 + $0x470] sm:$0xff]
    %v1254 = vld [vmem:[#allocation13 + $0x478] sm:$0xff]
    %v1255 = vld [vmem:[#allocation13 + $0x480] sm:$0xff]
    %v1256 = vld [vmem:[#allocation13 + $0x488] sm:$0xff]
    %v1257 = vld [vmem:[#allocation13 + $0x490] sm:$0xff]
    %v1258 = vld [vmem:[#allocation13 + $0x498] sm:$0xff]
    %v1259 = vld [vmem:[#allocation13 + $0x4a0] sm:$0xff]
    %v1260 = vld [vmem:[#allocation13 + $0x4a8] sm:$0xff]
    %v1261 = vld [vmem:[#allocation13 + $0x4b0] sm:$0xff]
    %v1262 = vld [vmem:[#allocation13 + $0x4b8] sm:$0xff]
    %v1263 = vld [vmem:[#allocation13 + $0x4c0] sm:$0xff]
    %v1264 = vld [vmem:[#allocation13 + $0x4c8] sm:$0xff]
    %v1265 = vld [vmem:[#allocation13 + $0x4d0] sm:$0xff]
    %v1266 = vld [vmem:[#allocation13 + $0x4d8] sm:$0xff]
    %v1267 = vld [vmem:[#allocation13 + $0x4e0] sm:$0xff]
    %v1268 = vld [vmem:[#allocation13 + $0x4e8] sm:$0xff]
    %v1269 = vld [vmem:[#allocation13 + $0x4f0] sm:$0xff]
    %v1270 = vld [vmem:[#allocation13 + $0x4f8] sm:$0xff]
    %v1271 = vld [vmem:[#allocation13 + $0x500] sm:$0xff]
    %v1272 = vld [vmem:[#allocation13 + $0x508] sm:$0xff]
    %v1273 = vld [vmem:[#allocation13 + $0x510] sm:$0xff]
    %v1274 = vld [vmem:[#allocation13 + $0x518] sm:$0xff]
    %v1275 = vld [vmem:[#allocation13 + $0x520] sm:$0xff]
    %v1276 = vld [vmem:[#allocation13 + $0x528] sm:$0xff]
    %v1277 = vld [vmem:[#allocation13 + $0x530] sm:$0xff]
    %v1278 = vld [vmem:[#allocation13 + $0x538] sm:$0xff]
    %v1279 = vld [vmem:[#allocation13 + $0x540] sm:$0xff]
    %v1280 = vld [vmem:[#allocation13 + $0x548] sm:$0xff]
    %v1281 = vld [vmem:[#allocation13 + $0x550] sm:$0xff]
    %v1282 = vld [vmem:[#allocation13 + $0x558] sm:$0xff]
    %v1283 = vld [vmem:[#allocation13 + $0x560] sm:$0xff]
    %v1284 = vld [vmem:[#allocation13 + $0x568] sm:$0xff]
    %v1285 = vld [vmem:[#allocation13 + $0x570] sm:$0xff]
    %v1286 = vld [vmem:[#allocation13 + $0x578] sm:$0xff]
    %v1287 = vld [vmem:[#allocation13 + $0x580] sm:$0xff]
    %v1288 = vld [vmem:[#allocation13 + $0x588] sm:$0xff]
    %v1289 = vld [vmem:[#allocation13 + $0x590] sm:$0xff]
    %v1290 = vld [vmem:[#allocation13 + $0x598] sm:$0xff]
    %v1291 = vld [vmem:[#allocation13 + $0x5a0] sm:$0xff]
    %v1292 = vld [vmem:[#allocation13 + $0x5a8] sm:$0xff]
    %v1293 = vld [vmem:[#allocation13 + $0x5b0] sm:$0xff]
    %v1294 = vld [vmem:[#allocation13 + $0x5b8] sm:$0xff]
    %v1295 = vld [vmem:[#allocation13 + $0x5c0] sm:$0xff]
    %v1296 = vld [vmem:[#allocation13 + $0x5c8] sm:$0xff]
    %v1297 = vld [vmem:[#allocation13 + $0x5d0] sm:$0xff]
    %v1298 = vld [vmem:[#allocation13 + $0x5d8] sm:$0xff]
    %v1299 = vld [vmem:[#allocation13 + $0x5e0] sm:$0xff]
    %v1300 = vld [vmem:[#allocation13 + $0x5e8] sm:$0xff]
    %v1301 = vld [vmem:[#allocation13 + $0x5f0] sm:$0xff]
    %v1302 = vld [vmem:[#allocation13 + $0x5f8] sm:$0xff]
    %v1303 = vld [vmem:[#allocation13 + $0x600] sm:$0xff]
    %v1304 = vld [vmem:[#allocation13 + $0x608] sm:$0xff]
    %v1305 = vld [vmem:[#allocation13 + $0x610] sm:$0xff]
    %v1306 = vld [vmem:[#allocation13 + $0x618] sm:$0xff]
    %v1307 = vld [vmem:[#allocation13 + $0x620] sm:$0xff]
    %v1308 = vld [vmem:[#allocation13 + $0x628] sm:$0xff]
    %v1309 = vld [vmem:[#allocation13 + $0x630] sm:$0xff]
    %v1310 = vld [vmem:[#allocation13 + $0x638] sm:$0xff]
    %v1311 = vld [vmem:[#allocation13 + $0x640] sm:$0xff]
    %v1312 = vld [vmem:[#allocation13 + $0x648] sm:$0xff]
    %v1313 = vld [vmem:[#allocation13 + $0x650] sm:$0xff]
    %v1314 = vld [vmem:[#allocation13 + $0x658] sm:$0xff]
    %v1315 = vld [vmem:[#allocation13 + $0x660] sm:$0xff]
    %v1316 = vld [vmem:[#allocation13 + $0x668] sm:$0xff]
    %v1317 = vld [vmem:[#allocation13 + $0x670] sm:$0xff]
    %v1318 = vld [vmem:[#allocation13 + $0x678] sm:$0xff]
    %v1319 = vld [vmem:[#allocation13 + $0x680] sm:$0xff]
    %v1320 = vld [vmem:[#allocation13 + $0x688] sm:$0xff]
    %v1321 = vld [vmem:[#allocation13 + $0x690] sm:$0xff]
    %v1322 = vld [vmem:[#allocation13 + $0x698] sm:$0xff]
    %v1323 = vld [vmem:[#allocation13 + $0x6a0] sm:$0xff]
    %v1324 = vld [vmem:[#allocation13 + $0x6a8] sm:$0xff]
    %v1325 = vld [vmem:[#allocation13 + $0x6b0] sm:$0xff]
    %v1326 = vld [vmem:[#allocation13 + $0x6b8] sm:$0xff]
    %v1327 = vld [vmem:[#allocation13 + $0x6c0] sm:$0xff]
    %v1328 = vld [vmem:[#allocation13 + $0x6c8] sm:$0xff]
    %v1329 = vld [vmem:[#allocation13 + $0x6d0] sm:$0xff]
    %v1330 = vld [vmem:[#allocation13 + $0x6d8] sm:$0xff]
    %v1331 = vld [vmem:[#allocation13 + $0x6e0] sm:$0xff]
    %v1332 = vld [vmem:[#allocation13 + $0x6e8] sm:$0xff]
    %v1333 = vld [vmem:[#allocation13 + $0x6f0] sm:$0xff]
    %v1334 = vld [vmem:[#allocation13 + $0x6f8] sm:$0xff]
    %v1335 = vld [vmem:[#allocation13 + $0x700] sm:$0xff]
    %v1336 = vld [vmem:[#allocation13 + $0x708] sm:$0xff]
    %v1337 = vld [vmem:[#allocation13 + $0x710] sm:$0xff]
    %v1338 = vld [vmem:[#allocation13 + $0x718] sm:$0xff]
    %v1339 = vld [vmem:[#allocation13 + $0x720] sm:$0xff]
    %v1340 = vld [vmem:[#allocation13 + $0x728] sm:$0xff]
    %v1341 = vld [vmem:[#allocation13 + $0x730] sm:$0xff]
    %v1342 = vld [vmem:[#allocation13 + $0x738] sm:$0xff]
    %v1343 = vld [vmem:[#allocation13 + $0x740] sm:$0xff]
    %v1344 = vld [vmem:[#allocation13 + $0x748] sm:$0xff]
    %v1345 = vld [vmem:[#allocation13 + $0x750] sm:$0xff]
    %v1346 = vld [vmem:[#allocation13 + $0x758] sm:$0xff]
    %v1347 = vld [vmem:[#allocation13 + $0x760] sm:$0xff]
    %v1348 = vld [vmem:[#allocation13 + $0x768] sm:$0xff]
    %v1349 = vld [vmem:[#allocation13 + $0x770] sm:$0xff]
    %v1350 = vld [vmem:[#allocation13 + $0x778] sm:$0xff]
    %v1351 = vld [vmem:[#allocation13 + $0x780] sm:$0xff]
    %v1352 = vld [vmem:[#allocation13 + $0x788] sm:$0xff]
    %v1353 = vld [vmem:[#allocation13 + $0x790] sm:$0xff]
    %v1354 = vld [vmem:[#allocation13 + $0x798] sm:$0xff]
    %v1355 = vld [vmem:[#allocation13 + $0x7a0] sm:$0xff]
    %v1356 = vld [vmem:[#allocation13 + $0x7a8] sm:$0xff]
    %v1357 = vld [vmem:[#allocation13 + $0x7b0] sm:$0xff]
    %v1358 = vld [vmem:[#allocation13 + $0x7b8] sm:$0xff]
    %v1359 = vld [vmem:[#allocation13 + $0x7c0] sm:$0xff]
    %v1360 = vld [vmem:[#allocation13 + $0x7c8] sm:$0xff]
    %v1361 = vld [vmem:[#allocation13 + $0x7d0] sm:$0xff]
    %v1362 = vld [vmem:[#allocation13 + $0x7d8] sm:$0xff]
    %v1363 = vld [vmem:[#allocation13 + $0x7e0] sm:$0xff]
    %v1364 = vld [vmem:[#allocation13 + $0x7e8] sm:$0xff]
    %v1365 = vld [vmem:[#allocation13 + $0x7f0] sm:$0xff]
    %v1366 = vld [vmem:[#allocation13 + $0x7f8] sm:$0xff]
    %v1367 = vld [vmem:[#allocation13 + $0x800] sm:$0xff]
    %v1368 = vld [vmem:[#allocation13 + $0x808] sm:$0xff]
    %v1369 = vld [vmem:[#allocation13 + $0x810] sm:$0xff]
    %v1370 = vld [vmem:[#allocation13 + $0x818] sm:$0xff]
    %v1371 = vld [vmem:[#allocation13 + $0x820] sm:$0xff]
    %v1372 = vld [vmem:[#allocation13 + $0x828] sm:$0xff]
    %v1373 = vld [vmem:[#allocation13 + $0x830] sm:$0xff]
    %v1374 = vld [vmem:[#allocation13 + $0x838] sm:$0xff]
    %v1375 = vld [vmem:[#allocation13 + $0x840] sm:$0xff]
    %v1376 = vld [vmem:[#allocation13 + $0x848] sm:$0xff]
    %v1377 = vld [vmem:[#allocation13 + $0x850] sm:$0xff]
    %v1378 = vld [vmem:[#allocation13 + $0x858] sm:$0xff]
    %v1379 = vld [vmem:[#allocation13 + $0x860] sm:$0xff]
    %v1380 = vld [vmem:[#allocation13 + $0x868] sm:$0xff]
    %v1381 = vld [vmem:[#allocation13 + $0x870] sm:$0xff]
    %v1382 = vld [vmem:[#allocation13 + $0x878] sm:$0xff]
    %v1383 = vld [vmem:[#allocation13 + $0x880] sm:$0xff]
    %v1384 = vld [vmem:[#allocation13 + $0x888] sm:$0xff]
    %v1385 = vld [vmem:[#allocation13 + $0x890] sm:$0xff]
    %v1386 = vld [vmem:[#allocation13 + $0x898] sm:$0xff]
    %v1387 = vld [vmem:[#allocation13 + $0x8a0] sm:$0xff]
    %v1388 = vld [vmem:[#allocation13 + $0x8a8] sm:$0xff]
    %v1389 = vld [vmem:[#allocation13 + $0x8b0] sm:$0xff]
    %v1390 = vld [vmem:[#allocation13 + $0x8b8] sm:$0xff]
    %v1391 = vld [vmem:[#allocation13 + $0x8c0] sm:$0xff]
    %v1392 = vld [vmem:[#allocation13 + $0x8c8] sm:$0xff]
    %v1393 = vld [vmem:[#allocation13 + $0x8d0] sm:$0xff]
    %v1394 = vld [vmem:[#allocation13 + $0x8d8] sm:$0xff]
    %v1395 = vld [vmem:[#allocation13 + $0x8e0] sm:$0xff]
    %v1396 = vld [vmem:[#allocation13 + $0x8e8] sm:$0xff]
    %v1397 = vld [vmem:[#allocation13 + $0x8f0] sm:$0xff]
    %v1398 = vld [vmem:[#allocation13 + $0x8f8] sm:$0xff]
    %v1399 = vld [vmem:[#allocation13 + $0x900] sm:$0xff]
    %v1400 = vld [vmem:[#allocation13 + $0x908] sm:$0xff]
    %v1401 = vld [vmem:[#allocation13 + $0x910] sm:$0xff]
    %v1402 = vld [vmem:[#allocation13 + $0x918] sm:$0xff]
    %v1403 = vld [vmem:[#allocation13 + $0x920] sm:$0xff]
    %v1404 = vld [vmem:[#allocation13 + $0x928] sm:$0xff]
    %v1405 = vld [vmem:[#allocation13 + $0x930] sm:$0xff]
    %v1406 = vld [vmem:[#allocation13 + $0x938] sm:$0xff]
    %v1407 = vld [vmem:[#allocation13 + $0x940] sm:$0xff]
    %v1408 = vld [vmem:[#allocation13 + $0x948] sm:$0xff]
    %v1409 = vld [vmem:[#allocation13 + $0x950] sm:$0xff]
    %v1410 = vld [vmem:[#allocation13 + $0x958] sm:$0xff]
    %v1411 = vld [vmem:[#allocation13 + $0x960] sm:$0xff]
    %v1412 = vld [vmem:[#allocation13 + $0x968] sm:$0xff]
    %v1413 = vld [vmem:[#allocation13 + $0x970] sm:$0xff]
    %v1414 = vld [vmem:[#allocation13 + $0x978] sm:$0xff]
    %v1415 = vld [vmem:[#allocation13 + $0x980] sm:$0xff]
    %v1416 = vld [vmem:[#allocation13 + $0x988] sm:$0xff]
    %v1417 = vld [vmem:[#allocation13 + $0x990] sm:$0xff]
    %v1418 = vld [vmem:[#allocation13 + $0x998] sm:$0xff]
    %v1419 = vld [vmem:[#allocation13 + $0x9a0] sm:$0xff]
    %v1420 = vld [vmem:[#allocation13 + $0x9a8] sm:$0xff]
    %v1421 = vld [vmem:[#allocation13 + $0x9b0] sm:$0xff]
    %v1422 = vld [vmem:[#allocation13 + $0x9b8] sm:$0xff]
    %v1423 = vld [vmem:[#allocation13 + $0x9c0] sm:$0xff]
    %v1424 = vld [vmem:[#allocation13 + $0x9c8] sm:$0xff]
    %v1425 = vld [vmem:[#allocation13 + $0x9d0] sm:$0xff]
    %v1426 = vld [vmem:[#allocation13 + $0x9d8] sm:$0xff]
    %v1427 = vld [vmem:[#allocation13 + $0x9e0] sm:$0xff]
    %v1428 = vld [vmem:[#allocation13 + $0x9e8] sm:$0xff]
    %v1429 = vld [vmem:[#allocation13 + $0x9f0] sm:$0xff]
    %v1430 = vld [vmem:[#allocation13 + $0x9f8] sm:$0xff]
    %v1751 = vunpack.c.l.b16 %v1111
    %v1752 = vunpack.c.h.b16 %v1111
    %v1753 = vunpack.c.l.b16 %v1112
    %v1754 = vunpack.c.h.b16 %v1112
    %v1755 = vunpack.c.l.b16 %v1113
    %v1756 = vunpack.c.h.b16 %v1113
    %v1757 = vunpack.c.l.b16 %v1114
    %v1758 = vunpack.c.h.b16 %v1114
    %v1759 = vunpack.c.l.b16 %v1115
    %v1760 = vunpack.c.h.b16 %v1115
    %v1761 = vunpack.c.l.b16 %v1116
    %v1762 = vunpack.c.h.b16 %v1116
    %v1763 = vunpack.c.l.b16 %v1117
    %v1764 = vunpack.c.h.b16 %v1117
    %v1765 = vunpack.c.l.b16 %v1118
    %v1766 = vunpack.c.h.b16 %v1118
    %v1767 = vunpack.c.l.b16 %v1119
    %v1768 = vunpack.c.h.b16 %v1119
    %v1769 = vunpack.c.l.b16 %v1120
    %v1770 = vunpack.c.h.b16 %v1120
    %v1771 = vunpack.c.l.b16 %v1121
    %v1772 = vunpack.c.h.b16 %v1121
    %v1773 = vunpack.c.l.b16 %v1122
    %v1774 = vunpack.c.h.b16 %v1122
    %v1775 = vunpack.c.l.b16 %v1123
    %v1776 = vunpack.c.h.b16 %v1123
    %v1777 = vunpack.c.l.b16 %v1124
    %v1778 = vunpack.c.h.b16 %v1124
    %v1779 = vunpack.c.l.b16 %v1125
    %v1780 = vunpack.c.h.b16 %v1125
    %v1781 = vunpack.c.l.b16 %v1126
    %v1782 = vunpack.c.h.b16 %v1126
    %v1783 = vunpack.c.l.b16 %v1127
    %v1784 = vunpack.c.h.b16 %v1127
    %v1785 = vunpack.c.l.b16 %v1128
    %v1786 = vunpack.c.h.b16 %v1128
    %v1787 = vunpack.c.l.b16 %v1129
    %v1788 = vunpack.c.h.b16 %v1129
    %v1789 = vunpack.c.l.b16 %v1130
    %v1790 = vunpack.c.h.b16 %v1130
    %v1791 = vunpack.c.l.b16 %v1131
    %v1792 = vunpack.c.h.b16 %v1131
    %v1793 = vunpack.c.l.b16 %v1132
    %v1794 = vunpack.c.h.b16 %v1132
    %v1795 = vunpack.c.l.b16 %v1133
    %v1796 = vunpack.c.h.b16 %v1133
    %v1797 = vunpack.c.l.b16 %v1134
    %v1798 = vunpack.c.h.b16 %v1134
    %v1799 = vunpack.c.l.b16 %v1135
    %v1800 = vunpack.c.h.b16 %v1135
    %v1801 = vunpack.c.l.b16 %v1136
    %v1802 = vunpack.c.h.b16 %v1136
    %v1803 = vunpack.c.l.b16 %v1137
    %v1804 = vunpack.c.h.b16 %v1137
    %v1805 = vunpack.c.l.b16 %v1138
    %v1806 = vunpack.c.h.b16 %v1138
    %v1807 = vunpack.c.l.b16 %v1139
    %v1808 = vunpack.c.h.b16 %v1139
    %v1809 = vunpack.c.l.b16 %v1140
    %v1810 = vunpack.c.h.b16 %v1140
    %v1811 = vunpack.c.l.b16 %v1141
    %v1812 = vunpack.c.h.b16 %v1141
    %v1813 = vunpack.c.l.b16 %v1142
    %v1814 = vunpack.c.h.b16 %v1142
    %v1815 = vunpack.c.l.b16 %v1143
    %v1816 = vunpack.c.h.b16 %v1143
    %v1817 = vunpack.c.l.b16 %v1144
    %v1818 = vunpack.c.h.b16 %v1144
    %v1819 = vunpack.c.l.b16 %v1145
    %v1820 = vunpack.c.h.b16 %v1145
    %v1821 = vunpack.c.l.b16 %v1146
    %v1822 = vunpack.c.h.b16 %v1146
    %v1823 = vunpack.c.l.b16 %v1147
    %v1824 = vunpack.c.h.b16 %v1147
    %v1825 = vunpack.c.l.b16 %v1148
    %v1826 = vunpack.c.h.b16 %v1148
    %v1827 = vunpack.c.l.b16 %v1149
    %v1828 = vunpack.c.h.b16 %v1149
    %v1829 = vunpack.c.l.b16 %v1150
    %v1830 = vunpack.c.h.b16 %v1150
    %v1831 = vunpack.c.l.b16 %v1151
    %v1832 = vunpack.c.h.b16 %v1151
    %v1833 = vunpack.c.l.b16 %v1152
    %v1834 = vunpack.c.h.b16 %v1152
    %v1835 = vunpack.c.l.b16 %v1153
    %v1836 = vunpack.c.h.b16 %v1153
    %v1837 = vunpack.c.l.b16 %v1154
    %v1838 = vunpack.c.h.b16 %v1154
    %v1839 = vunpack.c.l.b16 %v1155
    %v1840 = vunpack.c.h.b16 %v1155
    %v1841 = vunpack.c.l.b16 %v1156
    %v1842 = vunpack.c.h.b16 %v1156
    %v1843 = vunpack.c.l.b16 %v1157
    %v1844 = vunpack.c.h.b16 %v1157
    %v1845 = vunpack.c.l.b16 %v1158
    %v1846 = vunpack.c.h.b16 %v1158
    %v1847 = vunpack.c.l.b16 %v1159
    %v1848 = vunpack.c.h.b16 %v1159
    %v1849 = vunpack.c.l.b16 %v1160
    %v1850 = vunpack.c.h.b16 %v1160
    %v1851 = vunpack.c.l.b16 %v1161
    %v1852 = vunpack.c.h.b16 %v1161
    %v1853 = vunpack.c.l.b16 %v1162
    %v1854 = vunpack.c.h.b16 %v1162
    %v1855 = vunpack.c.l.b16 %v1163
    %v1856 = vunpack.c.h.b16 %v1163
    %v1857 = vunpack.c.l.b16 %v1164
    %v1858 = vunpack.c.h.b16 %v1164
    %v1859 = vunpack.c.l.b16 %v1165
    %v1860 = vunpack.c.h.b16 %v1165
    %v1861 = vunpack.c.l.b16 %v1166
    %v1862 = vunpack.c.h.b16 %v1166
    %v1863 = vunpack.c.l.b16 %v1167
    %v1864 = vunpack.c.h.b16 %v1167
    %v1865 = vunpack.c.l.b16 %v1168
    %v1866 = vunpack.c.h.b16 %v1168
    %v1867 = vunpack.c.l.b16 %v1169
    %v1868 = vunpack.c.h.b16 %v1169
    %v1869 = vunpack.c.l.b16 %v1170
    %v1870 = vunpack.c.h.b16 %v1170
    %v1871 = vunpack.c.l.b16 %v1171
    %v1872 = vunpack.c.h.b16 %v1171
    %v1873 = vunpack.c.l.b16 %v1172
    %v1874 = vunpack.c.h.b16 %v1172
    %v1875 = vunpack.c.l.b16 %v1173
    %v1876 = vunpack.c.h.b16 %v1173
    %v1877 = vunpack.c.l.b16 %v1174
    %v1878 = vunpack.c.h.b16 %v1174
    %v1879 = vunpack.c.l.b16 %v1175
    %v1880 = vunpack.c.h.b16 %v1175
    %v1881 = vunpack.c.l.b16 %v1176
    %v1882 = vunpack.c.h.b16 %v1176
    %v1883 = vunpack.c.l.b16 %v1177
    %v1884 = vunpack.c.h.b16 %v1177
    %v1885 = vunpack.c.l.b16 %v1178
    %v1886 = vunpack.c.h.b16 %v1178
    %v1887 = vunpack.c.l.b16 %v1179
    %v1888 = vunpack.c.h.b16 %v1179
    %v1889 = vunpack.c.l.b16 %v1180
    %v1890 = vunpack.c.h.b16 %v1180
    %v1891 = vunpack.c.l.b16 %v1181
    %v1892 = vunpack.c.h.b16 %v1181
    %v1893 = vunpack.c.l.b16 %v1182
    %v1894 = vunpack.c.h.b16 %v1182
    %v1895 = vunpack.c.l.b16 %v1183
    %v1896 = vunpack.c.h.b16 %v1183
    %v1897 = vunpack.c.l.b16 %v1184
    %v1898 = vunpack.c.h.b16 %v1184
    %v1899 = vunpack.c.l.b16 %v1185
    %v1900 = vunpack.c.h.b16 %v1185
    %v1901 = vunpack.c.l.b16 %v1186
    %v1902 = vunpack.c.h.b16 %v1186
    %v1903 = vunpack.c.l.b16 %v1187
    %v1904 = vunpack.c.h.b16 %v1187
    %v1905 = vunpack.c.l.b16 %v1188
    %v1906 = vunpack.c.h.b16 %v1188
    %v1907 = vunpack.c.l.b16 %v1189
    %v1908 = vunpack.c.h.b16 %v1189
    %v1909 = vunpack.c.l.b16 %v1190
    %v1910 = vunpack.c.h.b16 %v1190
    %v1911 = vunpack.c.l.b16 %v1191
    %v1912 = vunpack.c.h.b16 %v1191
    %v1913 = vunpack.c.l.b16 %v1192
    %v1914 = vunpack.c.h.b16 %v1192
    %v1915 = vunpack.c.l.b16 %v1193
    %v1916 = vunpack.c.h.b16 %v1193
    %v1917 = vunpack.c.l.b16 %v1194
    %v1918 = vunpack.c.h.b16 %v1194
    %v1919 = vunpack.c.l.b16 %v1195
    %v1920 = vunpack.c.h.b16 %v1195
    %v1921 = vunpack.c.l.b16 %v1196
    %v1922 = vunpack.c.h.b16 %v1196
    %v1923 = vunpack.c.l.b16 %v1197
    %v1924 = vunpack.c.h.b16 %v1197
    %v1925 = vunpack.c.l.b16 %v1198
    %v1926 = vunpack.c.h.b16 %v1198
    %v1927 = vunpack.c.l.b16 %v1199
    %v1928 = vunpack.c.h.b16 %v1199
    %v1929 = vunpack.c.l.b16 %v1200
    %v1930 = vunpack.c.h.b16 %v1200
    %v1931 = vunpack.c.l.b16 %v1201
    %v1932 = vunpack.c.h.b16 %v1201
    %v1933 = vunpack.c.l.b16 %v1202
    %v1934 = vunpack.c.h.b16 %v1202
    %v1935 = vunpack.c.l.b16 %v1203
    %v1936 = vunpack.c.h.b16 %v1203
    %v1937 = vunpack.c.l.b16 %v1204
    %v1938 = vunpack.c.h.b16 %v1204
    %v1939 = vunpack.c.l.b16 %v1205
    %v1940 = vunpack.c.h.b16 %v1205
    %v1941 = vunpack.c.l.b16 %v1206
    %v1942 = vunpack.c.h.b16 %v1206
    %v1943 = vunpack.c.l.b16 %v1207
    %v1944 = vunpack.c.h.b16 %v1207
    %v1945 = vunpack.c.l.b16 %v1208
    %v1946 = vunpack.c.h.b16 %v1208
    %v1947 = vunpack.c.l.b16 %v1209
    %v1948 = vunpack.c.h.b16 %v1209
    %v1949 = vunpack.c.l.b16 %v1210
    %v1950 = vunpack.c.h.b16 %v1210
    %v1951 = vunpack.c.l.b16 %v1211
    %v1952 = vunpack.c.h.b16 %v1211
    %v1953 = vunpack.c.l.b16 %v1212
    %v1954 = vunpack.c.h.b16 %v1212
    %v1955 = vunpack.c.l.b16 %v1213
    %v1956 = vunpack.c.h.b16 %v1213
    %v1957 = vunpack.c.l.b16 %v1214
    %v1958 = vunpack.c.h.b16 %v1214
    %v1959 = vunpack.c.l.b16 %v1215
    %v1960 = vunpack.c.h.b16 %v1215
    %v1961 = vunpack.c.l.b16 %v1216
    %v1962 = vunpack.c.h.b16 %v1216
    %v1963 = vunpack.c.l.b16 %v1217
    %v1964 = vunpack.c.h.b16 %v1217
    %v1965 = vunpack.c.l.b16 %v1218
    %v1966 = vunpack.c.h.b16 %v1218
    %v1967 = vunpack.c.l.b16 %v1219
    %v1968 = vunpack.c.h.b16 %v1219
    %v1969 = vunpack.c.l.b16 %v1220
    %v1970 = vunpack.c.h.b16 %v1220
    %v1971 = vunpack.c.l.b16 %v1221
    %v1972 = vunpack.c.h.b16 %v1221
    %v1973 = vunpack.c.l.b16 %v1222
    %v1974 = vunpack.c.h.b16 %v1222
    %v1975 = vunpack.c.l.b16 %v1223
    %v1976 = vunpack.c.h.b16 %v1223
    %v1977 = vunpack.c.l.b16 %v1224
    %v1978 = vunpack.c.h.b16 %v1224
    %v1979 = vunpack.c.l.b16 %v1225
    %v1980 = vunpack.c.h.b16 %v1225
    %v1981 = vunpack.c.l.b16 %v1226
    %v1982 = vunpack.c.h.b16 %v1226
    %v1983 = vunpack.c.l.b16 %v1227
    %v1984 = vunpack.c.h.b16 %v1227
    %v1985 = vunpack.c.l.b16 %v1228
    %v1986 = vunpack.c.h.b16 %v1228
    %v1987 = vunpack.c.l.b16 %v1229
    %v1988 = vunpack.c.h.b16 %v1229
    %v1989 = vunpack.c.l.b16 %v1230
    %v1990 = vunpack.c.h.b16 %v1230
    %v1991 = vunpack.c.l.b16 %v1231
    %v1992 = vunpack.c.h.b16 %v1231
    %v1993 = vunpack.c.l.b16 %v1232
    %v1994 = vunpack.c.h.b16 %v1232
    %v1995 = vunpack.c.l.b16 %v1233
    %v1996 = vunpack.c.h.b16 %v1233
    %v1997 = vunpack.c.l.b16 %v1234
    %v1998 = vunpack.c.h.b16 %v1234
    %v1999 = vunpack.c.l.b16 %v1235
    %v2000 = vunpack.c.h.b16 %v1235
    %v2001 = vunpack.c.l.b16 %v1236
    %v2002 = vunpack.c.h.b16 %v1236
    %v2003 = vunpack.c.l.b16 %v1237
    %v2004 = vunpack.c.h.b16 %v1237
    %v2005 = vunpack.c.l.b16 %v1238
    %v2006 = vunpack.c.h.b16 %v1238
    %v2007 = vunpack.c.l.b16 %v1239
    %v2008 = vunpack.c.h.b16 %v1239
    %v2009 = vunpack.c.l.b16 %v1240
    %v2010 = vunpack.c.h.b16 %v1240
    %v2011 = vunpack.c.l.b16 %v1241
    %v2012 = vunpack.c.h.b16 %v1241
    %v2013 = vunpack.c.l.b16 %v1242
    %v2014 = vunpack.c.h.b16 %v1242
    %v2015 = vunpack.c.l.b16 %v1243
    %v2016 = vunpack.c.h.b16 %v1243
    %v2017 = vunpack.c.l.b16 %v1244
    %v2018 = vunpack.c.h.b16 %v1244
    %v2019 = vunpack.c.l.b16 %v1245
    %v2020 = vunpack.c.h.b16 %v1245
    %v2021 = vunpack.c.l.b16 %v1246
    %v2022 = vunpack.c.h.b16 %v1246
    %v2023 = vunpack.c.l.b16 %v1247
    %v2024 = vunpack.c.h.b16 %v1247
    %v2025 = vunpack.c.l.b16 %v1248
    %v2026 = vunpack.c.h.b16 %v1248
    %v2027 = vunpack.c.l.b16 %v1249
    %v2028 = vunpack.c.h.b16 %v1249
    %v2029 = vunpack.c.l.b16 %v1250
    %v2030 = vunpack.c.h.b16 %v1250
    %v2031 = vunpack.c.l.b16 %v1251
    %v2032 = vunpack.c.h.b16 %v1251
    %v2033 = vunpack.c.l.b16 %v1252
    %v2034 = vunpack.c.h.b16 %v1252
    %v2035 = vunpack.c.l.b16 %v1253
    %v2036 = vunpack.c.h.b16 %v1253
    %v2037 = vunpack.c.l.b16 %v1254
    %v2038 = vunpack.c.h.b16 %v1254
    %v2039 = vunpack.c.l.b16 %v1255
    %v2040 = vunpack.c.h.b16 %v1255
    %v2041 = vunpack.c.l.b16 %v1256
    %v2042 = vunpack.c.h.b16 %v1256
    %v2043 = vunpack.c.l.b16 %v1257
    %v2044 = vunpack.c.h.b16 %v1257
    %v2045 = vunpack.c.l.b16 %v1258
    %v2046 = vunpack.c.h.b16 %v1258
    %v2047 = vunpack.c.l.b16 %v1259
    %v2048 = vunpack.c.h.b16 %v1259
    %v2049 = vunpack.c.l.b16 %v1260
    %v2050 = vunpack.c.h.b16 %v1260
    %v2051 = vunpack.c.l.b16 %v1261
    %v2052 = vunpack.c.h.b16 %v1261
    %v2053 = vunpack.c.l.b16 %v1262
    %v2054 = vunpack.c.h.b16 %v1262
    %v2055 = vunpack.c.l.b16 %v1263
    %v2056 = vunpack.c.h.b16 %v1263
    %v2057 = vunpack.c.l.b16 %v1264
    %v2058 = vunpack.c.h.b16 %v1264
    %v2059 = vunpack.c.l.b16 %v1265
    %v2060 = vunpack.c.h.b16 %v1265
    %v2061 = vunpack.c.l.b16 %v1266
    %v2062 = vunpack.c.h.b16 %v1266
    %v2063 = vunpack.c.l.b16 %v1267
    %v2064 = vunpack.c.h.b16 %v1267
    %v2065 = vunpack.c.l.b16 %v1268
    %v2066 = vunpack.c.h.b16 %v1268
    %v2067 = vunpack.c.l.b16 %v1269
    %v2068 = vunpack.c.h.b16 %v1269
    %v2069 = vunpack.c.l.b16 %v1270
    %v2070 = vunpack.c.h.b16 %v1270
    %v2071 = vunpack.c.l.b16 %v1271
    %v2072 = vunpack.c.h.b16 %v1271
    %v2073 = vunpack.c.l.b16 %v1272
    %v2074 = vunpack.c.h.b16 %v1272
    %v2075 = vunpack.c.l.b16 %v1273
    %v2076 = vunpack.c.h.b16 %v1273
    %v2077 = vunpack.c.l.b16 %v1274
    %v2078 = vunpack.c.h.b16 %v1274
    %v2079 = vunpack.c.l.b16 %v1275
    %v2080 = vunpack.c.h.b16 %v1275
    %v2081 = vunpack.c.l.b16 %v1276
    %v2082 = vunpack.c.h.b16 %v1276
    %v2083 = vunpack.c.l.b16 %v1277
    %v2084 = vunpack.c.h.b16 %v1277
    %v2085 = vunpack.c.l.b16 %v1278
    %v2086 = vunpack.c.h.b16 %v1278
    %v2087 = vunpack.c.l.b16 %v1279
    %v2088 = vunpack.c.h.b16 %v1279
    %v2089 = vunpack.c.l.b16 %v1280
    %v2090 = vunpack.c.h.b16 %v1280
    %v2091 = vunpack.c.l.b16 %v1281
    %v2092 = vunpack.c.h.b16 %v1281
    %v2093 = vunpack.c.l.b16 %v1282
    %v2094 = vunpack.c.h.b16 %v1282
    %v2095 = vunpack.c.l.b16 %v1283
    %v2096 = vunpack.c.h.b16 %v1283
    %v2097 = vunpack.c.l.b16 %v1284
    %v2098 = vunpack.c.h.b16 %v1284
    %v2099 = vunpack.c.l.b16 %v1285
    %v2100 = vunpack.c.h.b16 %v1285
    %v2101 = vunpack.c.l.b16 %v1286
    %v2102 = vunpack.c.h.b16 %v1286
    %v2103 = vunpack.c.l.b16 %v1287
    %v2104 = vunpack.c.h.b16 %v1287
    %v2105 = vunpack.c.l.b16 %v1288
    %v2106 = vunpack.c.h.b16 %v1288
    %v2107 = vunpack.c.l.b16 %v1289
    %v2108 = vunpack.c.h.b16 %v1289
    %v2109 = vunpack.c.l.b16 %v1290
    %v2110 = vunpack.c.h.b16 %v1290
    %v2111 = vunpack.c.l.b16 %v1291
    %v2112 = vunpack.c.h.b16 %v1291
    %v2113 = vunpack.c.l.b16 %v1292
    %v2114 = vunpack.c.h.b16 %v1292
    %v2115 = vunpack.c.l.b16 %v1293
    %v2116 = vunpack.c.h.b16 %v1293
    %v2117 = vunpack.c.l.b16 %v1294
    %v2118 = vunpack.c.h.b16 %v1294
    %v2119 = vunpack.c.l.b16 %v1295
    %v2120 = vunpack.c.h.b16 %v1295
    %v2121 = vunpack.c.l.b16 %v1296
    %v2122 = vunpack.c.h.b16 %v1296
    %v2123 = vunpack.c.l.b16 %v1297
    %v2124 = vunpack.c.h.b16 %v1297
    %v2125 = vunpack.c.l.b16 %v1298
    %v2126 = vunpack.c.h.b16 %v1298
    %v2127 = vunpack.c.l.b16 %v1299
    %v2128 = vunpack.c.h.b16 %v1299
    %v2129 = vunpack.c.l.b16 %v1300
    %v2130 = vunpack.c.h.b16 %v1300
    %v2131 = vunpack.c.l.b16 %v1301
    %v2132 = vunpack.c.h.b16 %v1301
    %v2133 = vunpack.c.l.b16 %v1302
    %v2134 = vunpack.c.h.b16 %v1302
    %v2135 = vunpack.c.l.b16 %v1303
    %v2136 = vunpack.c.h.b16 %v1303
    %v2137 = vunpack.c.l.b16 %v1304
    %v2138 = vunpack.c.h.b16 %v1304
    %v2139 = vunpack.c.l.b16 %v1305
    %v2140 = vunpack.c.h.b16 %v1305
    %v2141 = vunpack.c.l.b16 %v1306
    %v2142 = vunpack.c.h.b16 %v1306
    %v2143 = vunpack.c.l.b16 %v1307
    %v2144 = vunpack.c.h.b16 %v1307
    %v2145 = vunpack.c.l.b16 %v1308
    %v2146 = vunpack.c.h.b16 %v1308
    %v2147 = vunpack.c.l.b16 %v1309
    %v2148 = vunpack.c.h.b16 %v1309
    %v2149 = vunpack.c.l.b16 %v1310
    %v2150 = vunpack.c.h.b16 %v1310
    %v2151 = vunpack.c.l.b16 %v1311
    %v2152 = vunpack.c.h.b16 %v1311
    %v2153 = vunpack.c.l.b16 %v1312
    %v2154 = vunpack.c.h.b16 %v1312
    %v2155 = vunpack.c.l.b16 %v1313
    %v2156 = vunpack.c.h.b16 %v1313
    %v2157 = vunpack.c.l.b16 %v1314
    %v2158 = vunpack.c.h.b16 %v1314
    %v2159 = vunpack.c.l.b16 %v1315
    %v2160 = vunpack.c.h.b16 %v1315
    %v2161 = vunpack.c.l.b16 %v1316
    %v2162 = vunpack.c.h.b16 %v1316
    %v2163 = vunpack.c.l.b16 %v1317
    %v2164 = vunpack.c.h.b16 %v1317
    %v2165 = vunpack.c.l.b16 %v1318
    %v2166 = vunpack.c.h.b16 %v1318
    %v2167 = vunpack.c.l.b16 %v1319
    %v2168 = vunpack.c.h.b16 %v1319
    %v2169 = vunpack.c.l.b16 %v1320
    %v2170 = vunpack.c.h.b16 %v1320
    %v2171 = vunpack.c.l.b16 %v1321
    %v2172 = vunpack.c.h.b16 %v1321
    %v2173 = vunpack.c.l.b16 %v1322
    %v2174 = vunpack.c.h.b16 %v1322
    %v2175 = vunpack.c.l.b16 %v1323
    %v2176 = vunpack.c.h.b16 %v1323
    %v2177 = vunpack.c.l.b16 %v1324
    %v2178 = vunpack.c.h.b16 %v1324
    %v2179 = vunpack.c.l.b16 %v1325
    %v2180 = vunpack.c.h.b16 %v1325
    %v2181 = vunpack.c.l.b16 %v1326
    %v2182 = vunpack.c.h.b16 %v1326
    %v2183 = vunpack.c.l.b16 %v1327
    %v2184 = vunpack.c.h.b16 %v1327
    %v2185 = vunpack.c.l.b16 %v1328
    %v2186 = vunpack.c.h.b16 %v1328
    %v2187 = vunpack.c.l.b16 %v1329
    %v2188 = vunpack.c.h.b16 %v1329
    %v2189 = vunpack.c.l.b16 %v1330
    %v2190 = vunpack.c.h.b16 %v1330
    %v2191 = vunpack.c.l.b16 %v1331
    %v2192 = vunpack.c.h.b16 %v1331
    %v2193 = vunpack.c.l.b16 %v1332
    %v2194 = vunpack.c.h.b16 %v1332
    %v2195 = vunpack.c.l.b16 %v1333
    %v2196 = vunpack.c.h.b16 %v1333
    %v2197 = vunpack.c.l.b16 %v1334
    %v2198 = vunpack.c.h.b16 %v1334
    %v2199 = vunpack.c.l.b16 %v1335
    %v2200 = vunpack.c.h.b16 %v1335
    %v2201 = vunpack.c.l.b16 %v1336
    %v2202 = vunpack.c.h.b16 %v1336
    %v2203 = vunpack.c.l.b16 %v1337
    %v2204 = vunpack.c.h.b16 %v1337
    %v2205 = vunpack.c.l.b16 %v1338
    %v2206 = vunpack.c.h.b16 %v1338
    %v2207 = vunpack.c.l.b16 %v1339
    %v2208 = vunpack.c.h.b16 %v1339
    %v2209 = vunpack.c.l.b16 %v1340
    %v2210 = vunpack.c.h.b16 %v1340
    %v2211 = vunpack.c.l.b16 %v1341
    %v2212 = vunpack.c.h.b16 %v1341
    %v2213 = vunpack.c.l.b16 %v1342
    %v2214 = vunpack.c.h.b16 %v1342
    %v2215 = vunpack.c.l.b16 %v1343
    %v2216 = vunpack.c.h.b16 %v1343
    %v2217 = vunpack.c.l.b16 %v1344
    %v2218 = vunpack.c.h.b16 %v1344
    %v2219 = vunpack.c.l.b16 %v1345
    %v2220 = vunpack.c.h.b16 %v1345
    %v2221 = vunpack.c.l.b16 %v1346
    %v2222 = vunpack.c.h.b16 %v1346
    %v2223 = vunpack.c.l.b16 %v1347
    %v2224 = vunpack.c.h.b16 %v1347
    %v2225 = vunpack.c.l.b16 %v1348
    %v2226 = vunpack.c.h.b16 %v1348
    %v2227 = vunpack.c.l.b16 %v1349
    %v2228 = vunpack.c.h.b16 %v1349
    %v2229 = vunpack.c.l.b16 %v1350
    %v2230 = vunpack.c.h.b16 %v1350
    %v2231 = vunpack.c.l.b16 %v1351
    %v2232 = vunpack.c.h.b16 %v1351
    %v2233 = vunpack.c.l.b16 %v1352
    %v2234 = vunpack.c.h.b16 %v1352
    %v2235 = vunpack.c.l.b16 %v1353
    %v2236 = vunpack.c.h.b16 %v1353
    %v2237 = vunpack.c.l.b16 %v1354
    %v2238 = vunpack.c.h.b16 %v1354
    %v2239 = vunpack.c.l.b16 %v1355
    %v2240 = vunpack.c.h.b16 %v1355
    %v2241 = vunpack.c.l.b16 %v1356
    %v2242 = vunpack.c.h.b16 %v1356
    %v2243 = vunpack.c.l.b16 %v1357
    %v2244 = vunpack.c.h.b16 %v1357
    %v2245 = vunpack.c.l.b16 %v1358
    %v2246 = vunpack.c.h.b16 %v1358
    %v2247 = vunpack.c.l.b16 %v1359
    %v2248 = vunpack.c.h.b16 %v1359
    %v2249 = vunpack.c.l.b16 %v1360
    %v2250 = vunpack.c.h.b16 %v1360
    %v2251 = vunpack.c.l.b16 %v1361
    %v2252 = vunpack.c.h.b16 %v1361
    %v2253 = vunpack.c.l.b16 %v1362
    %v2254 = vunpack.c.h.b16 %v1362
    %v2255 = vunpack.c.l.b16 %v1363
    %v2256 = vunpack.c.h.b16 %v1363
    %v2257 = vunpack.c.l.b16 %v1364
    %v2258 = vunpack.c.h.b16 %v1364
    %v2259 = vunpack.c.l.b16 %v1365
    %v2260 = vunpack.c.h.b16 %v1365
    %v2261 = vunpack.c.l.b16 %v1366
    %v2262 = vunpack.c.h.b16 %v1366
    %v2263 = vunpack.c.l.b16 %v1367
    %v2264 = vunpack.c.h.b16 %v1367
    %v2265 = vunpack.c.l.b16 %v1368
    %v2266 = vunpack.c.h.b16 %v1368
    %v2267 = vunpack.c.l.b16 %v1369
    %v2268 = vunpack.c.h.b16 %v1369
    %v2269 = vunpack.c.l.b16 %v1370
    %v2270 = vunpack.c.h.b16 %v1370
    %v2271 = vunpack.c.l.b16 %v1371
    %v2272 = vunpack.c.h.b16 %v1371
    %v2273 = vunpack.c.l.b16 %v1372
    %v2274 = vunpack.c.h.b16 %v1372
    %v2275 = vunpack.c.l.b16 %v1373
    %v2276 = vunpack.c.h.b16 %v1373
    %v2277 = vunpack.c.l.b16 %v1374
    %v2278 = vunpack.c.h.b16 %v1374
    %v2279 = vunpack.c.l.b16 %v1375
    %v2280 = vunpack.c.h.b16 %v1375
    %v2281 = vunpack.c.l.b16 %v1376
    %v2282 = vunpack.c.h.b16 %v1376
    %v2283 = vunpack.c.l.b16 %v1377
    %v2284 = vunpack.c.h.b16 %v1377
    %v2285 = vunpack.c.l.b16 %v1378
    %v2286 = vunpack.c.h.b16 %v1378
    %v2287 = vunpack.c.l.b16 %v1379
    %v2288 = vunpack.c.h.b16 %v1379
    %v2289 = vunpack.c.l.b16 %v1380
    %v2290 = vunpack.c.h.b16 %v1380
    %v2291 = vunpack.c.l.b16 %v1381
    %v2292 = vunpack.c.h.b16 %v1381
    %v2293 = vunpack.c.l.b16 %v1382
    %v2294 = vunpack.c.h.b16 %v1382
    %v2295 = vunpack.c.l.b16 %v1383
    %v2296 = vunpack.c.h.b16 %v1383
    %v2297 = vunpack.c.l.b16 %v1384
    %v2298 = vunpack.c.h.b16 %v1384
    %v2299 = vunpack.c.l.b16 %v1385
    %v2300 = vunpack.c.h.b16 %v1385
    %v2301 = vunpack.c.l.b16 %v1386
    %v2302 = vunpack.c.h.b16 %v1386
    %v2303 = vunpack.c.l.b16 %v1387
    %v2304 = vunpack.c.h.b16 %v1387
    %v2305 = vunpack.c.l.b16 %v1388
    %v2306 = vunpack.c.h.b16 %v1388
    %v2307 = vunpack.c.l.b16 %v1389
    %v2308 = vunpack.c.h.b16 %v1389
    %v2309 = vunpack.c.l.b16 %v1390
    %v2310 = vunpack.c.h.b16 %v1390
    %v2311 = vunpack.c.l.b16 %v1391
    %v2312 = vunpack.c.h.b16 %v1391
    %v2313 = vunpack.c.l.b16 %v1392
    %v2314 = vunpack.c.h.b16 %v1392
    %v2315 = vunpack.c.l.b16 %v1393
    %v2316 = vunpack.c.h.b16 %v1393
    %v2317 = vunpack.c.l.b16 %v1394
    %v2318 = vunpack.c.h.b16 %v1394
    %v2319 = vunpack.c.l.b16 %v1395
    %v2320 = vunpack.c.h.b16 %v1395
    %v2321 = vunpack.c.l.b16 %v1396
    %v2322 = vunpack.c.h.b16 %v1396
    %v2323 = vunpack.c.l.b16 %v1397
    %v2324 = vunpack.c.h.b16 %v1397
    %v2325 = vunpack.c.l.b16 %v1398
    %v2326 = vunpack.c.h.b16 %v1398
    %v2327 = vunpack.c.l.b16 %v1399
    %v2328 = vunpack.c.h.b16 %v1399
    %v2329 = vunpack.c.l.b16 %v1400
    %v2330 = vunpack.c.h.b16 %v1400
    %v2331 = vunpack.c.l.b16 %v1401
    %v2332 = vunpack.c.h.b16 %v1401
    %v2333 = vunpack.c.l.b16 %v1402
    %v2334 = vunpack.c.h.b16 %v1402
    %v2335 = vunpack.c.l.b16 %v1403
    %v2336 = vunpack.c.h.b16 %v1403
    %v2337 = vunpack.c.l.b16 %v1404
    %v2338 = vunpack.c.h.b16 %v1404
    %v2339 = vunpack.c.l.b16 %v1405
    %v2340 = vunpack.c.h.b16 %v1405
    %v2341 = vunpack.c.l.b16 %v1406
    %v2342 = vunpack.c.h.b16 %v1406
    %v2343 = vunpack.c.l.b16 %v1407
    %v2344 = vunpack.c.h.b16 %v1407
    %v2345 = vunpack.c.l.b16 %v1408
    %v2346 = vunpack.c.h.b16 %v1408
    %v2347 = vunpack.c.l.b16 %v1409
    %v2348 = vunpack.c.h.b16 %v1409
    %v2349 = vunpack.c.l.b16 %v1410
    %v2350 = vunpack.c.h.b16 %v1410
    %v2351 = vunpack.c.l.b16 %v1411
    %v2352 = vunpack.c.h.b16 %v1411
    %v2353 = vunpack.c.l.b16 %v1412
    %v2354 = vunpack.c.h.b16 %v1412
    %v2355 = vunpack.c.l.b16 %v1413
    %v2356 = vunpack.c.h.b16 %v1413
    %v2357 = vunpack.c.l.b16 %v1414
    %v2358 = vunpack.c.h.b16 %v1414
    %v2359 = vunpack.c.l.b16 %v1415
    %v2360 = vunpack.c.h.b16 %v1415
    %v2361 = vunpack.c.l.b16 %v1416
    %v2362 = vunpack.c.h.b16 %v1416
    %v2363 = vunpack.c.l.b16 %v1417
    %v2364 = vunpack.c.h.b16 %v1417
    %v2365 = vunpack.c.l.b16 %v1418
    %v2366 = vunpack.c.h.b16 %v1418
    %v2367 = vunpack.c.l.b16 %v1419
    %v2368 = vunpack.c.h.b16 %v1419
    %v2369 = vunpack.c.l.b16 %v1420
    %v2370 = vunpack.c.h.b16 %v1420
    %v2371 = vunpack.c.l.b16 %v1421
    %v2372 = vunpack.c.h.b16 %v1421
    %v2373 = vunpack.c.l.b16 %v1422
    %v2374 = vunpack.c.h.b16 %v1422
    %v2375 = vunpack.c.l.b16 %v1423
    %v2376 = vunpack.c.h.b16 %v1423
    %v2377 = vunpack.c.l.b16 %v1424
    %v2378 = vunpack.c.h.b16 %v1424
    %v2379 = vunpack.c.l.b16 %v1425
    %v2380 = vunpack.c.h.b16 %v1425
    %v2381 = vunpack.c.l.b16 %v1426
    %v2382 = vunpack.c.h.b16 %v1426
    %v2383 = vunpack.c.l.b16 %v1427
    %v2384 = vunpack.c.h.b16 %v1427
    %v2385 = vunpack.c.l.b16 %v1428
    %v2386 = vunpack.c.h.b16 %v1428
    %v2387 = vunpack.c.l.b16 %v1429
    %v2388 = vunpack.c.h.b16 %v1429
    %v2389 = vunpack.c.l.b16 %v1430
    %v2390 = vunpack.c.h.b16 %v1430
    %v2391 = vpack.c.b16 %v1759, %v1751
    %v2392 = vpack.c.b16 %v1760, %v1752
    %v2393 = vpack.c.b16 %v1761, %v1753
    %v2394 = vpack.c.b16 %v1762, %v1754
    %v2395 = vpack.c.b16 %v1763, %v1755
    %v2396 = vpack.c.b16 %v1764, %v1756
    %v2397 = vpack.c.b16 %v1765, %v1757
    %v2398 = vpack.c.b16 %v1766, %v1758
    %v2399 = vpack.c.b16 %v1775, %v1767
    %v2400 = vpack.c.b16 %v1776, %v1768
    %v2401 = vpack.c.b16 %v1777, %v1769
    %v2402 = vpack.c.b16 %v1778, %v1770
    %v2403 = vpack.c.b16 %v1779, %v1771
    %v2404 = vpack.c.b16 %v1780, %v1772
    %v2405 = vpack.c.b16 %v1781, %v1773
    %v2406 = vpack.c.b16 %v1782, %v1774
    %v2407 = vpack.c.b16 %v1791, %v1783
    %v2408 = vpack.c.b16 %v1792, %v1784
    %v2409 = vpack.c.b16 %v1793, %v1785
    %v2410 = vpack.c.b16 %v1794, %v1786
    %v2411 = vpack.c.b16 %v1795, %v1787
    %v2412 = vpack.c.b16 %v1796, %v1788
    %v2413 = vpack.c.b16 %v1797, %v1789
    %v2414 = vpack.c.b16 %v1798, %v1790
    %v2415 = vpack.c.b16 %v1807, %v1799
    %v2416 = vpack.c.b16 %v1808, %v1800
    %v2417 = vpack.c.b16 %v1809, %v1801
    %v2418 = vpack.c.b16 %v1810, %v1802
    %v2419 = vpack.c.b16 %v1811, %v1803
    %v2420 = vpack.c.b16 %v1812, %v1804
    %v2421 = vpack.c.b16 %v1813, %v1805
    %v2422 = vpack.c.b16 %v1814, %v1806
    %v2423 = vpack.c.b16 %v1823, %v1815
    %v2424 = vpack.c.b16 %v1824, %v1816
    %v2425 = vpack.c.b16 %v1825, %v1817
    %v2426 = vpack.c.b16 %v1826, %v1818
    %v2427 = vpack.c.b16 %v1827, %v1819
    %v2428 = vpack.c.b16 %v1828, %v1820
    %v2429 = vpack.c.b16 %v1829, %v1821
    %v2430 = vpack.c.b16 %v1830, %v1822
    %v2431 = vpack.c.b16 %v1839, %v1831
    %v2432 = vpack.c.b16 %v1840, %v1832
    %v2433 = vpack.c.b16 %v1841, %v1833
    %v2434 = vpack.c.b16 %v1842, %v1834
    %v2435 = vpack.c.b16 %v1843, %v1835
    %v2436 = vpack.c.b16 %v1844, %v1836
    %v2437 = vpack.c.b16 %v1845, %v1837
    %v2438 = vpack.c.b16 %v1846, %v1838
    %v2439 = vpack.c.b16 %v1855, %v1847
    %v2440 = vpack.c.b16 %v1856, %v1848
    %v2441 = vpack.c.b16 %v1857, %v1849
    %v2442 = vpack.c.b16 %v1858, %v1850
    %v2443 = vpack.c.b16 %v1859, %v1851
    %v2444 = vpack.c.b16 %v1860, %v1852
    %v2445 = vpack.c.b16 %v1861, %v1853
    %v2446 = vpack.c.b16 %v1862, %v1854
    %v2447 = vpack.c.b16 %v1871, %v1863
    %v2448 = vpack.c.b16 %v1872, %v1864
    %v2449 = vpack.c.b16 %v1873, %v1865
    %v2450 = vpack.c.b16 %v1874, %v1866
    %v2451 = vpack.c.b16 %v1875, %v1867
    %v2452 = vpack.c.b16 %v1876, %v1868
    %v2453 = vpack.c.b16 %v1877, %v1869
    %v2454 = vpack.c.b16 %v1878, %v1870
    %v2455 = vpack.c.b16 %v1887, %v1879
    %v2456 = vpack.c.b16 %v1888, %v1880
    %v2457 = vpack.c.b16 %v1889, %v1881
    %v2458 = vpack.c.b16 %v1890, %v1882
    %v2459 = vpack.c.b16 %v1891, %v1883
    %v2460 = vpack.c.b16 %v1892, %v1884
    %v2461 = vpack.c.b16 %v1893, %v1885
    %v2462 = vpack.c.b16 %v1894, %v1886
    %v2463 = vpack.c.b16 %v1903, %v1895
    %v2464 = vpack.c.b16 %v1904, %v1896
    %v2465 = vpack.c.b16 %v1905, %v1897
    %v2466 = vpack.c.b16 %v1906, %v1898
    %v2467 = vpack.c.b16 %v1907, %v1899
    %v2468 = vpack.c.b16 %v1908, %v1900
    %v2469 = vpack.c.b16 %v1909, %v1901
    %v2470 = vpack.c.b16 %v1910, %v1902
    %v2471 = vpack.c.b16 %v1919, %v1911
    %v2472 = vpack.c.b16 %v1920, %v1912
    %v2473 = vpack.c.b16 %v1921, %v1913
    %v2474 = vpack.c.b16 %v1922, %v1914
    %v2475 = vpack.c.b16 %v1923, %v1915
    %v2476 = vpack.c.b16 %v1924, %v1916
    %v2477 = vpack.c.b16 %v1925, %v1917
    %v2478 = vpack.c.b16 %v1926, %v1918
    %v2479 = vpack.c.b16 %v1935, %v1927
    %v2480 = vpack.c.b16 %v1936, %v1928
    %v2481 = vpack.c.b16 %v1937, %v1929
    %v2482 = vpack.c.b16 %v1938, %v1930
    %v2483 = vpack.c.b16 %v1939, %v1931
    %v2484 = vpack.c.b16 %v1940, %v1932
    %v2485 = vpack.c.b16 %v1941, %v1933
    %v2486 = vpack.c.b16 %v1942, %v1934
    %v2487 = vpack.c.b16 %v1951, %v1943
    %v2488 = vpack.c.b16 %v1952, %v1944
    %v2489 = vpack.c.b16 %v1953, %v1945
    %v2490 = vpack.c.b16 %v1954, %v1946
    %v2491 = vpack.c.b16 %v1955, %v1947
    %v2492 = vpack.c.b16 %v1956, %v1948
    %v2493 = vpack.c.b16 %v1957, %v1949
    %v2494 = vpack.c.b16 %v1958, %v1950
    %v2495 = vpack.c.b16 %v1967, %v1959
    %v2496 = vpack.c.b16 %v1968, %v1960
    %v2497 = vpack.c.b16 %v1969, %v1961
    %v2498 = vpack.c.b16 %v1970, %v1962
    %v2499 = vpack.c.b16 %v1971, %v1963
    %v2500 = vpack.c.b16 %v1972, %v1964
    %v2501 = vpack.c.b16 %v1973, %v1965
    %v2502 = vpack.c.b16 %v1974, %v1966
    %v2503 = vpack.c.b16 %v1983, %v1975
    %v2504 = vpack.c.b16 %v1984, %v1976
    %v2505 = vpack.c.b16 %v1985, %v1977
    %v2506 = vpack.c.b16 %v1986, %v1978
    %v2507 = vpack.c.b16 %v1987, %v1979
    %v2508 = vpack.c.b16 %v1988, %v1980
    %v2509 = vpack.c.b16 %v1989, %v1981
    %v2510 = vpack.c.b16 %v1990, %v1982
    %v2511 = vpack.c.b16 %v1999, %v1991
    %v2512 = vpack.c.b16 %v2000, %v1992
    %v2513 = vpack.c.b16 %v2001, %v1993
    %v2514 = vpack.c.b16 %v2002, %v1994
    %v2515 = vpack.c.b16 %v2003, %v1995
    %v2516 = vpack.c.b16 %v2004, %v1996
    %v2517 = vpack.c.b16 %v2005, %v1997
    %v2518 = vpack.c.b16 %v2006, %v1998
    %v2519 = vpack.c.b16 %v2015, %v2007
    %v2520 = vpack.c.b16 %v2016, %v2008
    %v2521 = vpack.c.b16 %v2017, %v2009
    %v2522 = vpack.c.b16 %v2018, %v2010
    %v2523 = vpack.c.b16 %v2019, %v2011
    %v2524 = vpack.c.b16 %v2020, %v2012
    %v2525 = vpack.c.b16 %v2021, %v2013
    %v2526 = vpack.c.b16 %v2022, %v2014
    %v2527 = vpack.c.b16 %v2031, %v2023
    %v2528 = vpack.c.b16 %v2032, %v2024
    %v2529 = vpack.c.b16 %v2033, %v2025
    %v2530 = vpack.c.b16 %v2034, %v2026
    %v2531 = vpack.c.b16 %v2035, %v2027
    %v2532 = vpack.c.b16 %v2036, %v2028
    %v2533 = vpack.c.b16 %v2037, %v2029
    %v2534 = vpack.c.b16 %v2038, %v2030
    %v2535 = vpack.c.b16 %v2047, %v2039
    %v2536 = vpack.c.b16 %v2048, %v2040
    %v2537 = vpack.c.b16 %v2049, %v2041
    %v2538 = vpack.c.b16 %v2050, %v2042
    %v2539 = vpack.c.b16 %v2051, %v2043
    %v2540 = vpack.c.b16 %v2052, %v2044
    %v2541 = vpack.c.b16 %v2053, %v2045
    %v2542 = vpack.c.b16 %v2054, %v2046
    %v2543 = vpack.c.b16 %v2063, %v2055
    %v2544 = vpack.c.b16 %v2064, %v2056
    %v2545 = vpack.c.b16 %v2065, %v2057
    %v2546 = vpack.c.b16 %v2066, %v2058
    %v2547 = vpack.c.b16 %v2067, %v2059
    %v2548 = vpack.c.b16 %v2068, %v2060
    %v2549 = vpack.c.b16 %v2069, %v2061
    %v2550 = vpack.c.b16 %v2070, %v2062
    %v2551 = vpack.c.b16 %v2079, %v2071
    %v2552 = vpack.c.b16 %v2080, %v2072
    %v2553 = vpack.c.b16 %v2081, %v2073
    %v2554 = vpack.c.b16 %v2082, %v2074
    %v2555 = vpack.c.b16 %v2083, %v2075
    %v2556 = vpack.c.b16 %v2084, %v2076
    %v2557 = vpack.c.b16 %v2085, %v2077
    %v2558 = vpack.c.b16 %v2086, %v2078
    %v2559 = vpack.c.b16 %v2095, %v2087
    %v2560 = vpack.c.b16 %v2096, %v2088
    %v2561 = vpack.c.b16 %v2097, %v2089
    %v2562 = vpack.c.b16 %v2098, %v2090
    %v2563 = vpack.c.b16 %v2099, %v2091
    %v2564 = vpack.c.b16 %v2100, %v2092
    %v2565 = vpack.c.b16 %v2101, %v2093
    %v2566 = vpack.c.b16 %v2102, %v2094
    %v2567 = vpack.c.b16 %v2111, %v2103
    %v2568 = vpack.c.b16 %v2112, %v2104
    %v2569 = vpack.c.b16 %v2113, %v2105
    %v2570 = vpack.c.b16 %v2114, %v2106
    %v2571 = vpack.c.b16 %v2115, %v2107
    %v2572 = vpack.c.b16 %v2116, %v2108
    %v2573 = vpack.c.b16 %v2117, %v2109
    %v2574 = vpack.c.b16 %v2118, %v2110
    %v2575 = vpack.c.b16 %v2127, %v2119
    %v2576 = vpack.c.b16 %v2128, %v2120
    %v2577 = vpack.c.b16 %v2129, %v2121
    %v2578 = vpack.c.b16 %v2130, %v2122
    %v2579 = vpack.c.b16 %v2131, %v2123
    %v2580 = vpack.c.b16 %v2132, %v2124
    %v2581 = vpack.c.b16 %v2133, %v2125
    %v2582 = vpack.c.b16 %v2134, %v2126
    %v2583 = vpack.c.b16 %v2143, %v2135
    %v2584 = vpack.c.b16 %v2144, %v2136
    %v2585 = vpack.c.b16 %v2145, %v2137
    %v2586 = vpack.c.b16 %v2146, %v2138
    %v2587 = vpack.c.b16 %v2147, %v2139
    %v2588 = vpack.c.b16 %v2148, %v2140
    %v2589 = vpack.c.b16 %v2149, %v2141
    %v2590 = vpack.c.b16 %v2150, %v2142
    %v2591 = vpack.c.b16 %v2159, %v2151
    %v2592 = vpack.c.b16 %v2160, %v2152
    %v2593 = vpack.c.b16 %v2161, %v2153
    %v2594 = vpack.c.b16 %v2162, %v2154
    %v2595 = vpack.c.b16 %v2163, %v2155
    %v2596 = vpack.c.b16 %v2164, %v2156
    %v2597 = vpack.c.b16 %v2165, %v2157
    %v2598 = vpack.c.b16 %v2166, %v2158
    %v2599 = vpack.c.b16 %v2175, %v2167
    %v2600 = vpack.c.b16 %v2176, %v2168
    %v2601 = vpack.c.b16 %v2177, %v2169
    %v2602 = vpack.c.b16 %v2178, %v2170
    %v2603 = vpack.c.b16 %v2179, %v2171
    %v2604 = vpack.c.b16 %v2180, %v2172
    %v2605 = vpack.c.b16 %v2181, %v2173
    %v2606 = vpack.c.b16 %v2182, %v2174
    %v2607 = vpack.c.b16 %v2191, %v2183
    %v2608 = vpack.c.b16 %v2192, %v2184
    %v2609 = vpack.c.b16 %v2193, %v2185
    %v2610 = vpack.c.b16 %v2194, %v2186
    %v2611 = vpack.c.b16 %v2195, %v2187
    %v2612 = vpack.c.b16 %v2196, %v2188
    %v2613 = vpack.c.b16 %v2197, %v2189
    %v2614 = vpack.c.b16 %v2198, %v2190
    %v2615 = vpack.c.b16 %v2207, %v2199
    %v2616 = vpack.c.b16 %v2208, %v2200
    %v2617 = vpack.c.b16 %v2209, %v2201
    %v2618 = vpack.c.b16 %v2210, %v2202
    %v2619 = vpack.c.b16 %v2211, %v2203
    %v2620 = vpack.c.b16 %v2212, %v2204
    %v2621 = vpack.c.b16 %v2213, %v2205
    %v2622 = vpack.c.b16 %v2214, %v2206
    %v2623 = vpack.c.b16 %v2223, %v2215
    %v2624 = vpack.c.b16 %v2224, %v2216
    %v2625 = vpack.c.b16 %v2225, %v2217
    %v2626 = vpack.c.b16 %v2226, %v2218
    %v2627 = vpack.c.b16 %v2227, %v2219
    %v2628 = vpack.c.b16 %v2228, %v2220
    %v2629 = vpack.c.b16 %v2229, %v2221
    %v2630 = vpack.c.b16 %v2230, %v2222
    %v2631 = vpack.c.b16 %v2239, %v2231
    %v2632 = vpack.c.b16 %v2240, %v2232
    %v2633 = vpack.c.b16 %v2241, %v2233
    %v2634 = vpack.c.b16 %v2242, %v2234
    %v2635 = vpack.c.b16 %v2243, %v2235
    %v2636 = vpack.c.b16 %v2244, %v2236
    %v2637 = vpack.c.b16 %v2245, %v2237
    %v2638 = vpack.c.b16 %v2246, %v2238
    %v2639 = vpack.c.b16 %v2255, %v2247
    %v2640 = vpack.c.b16 %v2256, %v2248
    %v2641 = vpack.c.b16 %v2257, %v2249
    %v2642 = vpack.c.b16 %v2258, %v2250
    %v2643 = vpack.c.b16 %v2259, %v2251
    %v2644 = vpack.c.b16 %v2260, %v2252
    %v2645 = vpack.c.b16 %v2261, %v2253
    %v2646 = vpack.c.b16 %v2262, %v2254
    %v2647 = vpack.c.b16 %v2271, %v2263
    %v2648 = vpack.c.b16 %v2272, %v2264
    %v2649 = vpack.c.b16 %v2273, %v2265
    %v2650 = vpack.c.b16 %v2274, %v2266
    %v2651 = vpack.c.b16 %v2275, %v2267
    %v2652 = vpack.c.b16 %v2276, %v2268
    %v2653 = vpack.c.b16 %v2277, %v2269
    %v2654 = vpack.c.b16 %v2278, %v2270
    %v2655 = vpack.c.b16 %v2287, %v2279
    %v2656 = vpack.c.b16 %v2288, %v2280
    %v2657 = vpack.c.b16 %v2289, %v2281
    %v2658 = vpack.c.b16 %v2290, %v2282
    %v2659 = vpack.c.b16 %v2291, %v2283
    %v2660 = vpack.c.b16 %v2292, %v2284
    %v2661 = vpack.c.b16 %v2293, %v2285
    %v2662 = vpack.c.b16 %v2294, %v2286
    %v2663 = vpack.c.b16 %v2303, %v2295
    %v2664 = vpack.c.b16 %v2304, %v2296
    %v2665 = vpack.c.b16 %v2305, %v2297
    %v2666 = vpack.c.b16 %v2306, %v2298
    %v2667 = vpack.c.b16 %v2307, %v2299
    %v2668 = vpack.c.b16 %v2308, %v2300
    %v2669 = vpack.c.b16 %v2309, %v2301
    %v2670 = vpack.c.b16 %v2310, %v2302
    %v2671 = vpack.c.b16 %v2319, %v2311
    %v2672 = vpack.c.b16 %v2320, %v2312
    %v2673 = vpack.c.b16 %v2321, %v2313
    %v2674 = vpack.c.b16 %v2322, %v2314
    %v2675 = vpack.c.b16 %v2323, %v2315
    %v2676 = vpack.c.b16 %v2324, %v2316
    %v2677 = vpack.c.b16 %v2325, %v2317
    %v2678 = vpack.c.b16 %v2326, %v2318
    %v2679 = vpack.c.b16 %v2335, %v2327
    %v2680 = vpack.c.b16 %v2336, %v2328
    %v2681 = vpack.c.b16 %v2337, %v2329
    %v2682 = vpack.c.b16 %v2338, %v2330
    %v2683 = vpack.c.b16 %v2339, %v2331
    %v2684 = vpack.c.b16 %v2340, %v2332
    %v2685 = vpack.c.b16 %v2341, %v2333
    %v2686 = vpack.c.b16 %v2342, %v2334
    %v2687 = vpack.c.b16 %v2351, %v2343
    %v2688 = vpack.c.b16 %v2352, %v2344
    %v2689 = vpack.c.b16 %v2353, %v2345
    %v2690 = vpack.c.b16 %v2354, %v2346
    %v2691 = vpack.c.b16 %v2355, %v2347
    %v2692 = vpack.c.b16 %v2356, %v2348
    %v2693 = vpack.c.b16 %v2357, %v2349
    %v2694 = vpack.c.b16 %v2358, %v2350
    %v2695 = vpack.c.b16 %v2367, %v2359
    %v2696 = vpack.c.b16 %v2368, %v2360
    %v2697 = vpack.c.b16 %v2369, %v2361
    %v2698 = vpack.c.b16 %v2370, %v2362
    %v2699 = vpack.c.b16 %v2371, %v2363
    %v2700 = vpack.c.b16 %v2372, %v2364
    %v2701 = vpack.c.b16 %v2373, %v2365
    %v2702 = vpack.c.b16 %v2374, %v2366
    %v2703 = vpack.c.b16 %v2383, %v2375
    %v2704 = vpack.c.b16 %v2384, %v2376
    %v2705 = vpack.c.b16 %v2385, %v2377
    %v2706 = vpack.c.b16 %v2386, %v2378
    %v2707 = vpack.c.b16 %v2387, %v2379
    %v2708 = vpack.c.b16 %v2388, %v2380
    %v2709 = vpack.c.b16 %v2389, %v2381
    %v2710 = vpack.c.b16 %v2390, %v2382
    %3031 = vmatprep.subr.bf16.mxu0 %v2392
    %3032 = vmatpush1.bf16.msra.mxu0 %v2391
    %3033 = vmatprep.subr.bf16.mxu0 %v2400
    %3034 = vmatpush1.bf16.msra.mxu0 %v2399
    %3035 = vmatprep.subr.bf16.mxu0 %v2408
    %3036 = vmatpush1.bf16.msra.mxu0 %v2407
    %3037 = vmatprep.subr.bf16.mxu0 %v2416
    %3038 = vmatpush1.bf16.msra.mxu0 %v2415
    %3039 = vmatprep.subr.bf16.mxu0 %v2424
    %3040 = vmatpush1.bf16.msra.mxu0 %v2423
    %3041 = vmatprep.subr.bf16.mxu0 %v2432
    %3042 = vmatpush1.bf16.msra.mxu0 %v2431
    %3043 = vmatprep.subr.bf16.mxu0 %v2440
    %3044 = vmatpush1.bf16.msra.mxu0 %v2439
    %3045 = vmatprep.subr.bf16.mxu0 %v2448
    %3046 = vmatpush1.bf16.msra.mxu0 %v2447
    %3047 = vmatprep.subr.bf16.mxu0 %v2456
    %3048 = vmatpush1.bf16.msra.mxu0 %v2455
    %3049 = vmatprep.subr.bf16.mxu0 %v2464
    %3050 = vmatpush1.bf16.msra.mxu0 %v2463
    %3051 = vmatprep.subr.bf16.mxu0 %v2472
    %3052 = vmatpush1.bf16.msra.mxu0 %v2471
    %3053 = vmatprep.subr.bf16.mxu0 %v2480
    %3054 = vmatpush1.bf16.msra.mxu0 %v2479
    %3055 = vmatprep.subr.bf16.mxu0 %v2488
    %3056 = vmatpush1.bf16.msra.mxu0 %v2487
    %3057 = vmatprep.subr.bf16.mxu0 %v2496
    %3058 = vmatpush1.bf16.msra.mxu0 %v2495
    %3059 = vmatprep.subr.bf16.mxu0 %v2504
    %3060 = vmatpush1.bf16.msra.mxu0 %v2503
    %3061 = vmatprep.subr.bf16.mxu0 %v2512
    %3062 = vmatpush1.bf16.msra.mxu0 %v2511
    %3063 = vmatprep.mubr.bf16.mxu0 %v1107
    %3064 = vmatmul.mubr.bf16.gmra.mrb[0].mxu0 %v1106
    %v3065 = vpop.f32.mrb[0].mxu0
    %v3066 = vadd.f32 0.0, %v3065
    %v3067 = vpop.f32.mrb[0].mxu0
    %v3068 = vadd.f32 0.0, %v3067
    %v3069 = vpop.f32.mrb[0].mxu0
    %v3070 = vpop.f32.mrb[0].mxu0
    %3071 = vdwg.mxu0
    %3072 = vmatprep.subr.bf16.mxu0 %v2520
    %3073 = vmatpush1.bf16.msra.mxu0 %v2519
    %3074 = vmatprep.subr.bf16.mxu0 %v2528
    %3075 = vmatpush1.bf16.msra.mxu0 %v2527
    %3076 = vmatprep.subr.bf16.mxu0 %v2536
    %3077 = vmatpush1.bf16.msra.mxu0 %v2535
    %3078 = vmatprep.subr.bf16.mxu0 %v2544
    %3079 = vmatpush1.bf16.msra.mxu0 %v2543
    %3080 = vmatprep.subr.bf16.mxu0 %v2552
    %3081 = vmatpush1.bf16.msra.mxu0 %v2551
    %3082 = vmatprep.subr.bf16.mxu0 %v2560
    %3083 = vmatpush1.bf16.msra.mxu0 %v2559
    %3084 = vmatprep.subr.bf16.mxu0 %v2568
    %3085 = vmatpush1.bf16.msra.mxu0 %v2567
    %3086 = vmatprep.subr.bf16.mxu0 %v2576
    %3087 = vmatpush1.bf16.msra.mxu0 %v2575
    %3088 = vmatprep.subr.bf16.mxu0 %v2584
    %3089 = vmatpush1.bf16.msra.mxu0 %v2583
    %3090 = vmatprep.subr.bf16.mxu0 %v2592
    %3091 = vmatpush1.bf16.msra.mxu0 %v2591
    %3092 = vmatprep.subr.bf16.mxu0 %v2600
    %3093 = vmatpush1.bf16.msra.mxu0 %v2599
    %3094 = vmatprep.subr.bf16.mxu0 %v2608
    %3095 = vmatpush1.bf16.msra.mxu0 %v2607
    %3096 = vmatprep.subr.bf16.mxu0 %v2616
    %3097 = vmatpush1.bf16.msra.mxu0 %v2615
    %3098 = vmatprep.subr.bf16.mxu0 %v2624
    %3099 = vmatpush1.bf16.msra.mxu0 %v2623
    %3100 = vmatprep.subr.bf16.mxu0 %v2632
    %3101 = vmatpush1.bf16.msra.mxu0 %v2631
    %3102 = vmatprep.subr.bf16.mxu0 %v2640
    %3103 = vmatpush1.bf16.msra.mxu0 %v2639
    %3104 = vmatprep.mubr.bf16.mxu0 %v1109
    %3105 = vmatmul.mubr.bf16.gmra.mrb[0].mxu0 %v1108
    %v3106 = vpop.f32.mrb[0].mxu0
    %v3107 = vadd.f32 %v3066, %v3106
    %v3108 = vpop.f32.mrb[0].mxu0
    %v3109 = vadd.f32 %v3068, %v3108
    %v3110 = vpop.f32.mrb[0].mxu0
    %v3111 = vpop.f32.mrb[0].mxu0
    %3112 = vdwg.mxu0
    %3113 = vmatprep.subr.bf16.mxu0 %v2648
    %3114 = vmatpush1.bf16.msra.mxu0 %v2647
    %3115 = vmatprep.subr.bf16.mxu0 %v2656
    %3116 = vmatpush1.bf16.msra.mxu0 %v2655
    %3117 = vmatprep.subr.bf16.mxu0 %v2664
    %3118 = vmatpush1.bf16.msra.mxu0 %v2663
    %3119 = vmatprep.subr.bf16.mxu0 %v2672
    %3120 = vmatpush1.bf16.msra.mxu0 %v2671
    %3121 = vmatprep.subr.bf16.mxu0 %v2680
    %3122 = vmatpush1.bf16.msra.mxu0 %v2679
    %3123 = vmatprep.subr.bf16.mxu0 %v2688
    %3124 = vmatpush1.bf16.msra.mxu0 %v2687
    %3125 = vmatprep.subr.bf16.mxu0 %v2696
    %3126 = vmatpush1.bf16.msra.mxu0 %v2695
    %3127 = vmatprep.subr.bf16.mxu0 %v2704
    %3128 = vmatpush1.bf16.msra.mxu0 %v2703
    %3129 = vmatprep.subr.bf16.mxu0 0
    %3130 = vmatpush1.bf16.msra.mxu0 0
    %3131 = vmatprep.subr.bf16.mxu0 0
    %3132 = vmatpush1.bf16.msra.mxu0 0
    %3133 = vmatprep.subr.bf16.mxu0 0
    %3134 = vmatpush1.bf16.msra.mxu0 0
    %3135 = vmatprep.subr.bf16.mxu0 0
    %3136 = vmatpush1.bf16.msra.mxu0 0
    %3137 = vmatprep.subr.bf16.mxu0 0
    %3138 = vmatpush1.bf16.msra.mxu0 0
    %3139 = vmatprep.subr.bf16.mxu0 0
    %3140 = vmatpush1.bf16.msra.mxu0 0
    %3141 = vmatprep.subr.bf16.mxu0 0
    %3142 = vmatpush1.bf16.msra.mxu0 0
    %3143 = vmatprep.subr.bf16.mxu0 0
    %3144 = vmatpush1.bf16.msra.mxu0 0
    %3145 = vmatprep.mubr.bf16.mxu0 0
    %3146 = vmatmul.mubr.bf16.gmra.mrb[0].mxu0 %v1110
    %v3147 = vpop.f32.mrb[0].mxu0
    %v3148 = vadd.f32 %v3107, %v3147
    %v3149 = vpop.f32.mrb[0].mxu0
    %v3150 = vadd.f32 %v3109, %v3149
    %v3151 = vpop.f32.mrb[0].mxu0
    %v3152 = vpop.f32.mrb[0].mxu0
    %3153 = vdwg.mxu0
    %3154 = vmatprep.subr.bf16.mxu0 %v2394
    %3155 = vmatpush1.bf16.msra.mxu0 %v2393
    %3156 = vmatprep.subr.bf16.mxu0 %v2402
    %3157 = vmatpush1.bf16.msra.mxu0 %v2401
    %3158 = vmatprep.subr.bf16.mxu0 %v2410
    %3159 = vmatpush1.bf16.msra.mxu0 %v2409
    %3160 = vmatprep.subr.bf16.mxu0 %v2418
    %3161 = vmatpush1.bf16.msra.mxu0 %v2417
    %3162 = vmatprep.subr.bf16.mxu0 %v2426
    %3163 = vmatpush1.bf16.msra.mxu0 %v2425
    %3164 = vmatprep.subr.bf16.mxu0 %v2434
    %3165 = vmatpush1.bf16.msra.mxu0 %v2433
    %3166 = vmatprep.subr.bf16.mxu0 %v2442
    %3167 = vmatpush1.bf16.msra.mxu0 %v2441
    %3168 = vmatprep.subr.bf16.mxu0 %v2450
    %3169 = vmatpush1.bf16.msra.mxu0 %v2449
    %3170 = vmatprep.subr.bf16.mxu0 %v2458
    %3171 = vmatpush1.bf16.msra.mxu0 %v2457
    %3172 = vmatprep.subr.bf16.mxu0 %v2466
    %3173 = vmatpush1.bf16.msra.mxu0 %v2465
    %3174 = vmatprep.subr.bf16.mxu0 %v2474
    %3175 = vmatpush1.bf16.msra.mxu0 %v2473
    %3176 = vmatprep.subr.bf16.mxu0 %v2482
    %3177 = vmatpush1.bf16.msra.mxu0 %v2481
    %3178 = vmatprep.subr.bf16.mxu0 %v2490
    %3179 = vmatpush1.bf16.msra.mxu0 %v2489
    %3180 = vmatprep.subr.bf16.mxu0 %v2498
    %3181 = vmatpush1.bf16.msra.mxu0 %v2497
    %3182 = vmatprep.subr.bf16.mxu0 %v2506
    %3183 = vmatpush1.bf16.msra.mxu0 %v2505
    %3184 = vmatprep.subr.bf16.mxu0 %v2514
    %3185 = vmatpush1.bf16.msra.mxu0 %v2513
    %3186 = vmatprep.mubr.bf16.mxu0 %v1107
    %3187 = vmatmul.mubr.bf16.gmra.mrb[0].mxu0 %v1106
    %v3188 = vpop.f32.mrb[0].mxu0
    %v3189 = vadd.f32 0.0, %v3188
    %v3190 = vpop.f32.mrb[0].mxu0
    %v3191 = vadd.f32 0.0, %v3190
    %v3192 = vpop.f32.mrb[0].mxu0
    %v3193 = vpop.f32.mrb[0].mxu0
    %3194 = vdwg.mxu0
    %3195 = vmatprep.subr.bf16.mxu0 %v2522
    %3196 = vmatpush1.bf16.msra.mxu0 %v2521
    %3197 = vmatprep.subr.bf16.mxu0 %v2530
    %3198 = vmatpush1.bf16.msra.mxu0 %v2529
    %3199 = vmatprep.subr.bf16.mxu0 %v2538
    %3200 = vmatpush1.bf16.msra.mxu0 %v2537
    %3201 = vmatprep.subr.bf16.mxu0 %v2546
    %3202 = vmatpush1.bf16.msra.mxu0 %v2545
    %3203 = vmatprep.subr.bf16.mxu0 %v2554
    %3204 = vmatpush1.bf16.msra.mxu0 %v2553
    %3205 = vmatprep.subr.bf16.mxu0 %v2562
    %3206 = vmatpush1.bf16.msra.mxu0 %v2561
    %3207 = vmatprep.subr.bf16.mxu0 %v2570
    %3208 = vmatpush1.bf16.msra.mxu0 %v2569
    %3209 = vmatprep.subr.bf16.mxu0 %v2578
    %3210 = vmatpush1.bf16.msra.mxu0 %v2577
    %3211 = vmatprep.subr.bf16.mxu0 %v2586
    %3212 = vmatpush1.bf16.msra.mxu0 %v2585
    %3213 = vmatprep.subr.bf16.mxu0 %v2594
    %3214 = vmatpush1.bf16.msra.mxu0 %v2593
    %3215 = vmatprep.subr.bf16.mxu0 %v2602
    %3216 = vmatpush1.bf16.msra.mxu0 %v2601
    %3217 = vmatprep.subr.bf16.mxu0 %v2610
    %3218 = vmatpush1.bf16.msra.mxu0 %v2609
    %3219 = vmatprep.subr.bf16.mxu0 %v2618
    %3220 = vmatpush1.bf16.msra.mxu0 %v2617
    %3221 = vmatprep.subr.bf16.mxu0 %v2626
    %3222 = vmatpush1.bf16.msra.mxu0 %v2625
    %3223 = vmatprep.subr.bf16.mxu0 %v2634
    %3224 = vmatpush1.bf16.msra.mxu0 %v2633
    %3225 = vmatprep.subr.bf16.mxu0 %v2642
    %3226 = vmatpush1.bf16.msra.mxu0 %v2641
    %3227 = vmatprep.mubr.bf16.mxu0 %v1109
    %3228 = vmatmul.mubr.bf16.gmra.mrb[0].mxu0 %v1108
    %v3229 = vpop.f32.mrb[0].mxu0
    %v3230 = vadd.f32 %v3189, %v3229
    %v3231 = vpop.f32.mrb[0].mxu0
    %v3232 = vadd.f32 %v3191, %v3231
    %v3233 = vpop.f32.mrb[0].mxu0
    %v3234 = vpop.f32.mrb[0].mxu0
    %3235 = vdwg.mxu0
    %3236 = vmatprep.subr.bf16.mxu0 %v2650
    %3237 = vmatpush1.bf16.msra.mxu0 %v2649
    %3238 = vmatprep.subr.bf16.mxu0 %v2658
    %3239 = vmatpush1.bf16.msra.mxu0 %v2657
    %3240 = vmatprep.subr.bf16.mxu0 %v2666
    %3241 = vmatpush1.bf16.msra.mxu0 %v2665
    %3242 = vmatprep.subr.bf16.mxu0 %v2674
    %3243 = vmatpush1.bf16.msra.mxu0 %v2673
    %3244 = vmatprep.subr.bf16.mxu0 %v2682
    %3245 = vmatpush1.bf16.msra.mxu0 %v2681
    %3246 = vmatprep.subr.bf16.mxu0 %v2690
    %3247 = vmatpush1.bf16.msra.mxu0 %v2689
    %3248 = vmatprep.subr.bf16.mxu0 %v2698
    %3249 = vmatpush1.bf16.msra.mxu0 %v2697
    %3250 = vmatprep.subr.bf16.mxu0 %v2706
    %3251 = vmatpush1.bf16.msra.mxu0 %v2705
    %3252 = vmatprep.subr.bf16.mxu0 0
    %3253 = vmatpush1.bf16.msra.mxu0 0
    %3254 = vmatprep.subr.bf16.mxu0 0
    %3255 = vmatpush1.bf16.msra.mxu0 0
    %3256 = vmatprep.subr.bf16.mxu0 0
    %3257 = vmatpush1.bf16.msra.mxu0 0
    %3258 = vmatprep.subr.bf16.mxu0 0
    %3259 = vmatpush1.bf16.msra.mxu0 0
    %3260 = vmatprep.subr.bf16.mxu0 0
    %3261 = vmatpush1.bf16.msra.mxu0 0
    %3262 = vmatprep.subr.bf16.mxu0 0
    %3263 = vmatpush1.bf16.msra.mxu0 0
    %3264 = vmatprep.subr.bf16.mxu0 0
    %3265 = vmatpush1.bf16.msra.mxu0 0
    %3266 = vmatprep.subr.bf16.mxu0 0
    %3267 = vmatpush1.bf16.msra.mxu0 0
    %3268 = vmatprep.mubr.bf16.mxu0 0
    %3269 = vmatmul.mubr.bf16.gmra.mrb[0].mxu0 %v1110
    %v3270 = vpop.f32.mrb[0].mxu0
    %v3271 = vadd.f32 %v3230, %v3270
    %v3272 = vpop.f32.mrb[0].mxu0
    %v3273 = vadd.f32 %v3232, %v3272
    %v3274 = vpop.f32.mrb[0].mxu0
    %v3275 = vpop.f32.mrb[0].mxu0
    %3276 = vdwg.mxu0
    %3277 = vmatprep.subr.bf16.mxu0 %v2396
    %3278 = vmatpush1.bf16.msra.mxu0 %v2395
    %3279 = vmatprep.subr.bf16.mxu0 %v2404
    %3280 = vmatpush1.bf16.msra.mxu0 %v2403
    %3281 = vmatprep.subr.bf16.mxu0 %v2412
    %3282 = vmatpush1.bf16.msra.mxu0 %v2411
    %3283 = vmatprep.subr.bf16.mxu0 %v2420
    %3284 = vmatpush1.bf16.msra.mxu0 %v2419
    %3285 = vmatprep.subr.bf16.mxu0 %v2428
    %3286 = vmatpush1.bf16.msra.mxu0 %v2427
    %3287 = vmatprep.subr.bf16.mxu0 %v2436
    %3288 = vmatpush1.bf16.msra.mxu0 %v2435
    %3289 = vmatprep.subr.bf16.mxu0 %v2444
    %3290 = vmatpush1.bf16.msra.mxu0 %v2443
    %3291 = vmatprep.subr.bf16.mxu0 %v2452
    %3292 = vmatpush1.bf16.msra.mxu0 %v2451
    %3293 = vmatprep.subr.bf16.mxu0 %v2460
    %3294 = vmatpush1.bf16.msra.mxu0 %v2459
    %3295 = vmatprep.subr.bf16.mxu0 %v2468
    %3296 = vmatpush1.bf16.msra.mxu0 %v2467
    %3297 = vmatprep.subr.bf16.mxu0 %v2476
    %3298 = vmatpush1.bf16.msra.mxu0 %v2475
    %3299 = vmatprep.subr.bf16.mxu0 %v2484
    %3300 = vmatpush1.bf16.msra.mxu0 %v2483
    %3301 = vmatprep.subr.bf16.mxu0 %v2492
    %3302 = vmatpush1.bf16.msra.mxu0 %v2491
    %3303 = vmatprep.subr.bf16.mxu0 %v2500
    %3304 = vmatpush1.bf16.msra.mxu0 %v2499
    %3305 = vmatprep.subr.bf16.mxu0 %v2508
    %3306 = vmatpush1.bf16.msra.mxu0 %v2507
    %3307 = vmatprep.subr.bf16.mxu0 %v2516
    %3308 = vmatpush1.bf16.msra.mxu0 %v2515
    %3309 = vmatprep.mubr.bf16.mxu0 %v1107
    %3310 = vmatmul.mubr.bf16.gmra.mrb[0].mxu0 %v1106
    %v3311 = vpop.f32.mrb[0].mxu0
    %v3312 = vadd.f32 0.0, %v3311
    %v3313 = vpop.f32.mrb[0].mxu0
    %v3314 = vadd.f32 0.0, %v3313
    %v3315 = vpop.f32.mrb[0].mxu0
    %v3316 = vpop.f32.mrb[0].mxu0
    %3317 = vdwg.mxu0
    %3318 = vmatprep.subr.bf16.mxu0 %v2524
    %3319 = vmatpush1.bf16.msra.mxu0 %v2523
    %3320 = vmatprep.subr.bf16.mxu0 %v2532
    %3321 = vmatpush1.bf16.msra.mxu0 %v2531
    %3322 = vmatprep.subr.bf16.mxu0 %v2540
    %3323 = vmatpush1.bf16.msra.mxu0 %v2539
    %3324 = vmatprep.subr.bf16.mxu0 %v2548
    %3325 = vmatpush1.bf16.msra.mxu0 %v2547
    %3326 = vmatprep.subr.bf16.mxu0 %v2556
    %3327 = vmatpush1.bf16.msra.mxu0 %v2555
    %3328 = vmatprep.subr.bf16.mxu0 %v2564
    %3329 = vmatpush1.bf16.msra.mxu0 %v2563
    %3330 = vmatprep.subr.bf16.mxu0 %v2572
    %3331 = vmatpush1.bf16.msra.mxu0 %v2571
    %3332 = vmatprep.subr.bf16.mxu0 %v2580
    %3333 = vmatpush1.bf16.msra.mxu0 %v2579
    %3334 = vmatprep.subr.bf16.mxu0 %v2588
    %3335 = vmatpush1.bf16.msra.mxu0 %v2587
    %3336 = vmatprep.subr.bf16.mxu0 %v2596
    %3337 = vmatpush1.bf16.msra.mxu0 %v2595
    %3338 = vmatprep.subr.bf16.mxu0 %v2604
    %3339 = vmatpush1.bf16.msra.mxu0 %v2603
    %3340 = vmatprep.subr.bf16.mxu0 %v2612
    %3341 = vmatpush1.bf16.msra.mxu0 %v2611
    %3342 = vmatprep.subr.bf16.mxu0 %v2620
    %3343 = vmatpush1.bf16.msra.mxu0 %v2619
    %3344 = vmatprep.subr.bf16.mxu0 %v2628
    %3345 = vmatpush1.bf16.msra.mxu0 %v2627
    %3346 = vmatprep.subr.bf16.mxu0 %v2636
    %3347 = vmatpush1.bf16.msra.mxu0 %v2635
    %3348 = vmatprep.subr.bf16.mxu0 %v2644
    %3349 = vmatpush1.bf16.msra.mxu0 %v2643
    %3350 = vmatprep.mubr.bf16.mxu0 %v1109
    %3351 = vmatmul.mubr.bf16.gmra.mrb[0].mxu0 %v1108
    %v3352 = vpop.f32.mrb[0].mxu0
    %v3353 = vadd.f32 %v3312, %v3352
    %v3354 = vpop.f32.mrb[0].mxu0
    %v3355 = vadd.f32 %v3314, %v3354
    %v3356 = vpop.f32.mrb[0].mxu0
    %v3357 = vpop.f32.mrb[0].mxu0
    %3358 = vdwg.mxu0
    %3359 = vmatprep.subr.bf16.mxu0 %v2652
    %3360 = vmatpush1.bf16.msra.mxu0 %v2651
    %3361 = vmatprep.subr.bf16.mxu0 %v2660
    %3362 = vmatpush1.bf16.msra.mxu0 %v2659
    %3363 = vmatprep.subr.bf16.mxu0 %v2668
    %3364 = vmatpush1.bf16.msra.mxu0 %v2667
    %3365 = vmatprep.subr.bf16.mxu0 %v2676
    %3366 = vmatpush1.bf16.msra.mxu0 %v2675
    %3367 = vmatprep.subr.bf16.mxu0 %v2684
    %3368 = vmatpush1.bf16.msra.mxu0 %v2683
    %3369 = vmatprep.subr.bf16.mxu0 %v2692
    %3370 = vmatpush1.bf16.msra.mxu0 %v2691
    %3371 = vmatprep.subr.bf16.mxu0 %v2700
    %3372 = vmatpush1.bf16.msra.mxu0 %v2699
    %3373 = vmatprep.subr.bf16.mxu0 %v2708
    %3374 = vmatpush1.bf16.msra.mxu0 %v2707
    %3375 = vmatprep.subr.bf16.mxu0 0
    %3376 = vmatpush1.bf16.msra.mxu0 0
    %3377 = vmatprep.subr.bf16.mxu0 0
    %3378 = vmatpush1.bf16.msra.mxu0 0
    %3379 = vmatprep.subr.bf16.mxu0 0
    %3380 = vmatpush1.bf16.msra.mxu0 0
    %3381 = vmatprep.subr.bf16.mxu0 0
    %3382 = vmatpush1.bf16.msra.mxu0 0
    %3383 = vmatprep.subr.bf16.mxu0 0
    %3384 = vmatpush1.bf16.msra.mxu0 0
    %3385 = vmatprep.subr.bf16.mxu0 0
    %3386 = vmatpush1.bf16.msra.mxu0 0
    %3387 = vmatprep.subr.bf16.mxu0 0
    %3388 = vmatpush1.bf16.msra.mxu0 0
    %3389 = vmatprep.subr.bf16.mxu0 0
    %3390 = vmatpush1.bf16.msra.mxu0 0
    %3391 = vmatprep.mubr.bf16.mxu0 0
    %3392 = vmatmul.mubr.bf16.gmra.mrb[0].mxu0 %v1110
    %v3393 = vpop.f32.mrb[0].mxu0
    %v3394 = vadd.f32 %v3353, %v3393
    %v3395 = vpop.f32.mrb[0].mxu0
    %v3396 = vadd.f32 %v3355, %v3395
    %v3397 = vpop.f32.mrb[0].mxu0
    %v3398 = vpop.f32.mrb[0].mxu0
    %3399 = vdwg.mxu0
    %3400 = vmatprep.subr.bf16.mxu0 %v2398
    %3401 = vmatpush1.bf16.msra.mxu0 %v2397
    %3402 = vmatprep.subr.bf16.mxu0 %v2406
    %3403 = vmatpush1.bf16.msra.mxu0 %v2405
    %3404 = vmatprep.subr.bf16.mxu0 %v2414
    %3405 = vmatpush1.bf16.msra.mxu0 %v2413
    %3406 = vmatprep.subr.bf16.mxu0 %v2422
    %3407 = vmatpush1.bf16.msra.mxu0 %v2421
    %3408 = vmatprep.subr.bf16.mxu0 %v2430
    %3409 = vmatpush1.bf16.msra.mxu0 %v2429
    %3410 = vmatprep.subr.bf16.mxu0 %v2438
    %3411 = vmatpush1.bf16.msra.mxu0 %v2437
    %3412 = vmatprep.subr.bf16.mxu0 %v2446
    %3413 = vmatpush1.bf16.msra.mxu0 %v2445
    %3414 = vmatprep.subr.bf16.mxu0 %v2454
    %3415 = vmatpush1.bf16.msra.mxu0 %v2453
    %3416 = vmatprep.subr.bf16.mxu0 %v2462
    %3417 = vmatpush1.bf16.msra.mxu0 %v2461
    %3418 = vmatprep.subr.bf16.mxu0 %v2470
    %3419 = vmatpush1.bf16.msra.mxu0 %v2469
    %3420 = vmatprep.subr.bf16.mxu0 %v2478
    %3421 = vmatpush1.bf16.msra.mxu0 %v2477
    %3422 = vmatprep.subr.bf16.mxu0 %v2486
    %3423 = vmatpush1.bf16.msra.mxu0 %v2485
    %3424 = vmatprep.subr.bf16.mxu0 %v2494
    %3425 = vmatpush1.bf16.msra.mxu0 %v2493
    %3426 = vmatprep.subr.bf16.mxu0 %v2502
    %3427 = vmatpush1.bf16.msra.mxu0 %v2501
    %3428 = vmatprep.subr.bf16.mxu0 %v2510
    %3429 = vmatpush1.bf16.msra.mxu0 %v2509
    %3430 = vmatprep.subr.bf16.mxu0 %v2518
    %3431 = vmatpush1.bf16.msra.mxu0 %v2517
    %3432 = vmatprep.mubr.bf16.mxu0 %v1107
    %3433 = vmatmul.mubr.bf16.gmra.mrb[0].mxu0 %v1106
    %v3434 = vpop.f32.mrb[0].mxu0
    %v3435 = vadd.f32 0.0, %v3434
    %v3436 = vpop.f32.mrb[0].mxu0
    %v3437 = vadd.f32 0.0, %v3436
    %v3438 = vpop.f32.mrb[0].mxu0
    %v3439 = vpop.f32.mrb[0].mxu0
    %3440 = vdwg.mxu0
    %3441 = vmatprep.subr.bf16.mxu0 %v2526
    %3442 = vmatpush1.bf16.msra.mxu0 %v2525
    %3443 = vmatprep.subr.bf16.mxu0 %v2534
    %3444 = vmatpush1.bf16.msra.mxu0 %v2533
    %3445 = vmatprep.subr.bf16.mxu0 %v2542
    %3446 = vmatpush1.bf16.msra.mxu0 %v2541
    %3447 = vmatprep.subr.bf16.mxu0 %v2550
    %3448 = vmatpush1.bf16.msra.mxu0 %v2549
    %3449 = vmatprep.subr.bf16.mxu0 %v2558
    %3450 = vmatpush1.bf16.msra.mxu0 %v2557
    %3451 = vmatprep.subr.bf16.mxu0 %v2566
    %3452 = vmatpush1.bf16.msra.mxu0 %v2565
    %3453 = vmatprep.subr.bf16.mxu0 %v2574
    %3454 = vmatpush1.bf16.msra.mxu0 %v2573
    %3455 = vmatprep.subr.bf16.mxu0 %v2582
    %3456 = vmatpush1.bf16.msra.mxu0 %v2581
    %3457 = vmatprep.subr.bf16.mxu0 %v2590
    %3458 = vmatpush1.bf16.msra.mxu0 %v2589
    %3459 = vmatprep.subr.bf16.mxu0 %v2598
    %3460 = vmatpush1.bf16.msra.mxu0 %v2597
    %3461 = vmatprep.subr.bf16.mxu0 %v2606
    %3462 = vmatpush1.bf16.msra.mxu0 %v2605
    %3463 = vmatprep.subr.bf16.mxu0 %v2614
    %3464 = vmatpush1.bf16.msra.mxu0 %v2613
    %3465 = vmatprep.subr.bf16.mxu0 %v2622
    %3466 = vmatpush1.bf16.msra.mxu0 %v2621
    %3467 = vmatprep.subr.bf16.mxu0 %v2630
    %3468 = vmatpush1.bf16.msra.mxu0 %v2629
    %3469 = vmatprep.subr.bf16.mxu0 %v2638
    %3470 = vmatpush1.bf16.msra.mxu0 %v2637
    %3471 = vmatprep.subr.bf16.mxu0 %v2646
    %3472 = vmatpush1.bf16.msra.mxu0 %v2645
    %3473 = vmatprep.mubr.bf16.mxu0 %v1109
    %3474 = vmatmul.mubr.bf16.gmra.mrb[0].mxu0 %v1108
    %v3475 = vpop.f32.mrb[0].mxu0
    %v3476 = vadd.f32 %v3435, %v3475
    %v3477 = vpop.f32.mrb[0].mxu0
    %v3478 = vadd.f32 %v3437, %v3477
    %v3479 = vpop.f32.mrb[0].mxu0
    %v3480 = vpop.f32.mrb[0].mxu0
    %3481 = vdwg.mxu0
    %3482 = vmatprep.subr.bf16.mxu0 %v2654
    %3483 = vmatpush1.bf16.msra.mxu0 %v2653
    %3484 = vmatprep.subr.bf16.mxu0 %v2662
    %3485 = vmatpush1.bf16.msra.mxu0 %v2661
    %3486 = vmatprep.subr.bf16.mxu0 %v2670
    %3487 = vmatpush1.bf16.msra.mxu0 %v2669
    %3488 = vmatprep.subr.bf16.mxu0 %v2678
    %3489 = vmatpush1.bf16.msra.mxu0 %v2677
    %3490 = vmatprep.subr.bf16.mxu0 %v2686
    %3491 = vmatpush1.bf16.msra.mxu0 %v2685
    %3492 = vmatprep.subr.bf16.mxu0 %v2694
    %3493 = vmatpush1.bf16.msra.mxu0 %v2693
    %3494 = vmatprep.subr.bf16.mxu0 %v2702
    %3495 = vmatpush1.bf16.msra.mxu0 %v2701
    %3496 = vmatprep.subr.bf16.mxu0 %v2710
    %3497 = vmatpush1.bf16.msra.mxu0 %v2709
    %3498 = vmatprep.subr.bf16.mxu0 0
    %3499 = vmatpush1.bf16.msra.mxu0 0
    %3500 = vmatprep.subr.bf16.mxu0 0
    %3501 = vmatpush1.bf16.msra.mxu0 0
    %3502 = vmatprep.subr.bf16.mxu0 0
    %3503 = vmatpush1.bf16.msra.mxu0 0
    %3504 = vmatprep.subr.bf16.mxu0 0
    %3505 = vmatpush1.bf16.msra.mxu0 0
    %3506 = vmatprep.subr.bf16.mxu0 0
    %3507 = vmatpush1.bf16.msra.mxu0 0
    %3508 = vmatprep.subr.bf16.mxu0 0
    %3509 = vmatpush1.bf16.msra.mxu0 0
    %3510 = vmatprep.subr.bf16.mxu0 0
    %3511 = vmatpush1.bf16.msra.mxu0 0
    %3512 = vmatprep.subr.bf16.mxu0 0
    %3513 = vmatpush1.bf16.msra.mxu0 0
    %3514 = vmatprep.mubr.bf16.mxu0 0
    %3515 = vmatmul.mubr.bf16.gmra.mrb[0].mxu0 %v1110
    %v3516 = vpop.f32.mrb[0].mxu0
    %v3517 = vadd.f32 %v3476, %v3516
    %v3518 = vpop.f32.mrb[0].mxu0
    %v3519 = vadd.f32 %v3478, %v3518
    %v3520 = vpop.f32.mrb[0].mxu0
    %v3521 = vpop.f32.mrb[0].mxu0
    %3522 = vdwg.mxu0
    %3523 = vst [vmem:[%s10] sm:$0xff] %v3148
    %3524 = vst [vmem:[%s10 + $0x8] sm:$0xff] %v3150
    %3525 = vst [vmem:[%s10 + $0x10] sm:$0xff] %v3271
    %3526 = vst [vmem:[%s10 + $0x18] sm:$0xff] %v3273
    %3527 = vst [vmem:[%s10 + $0x20] sm:$0xff] %v3394
    %3528 = vst [vmem:[%s10 + $0x28] sm:$0xff] %v3396
    %3529 = vst [vmem:[%s10 + $0x30] sm:$0xff] %v3517
    %3530 = vst [vmem:[%s10 + $0x38] sm:$0xff] %v3519
    // Predicated region
    $region74: #{cnn3d_decoder_forward.1} parent=1 // pred_check
      _
    $region75: #{cnn3d_decoder_forward.1} parent=1 // pred_check_branch
      %3532 = sbr.rel (0) target = $region77
    $region76: #{cnn3d_decoder_forward.1} parent=1 // pred_region
      _
    $region77: #{cnn3d_decoder_forward.1} parent=1 // pred_fallthru
      _
    // Predicated region
    $region78: #{cnn3d_decoder_forward.1} parent=1 // pred_check
      _
    $region79: #{cnn3d_decoder_forward.1} parent=1 // pred_check_branch
      %3534 = sbr.rel (0) target = $region81
    $region80: #{cnn3d_decoder_forward.1} parent=1 // pred_region
      _
    $region81: #{cnn3d_decoder_forward.1} parent=1 // pred_fallthru
      _
    %3535 = vsyncpa [#allocation3], 1
    %3536 = vsyncpa [#allocation5], 1
    %3537 = vsyncpa [#allocation8], 1
    %3538 = vsyncpa [#allocation11], 1
    %3539 = vsyncpa [#allocation14], 1

</llo_original>
